<compile_context>
chip_gen: v6e
topology: v6e:2x2x1
jax: 0.10.0
libtpu: 0.0.40
codegen_flags: <defaults>
</compile_context>

<pallas_src>
import functools

import jax
import jax.numpy as jnp
from jax.experimental import pallas as pl
from jax.experimental.pallas import tpu as pltpu

EPS = 1e-5


# ------------------------------ fused kernel ------------------------------- #
def _rrcnn_fused_kernel(x_ref, w1_ref, b1_ref, sp_ref, sn_ref, g_ref,
                        wb1_ref, cb1_ref, gm1_ref, bt1_ref,
                        wb2_ref, cb2_ref, gm2_ref, bt2_ref,
                        o_ref, *, n_pix, t, mm_dtype):
    """Whole RRCNN block in one invocation; activations are (N*H, W*C) slabs.

    x_ref  : (N*H, W*Cin)   input slab (NHWC flattened: row = n*H+h, lane = w*Cin+ci)
    w1_ref : (W*Cin, W*C)   block-diagonal 1x1-conv weight  kron(I_W, w1)
    b1_ref : (1, W*C)       1x1-conv bias tiled over W
    sp_ref : (N*H, N*H)     0/1 matrix selecting row h-1 (zero at h==0)
    sn_ref : (N*H, N*H)     0/1 matrix selecting row h+1 (zero at h==H-1)
    g_ref  : (W*C, W*C)     0/1 "same channel" fold/broadcast matrix (f32)
    wb*_ref: (3, W*C, W*C)  block-banded 3x3 conv weights, one band per ky
    cb*/gm*/bt*: (1, W*C)   conv bias / BN gamma / BN beta tiled over W (f32)
    o_ref  : (N*H, W*C)     output slab
    """
    inv_n = 1.0 / float(n_pix)

    sp = sp_ref[...]
    sn = sn_ref[...]
    gmat = g_ref[...]

    # ---- Conv_1x1: x0 stays resident for the whole block -------------------
    x0 = jnp.dot(x_ref[...].astype(mm_dtype), w1_ref[...],
                 preferred_element_type=jnp.float32) + b1_ref[...]

    def conv_bn_relu(y, wb_ref, cbias, gamma, beta):
        # 3x3 conv (pad=1) = 3 banded matmuls + 2 row-shift matmuls (all MXU).
        yb = y.astype(mm_dtype)
        y_up = jnp.dot(sp, yb, preferred_element_type=jnp.float32).astype(mm_dtype)
        y_dn = jnp.dot(sn, yb, preferred_element_type=jnp.float32).astype(mm_dtype)
        acc = jnp.dot(y_up, wb_ref[0], preferred_element_type=jnp.float32)
        acc = acc + jnp.dot(yb, wb_ref[1], preferred_element_type=jnp.float32)
        acc = acc + jnp.dot(y_dn, wb_ref[2], preferred_element_type=jnp.float32)
        acc = acc + cbias

        # One-pass BatchNorm2d (training mode, biased variance).  The 0/1
        # matmul with gmat both pools over the W lane groups and broadcasts the
        # per-channel statistic back to every (w, c) lane.
        s1 = jnp.sum(jnp.dot(acc, gmat, preferred_element_type=jnp.float32),
                     axis=0, keepdims=True)
        s2 = jnp.sum(jnp.dot(acc * acc, gmat, preferred_element_type=jnp.float32),
                     axis=0, keepdims=True)
        mean = s1 * inv_n
        var = s2 * inv_n - mean * mean
        scale = jax.lax.rsqrt(var + EPS) * gamma
        shift = beta - mean * scale
        return jnp.maximum(acc * scale + shift, 0.0)

    def recurrent(y0, wb_ref, cbias, gamma, beta):
        # PyTorch Recurrent_block: x1 = f(y0); then t times x1 = f(y0 + x1).
        x1 = conv_bn_relu(y0, wb_ref, cbias, gamma, beta)
        for _ in range(t):
            x1 = conv_bn_relu(y0 + x1, wb_ref, cbias, gamma, beta)
        return x1

    h = recurrent(x0, wb1_ref, cb1_ref[...], gm1_ref[...], bt1_ref[...])
    x1 = recurrent(h, wb2_ref, cb2_ref[...], gm2_ref[...], bt2_ref[...])

    # Outer RRCNN residual; one dense, unmasked, full-lane store.
    o_ref[...] = (x0 + x1).astype(o_ref.dtype)


# --------------------------------- wrapper ---------------------------------- #
@functools.partial(jax.jit, static_argnames=("t", "matmul_dtype"))
def rrcnn_block(x_nchw, params, t=2, matmul_dtype=jnp.bfloat16):
    """x_nchw: (N, Cin, H, W) -> (N, Cout, H, W), matching RRCNN_block.forward."""
    assert t >= 1
    N, Cin, H, W = x_nchw.shape
    C = params["w1x1"].shape[1]
    NH, WC, WCin = N * H, W * C, W * Cin
    f32 = jnp.float32

    # Layout plumbing stays outside the kernel: NCHW -> NHWC -> (N*H, W*Cin).
    x2 = jnp.transpose(x_nchw, (0, 2, 3, 1)).reshape(NH, WCin)

    # Structure matrices: pure parameter / index transforms, built once per call.
    w1big = jnp.kron(jnp.eye(W, dtype=f32),
                     params["w1x1"]).astype(matmul_dtype)          # (W*Cin, W*C)
    sprev = jnp.kron(jnp.eye(N, dtype=f32),
                     jnp.eye(H, k=-1, dtype=f32)).astype(matmul_dtype)  # row h-1
    snext = jnp.kron(jnp.eye(N, dtype=f32),
                     jnp.eye(H, k=1, dtype=f32)).astype(matmul_dtype)   # row h+1
    gmat = jnp.kron(jnp.ones((W, W), f32), jnp.eye(C, dtype=f32))       # same channel

    def band(w3):
        # (3,3,C,C) HWIO -> (3, W*C, W*C).  For each ky the kx = 0/1/2 taps sit
        # on the sub/main/super block diagonals; W zero-padding is implicit.
        return jnp.stack(
            [sum(jnp.kron(jnp.eye(W, k=1 - kx, dtype=f32), w3[ky, kx])
                 for kx in range(3)) for ky in range(3)],
            axis=0).astype(matmul_dtype)

    def tile_row(v):                       # (1, C) -> (1, W*C), f32
        return jnp.tile(v.astype(f32), (1, W))

    w3a, cba, ga, ba = params["rec1"]
    w3b, cbb, gb, bb = params["rec2"]

    kernel = functools.partial(_rrcnn_fused_kernel, n_pix=N * H * W, t=t,
                               mm_dtype=matmul_dtype)

    n_conv = 2 * (t + 1)
    flops = (2 * NH * WCin * WC
             + n_conv * (3 * 2 * NH * WC * WC       # banded conv matmuls
                         + 2 * 2 * NH * NH * WC     # row-shift matmuls
                         + 2 * 2 * NH * WC * WC     # BN fold matmuls
                         + 10 * NH * WC))           # elementwise
    itemsize = jnp.dtype(matmul_dtype).itemsize
    bytes_accessed = (4 * (NH * WCin + NH * WC + WC * WC + 7 * WC)
                      + itemsize * (WCin * WC + 2 * NH * NH + 2 * 3 * WC * WC))

    row_spec = pl.BlockSpec((1, WC), lambda i: (0, 0))
    band_spec = pl.BlockSpec((3, WC, WC), lambda i: (0, 0, 0))

    out2 = pl.pallas_call(
        kernel,
        grid=(1,),
        in_specs=[
            pl.BlockSpec((NH, WCin), lambda i: (0, 0)),
            pl.BlockSpec((WCin, WC), lambda i: (0, 0)),
            row_spec,
            pl.BlockSpec((NH, NH), lambda i: (0, 0)),
            pl.BlockSpec((NH, NH), lambda i: (0, 0)),
            pl.BlockSpec((WC, WC), lambda i: (0, 0)),
            band_spec, row_spec, row_spec, row_spec,
            band_spec, row_spec, row_spec, row_spec,
        ],
        out_specs=pl.BlockSpec((NH, WC), lambda i: (0, 0)),
        out_shape=jax.ShapeDtypeStruct((NH, WC), x_nchw.dtype),
        compiler_params=pltpu.CompilerParams(
            dimension_semantics=("arbitrary",)),
        cost_estimate=pl.CostEstimate(flops=int(flops),
                                      transcendentals=int(n_conv * WC),
                                      bytes_accessed=int(bytes_accessed)),
    )(x2, w1big, tile_row(params["b1x1"]), sprev, snext, gmat,
      band(w3a), tile_row(cba), tile_row(ga), tile_row(ba),
      band(w3b), tile_row(cbb), tile_row(gb), tile_row(bb))

    out = out2.reshape(N, H, W, C)
    return jnp.transpose(out, (0, 3, 1, 2))        # NHWC -> NCHW


# -------------------------- pure-JAX reference ----------------------------- #
def _ref_conv_bn_relu(x_nchw, w_hwio, b, g, beta, mm_dtype):
    w_oihw = jnp.transpose(w_hwio, (3, 2, 0, 1))
    y = jax.lax.conv_general_dilated(
        x_nchw.astype(mm_dtype), w_oihw.astype(mm_dtype), (1, 1),
        [(1, 1), (1, 1)], dimension_numbers=("NCHW", "OIHW", "NCHW"),
        preferred_element_type=jnp.float32,
        precision=jax.lax.Precision.HIGHEST)
    y = y + b.reshape(1, -1, 1, 1)
    m = jnp.mean(y, axis=(0, 2, 3), keepdims=True)
    v = jnp.mean((y - m) ** 2, axis=(0, 2, 3), keepdims=True)
    y = (y - m) * jax.lax.rsqrt(v + EPS)
    y = y * g.reshape(1, -1, 1, 1) + beta.reshape(1, -1, 1, 1)
    return jnp.maximum(y, 0.0)


def _ref_rec_block(x, p, t, mm_dtype):
    w, b, g, beta = p
    x1 = None
    for i in range(t):
        if i == 0:
            x1 = _ref_conv_bn_relu(x, w, b, g, beta, mm_dtype)
        x1 = _ref_conv_bn_relu(x + x1, w, b, g, beta, mm_dtype)
    return x1


def ref_rrcnn(x_nchw, params, t=2, mm_dtype=jnp.float32):
    w1x1 = params["w1x1"]  # (Cin, Cout)
    w_oihw = jnp.transpose(w1x1, (1, 0))[:, :, None, None]
    x0 = jax.lax.conv_general_dilated(
        x_nchw.astype(mm_dtype), w_oihw.astype(mm_dtype), (1, 1),
        [(0, 0), (0, 0)], dimension_numbers=("NCHW", "OIHW", "NCHW"),
        preferred_element_type=jnp.float32,
        precision=jax.lax.Precision.HIGHEST)
    x0 = x0 + params["b1x1"].reshape(1, -1, 1, 1)
    x1 = _ref_rec_block(x0, params["rec1"], t, mm_dtype)
    x1 = _ref_rec_block(x1, params["rec2"], t, mm_dtype)
    return x0 + x1


# --------------------------------- main ------------------------------------ #
def make_params(key, ch_in, ch_out):
    ks = jax.random.split(key, 10)

    def rec_params(k0, k1, k2, k3):
        return (0.1 * jax.random.normal(k0, (3, 3, ch_out, ch_out), jnp.float32),
                0.1 * jax.random.normal(k1, (1, ch_out), jnp.float32),
                1.0 + 0.1 * jax.random.normal(k2, (1, ch_out), jnp.float32),
                0.1 * jax.random.normal(k3, (1, ch_out), jnp.float32))

    return {
        "w1x1": 0.2 * jax.random.normal(ks[0], (ch_in, ch_out), jnp.float32),
        "b1x1": 0.1 * jax.random.normal(ks[1], (1, ch_out), jnp.float32),
        "rec1": rec_params(ks[2], ks[3], ks[4], ks[5]),
        "rec2": rec_params(ks[6], ks[7], ks[8], ks[9]),
    }


if __name__ == "__main__":
    key = jax.random.PRNGKey(0)
    k_x, k_p = jax.random.split(key)

    N, CH_IN, CH_OUT, H, W, T = 2, 4, 8, 16, 16, 2
    x = jax.random.normal(k_x, (N, CH_IN, H, W), jnp.float32)   # NCHW input
    params = make_params(k_p, CH_IN, CH_OUT)

    # Strict check: f32 MXU operands vs f32 reference.
    ref_f32 = jax.block_until_ready(ref_rrcnn(x, params, t=T, mm_dtype=jnp.float32))
    out_f32 = jax.block_until_ready(
        rrcnn_block(x, params, t=T, matmul_dtype=jnp.float32))
    assert out_f32.shape == (N, CH_OUT, H, W), out_f32.shape
    err_f32 = float(jnp.max(jnp.abs(out_f32 - ref_f32)))
    assert jnp.allclose(out_f32, ref_f32, atol=3e-3, rtol=3e-3), err_f32

    # Fast path: bf16 MXU operands (f32 accumulation & BN) vs a reference that
    # applies the same bf16 operand rounding.
    ref_bf16 = jax.block_until_ready(
        ref_rrcnn(x, params, t=T, mm_dtype=jnp.bfloat16))
    out_bf16 = jax.block_until_ready(
        rrcnn_block(x, params, t=T, matmul_dtype=jnp.bfloat16))
    assert out_bf16.shape == (N, CH_OUT, H, W), out_bf16.shape
    err_bf16 = float(jnp.max(jnp.abs(out_bf16 - ref_bf16)))
    assert jnp.allclose(out_bf16, ref_bf16, atol=2e-2, rtol=2e-2), err_bf16

    print("KERNEL_OK")
</pallas_src>

<mosaic_0001>
module attributes {stable_mosaic.version = 11 : i64} {
  func.func @_rrcnn_fused_kernel(%arg0: i32, %arg1: memref<32x64xf32, #tpu.memory_space<vmem>>, %arg2: memref<64x128xf32, #tpu.memory_space<vmem>>, %arg3: memref<1x128xf32, #tpu.memory_space<vmem>>, %arg4: memref<32x32xf32, #tpu.memory_space<vmem>>, %arg5: memref<32x32xf32, #tpu.memory_space<vmem>>, %arg6: memref<128x128xf32, #tpu.memory_space<vmem>>, %arg7: memref<3x128x128xf32, #tpu.memory_space<vmem>>, %arg8: memref<1x128xf32, #tpu.memory_space<vmem>>, %arg9: memref<1x128xf32, #tpu.memory_space<vmem>>, %arg10: memref<1x128xf32, #tpu.memory_space<vmem>>, %arg11: memref<3x128x128xf32, #tpu.memory_space<vmem>>, %arg12: memref<1x128xf32, #tpu.memory_space<vmem>>, %arg13: memref<1x128xf32, #tpu.memory_space<vmem>>, %arg14: memref<1x128xf32, #tpu.memory_space<vmem>>, %arg15: memref<32x128xf32, #tpu.memory_space<vmem>>) attributes {dimension_semantics = [#tpu.dimension_semantics<arbitrary>], iteration_bounds = array<i64: 1>, scalar_prefetch = 0 : i64, scratch_operands = 0 : i64, tpu.core_type = #tpu.core_type<tc>, window_params = [{pipeline_mode = #tpu.pipeline_mode<synchronous>, transform_indices = @transform_0, window_bounds = array<i64: 32, 64>}, {pipeline_mode = #tpu.pipeline_mode<synchronous>, transform_indices = @transform_1, window_bounds = array<i64: 64, 128>}, {pipeline_mode = #tpu.pipeline_mode<synchronous>, transform_indices = @transform_2, window_bounds = array<i64: 1, 128>}, {pipeline_mode = #tpu.pipeline_mode<synchronous>, transform_indices = @transform_3, window_bounds = array<i64: 32, 32>}, {pipeline_mode = #tpu.pipeline_mode<synchronous>, transform_indices = @transform_4, window_bounds = array<i64: 32, 32>}, {pipeline_mode = #tpu.pipeline_mode<synchronous>, transform_indices = @transform_5, window_bounds = array<i64: 128, 128>}, {pipeline_mode = #tpu.pipeline_mode<synchronous>, transform_indices = @transform_6, window_bounds = array<i64: 3, 128, 128>}, {pipeline_mode = #tpu.pipeline_mode<synchronous>, transform_indices = @transform_7, window_bounds = array<i64: 1, 128>}, {pipeline_mode = #tpu.pipeline_mode<synchronous>, transform_indices = @transform_8, window_bounds = array<i64: 1, 128>}, {pipeline_mode = #tpu.pipeline_mode<synchronous>, transform_indices = @transform_9, window_bounds = array<i64: 1, 128>}, {pipeline_mode = #tpu.pipeline_mode<synchronous>, transform_indices = @transform_10, window_bounds = array<i64: 3, 128, 128>}, {pipeline_mode = #tpu.pipeline_mode<synchronous>, transform_indices = @transform_11, window_bounds = array<i64: 1, 128>}, {pipeline_mode = #tpu.pipeline_mode<synchronous>, transform_indices = @transform_12, window_bounds = array<i64: 1, 128>}, {pipeline_mode = #tpu.pipeline_mode<synchronous>, transform_indices = @transform_13, window_bounds = array<i64: 1, 128>}, {pipeline_mode = #tpu.pipeline_mode<synchronous>, transform_indices = @transform_14, window_bounds = array<i64: 32, 128>}]} {
    %c0 = arith.constant 0 : index
    %c0_0 = arith.constant 0 : index
    %0 = vector.load %arg4[%c0, %c0_0] : memref<32x32xf32, #tpu.memory_space<vmem>>, vector<32x32xf32>
    %c0_1 = arith.constant 0 : index
    %c0_2 = arith.constant 0 : index
    %1 = vector.load %arg5[%c0_1, %c0_2] : memref<32x32xf32, #tpu.memory_space<vmem>>, vector<32x32xf32>
    %c0_3 = arith.constant 0 : index
    %c0_4 = arith.constant 0 : index
    %2 = vector.load %arg6[%c0_3, %c0_4] : memref<128x128xf32, #tpu.memory_space<vmem>>, vector<128x128xf32>
    %c0_5 = arith.constant 0 : index
    %c0_6 = arith.constant 0 : index
    %3 = vector.load %arg1[%c0_5, %c0_6] : memref<32x64xf32, #tpu.memory_space<vmem>>, vector<32x64xf32>
    %c0_7 = arith.constant 0 : index
    %c0_8 = arith.constant 0 : index
    %4 = vector.load %arg2[%c0_7, %c0_8] : memref<64x128xf32, #tpu.memory_space<vmem>>, vector<64x128xf32>
    %cst = arith.constant dense<0.000000e+00> : vector<32x128xf32>
    %5 = tpu.matmul %3, %4, %cst {dimension_numbers = #tpu.dot_dimension_numbers<[1], [0], [0], [1], [0, 0, 1, 1], [], []>} : vector<32x64xf32>, vector<64x128xf32>, vector<32x128xf32> -> vector<32x128xf32>
    %c0_9 = arith.constant 0 : index
    %c0_10 = arith.constant 0 : index
    %6 = vector.load %arg3[%c0_9, %c0_10] : memref<1x128xf32, #tpu.memory_space<vmem>>, vector<1x128xf32>
    %7 = vector.broadcast %6 : vector<1x128xf32> to vector<32x128xf32>
    %8 = arith.addf %5, %7 : vector<32x128xf32>
    %c0_11 = arith.constant 0 : index
    %c0_12 = arith.constant 0 : index
    %9 = vector.load %arg8[%c0_11, %c0_12] : memref<1x128xf32, #tpu.memory_space<vmem>>, vector<1x128xf32>
    %c0_13 = arith.constant 0 : index
    %c0_14 = arith.constant 0 : index
    %10 = vector.load %arg9[%c0_13, %c0_14] : memref<1x128xf32, #tpu.memory_space<vmem>>, vector<1x128xf32>
    %c0_15 = arith.constant 0 : index
    %c0_16 = arith.constant 0 : index
    %11 = vector.load %arg10[%c0_15, %c0_16] : memref<1x128xf32, #tpu.memory_space<vmem>>, vector<1x128xf32>
    %cst_17 = arith.constant dense<0.000000e+00> : vector<32x128xf32>
    %12 = tpu.matmul %0, %8, %cst_17 {dimension_numbers = #tpu.dot_dimension_numbers<[1], [0], [0], [1], [0, 0, 1, 1], [], []>} : vector<32x32xf32>, vector<32x128xf32>, vector<32x128xf32> -> vector<32x128xf32>
    %cst_18 = arith.constant dense<0.000000e+00> : vector<32x128xf32>
    %13 = tpu.matmul %1, %8, %cst_18 {dimension_numbers = #tpu.dot_dimension_numbers<[1], [0], [0], [1], [0, 0, 1, 1], [], []>} : vector<32x32xf32>, vector<32x128xf32>, vector<32x128xf32> -> vector<32x128xf32>
    %c0_19 = arith.constant 0 : index
    %c0_20 = arith.constant 0 : index
    %c0_21 = arith.constant 0 : index
    %14 = vector.load %arg7[%c0_19, %c0_20, %c0_21] : memref<3x128x128xf32, #tpu.memory_space<vmem>>, vector<1x128x128xf32>
    %15 = vector.shape_cast %14 : vector<1x128x128xf32> to vector<128x128xf32>
    %cst_22 = arith.constant dense<0.000000e+00> : vector<32x128xf32>
    %16 = tpu.matmul %12, %15, %cst_22 {dimension_numbers = #tpu.dot_dimension_numbers<[1], [0], [0], [1], [0, 0, 1, 1], [], []>} : vector<32x128xf32>, vector<128x128xf32>, vector<32x128xf32> -> vector<32x128xf32>
    %c1 = arith.constant 1 : index
    %c0_23 = arith.constant 0 : index
    %c0_24 = arith.constant 0 : index
    %17 = vector.load %arg7[%c1, %c0_23, %c0_24] : memref<3x128x128xf32, #tpu.memory_space<vmem>>, vector<1x128x128xf32>
    %18 = vector.shape_cast %17 : vector<1x128x128xf32> to vector<128x128xf32>
    %cst_25 = arith.constant dense<0.000000e+00> : vector<32x128xf32>
    %19 = tpu.matmul %8, %18, %cst_25 {dimension_numbers = #tpu.dot_dimension_numbers<[1], [0], [0], [1], [0, 0, 1, 1], [], []>} : vector<32x128xf32>, vector<128x128xf32>, vector<32x128xf32> -> vector<32x128xf32>
    %20 = arith.addf %16, %19 : vector<32x128xf32>
    %c2 = arith.constant 2 : index
    %c0_26 = arith.constant 0 : index
    %c0_27 = arith.constant 0 : index
    %21 = vector.load %arg7[%c2, %c0_26, %c0_27] : memref<3x128x128xf32, #tpu.memory_space<vmem>>, vector<1x128x128xf32>
    %22 = vector.shape_cast %21 : vector<1x128x128xf32> to vector<128x128xf32>
    %cst_28 = arith.constant dense<0.000000e+00> : vector<32x128xf32>
    %23 = tpu.matmul %13, %22, %cst_28 {dimension_numbers = #tpu.dot_dimension_numbers<[1], [0], [0], [1], [0, 0, 1, 1], [], []>} : vector<32x128xf32>, vector<128x128xf32>, vector<32x128xf32> -> vector<32x128xf32>
    %24 = arith.addf %20, %23 : vector<32x128xf32>
    %25 = vector.broadcast %9 : vector<1x128xf32> to vector<32x128xf32>
    %26 = arith.addf %24, %25 : vector<32x128xf32>
    %cst_29 = arith.constant dense<0.000000e+00> : vector<32x128xf32>
    %27 = tpu.matmul %26, %2, %cst_29 {dimension_numbers = #tpu.dot_dimension_numbers<[1], [0], [0], [1], [0, 0, 1, 1], [], []>} : vector<32x128xf32>, vector<128x128xf32>, vector<32x128xf32> -> vector<32x128xf32>
    %cst_30 = arith.constant dense<0.000000e+00> : vector<128xf32>
    %28 = vector.multi_reduction <add>, %27, %cst_30 [0] : vector<32x128xf32> to vector<128xf32>
    %29 = vector.shape_cast %28 : vector<128xf32> to vector<1x128xf32>
    %30 = arith.mulf %26, %26 : vector<32x128xf32>
    %cst_31 = arith.constant dense<0.000000e+00> : vector<32x128xf32>
    %31 = tpu.matmul %30, %2, %cst_31 {dimension_numbers = #tpu.dot_dimension_numbers<[1], [0], [0], [1], [0, 0, 1, 1], [], []>} : vector<32x128xf32>, vector<128x128xf32>, vector<32x128xf32> -> vector<32x128xf32>
    %cst_32 = arith.constant dense<0.000000e+00> : vector<128xf32>
    %32 = vector.multi_reduction <add>, %31, %cst_32 [0] : vector<32x128xf32> to vector<128xf32>
    %33 = vector.shape_cast %32 : vector<128xf32> to vector<1x128xf32>
    %cst_33 = arith.constant 0.001953125 : f32
    %34 = vector.broadcast %cst_33 : f32 to vector<1x128xf32>
    %35 = arith.mulf %29, %34 : vector<1x128xf32>
    %cst_34 = arith.constant 0.001953125 : f32
    %36 = vector.broadcast %cst_34 : f32 to vector<1x128xf32>
    %37 = arith.mulf %33, %36 : vector<1x128xf32>
    %38 = arith.mulf %35, %35 : vector<1x128xf32>
    %39 = arith.subf %37, %38 : vector<1x128xf32>
    %cst_35 = arith.constant 9.99999974E-6 : f32
    %40 = vector.broadcast %cst_35 : f32 to vector<1x128xf32>
    %41 = arith.addf %39, %40 : vector<1x128xf32>
    %42 = math.rsqrt %41 : vector<1x128xf32>
    %43 = arith.mulf %42, %10 : vector<1x128xf32>
    %44 = arith.mulf %35, %43 : vector<1x128xf32>
    %45 = arith.subf %11, %44 : vector<1x128xf32>
    %46 = vector.broadcast %43 : vector<1x128xf32> to vector<32x128xf32>
    %47 = arith.mulf %26, %46 : vector<32x128xf32>
    %48 = vector.broadcast %45 : vector<1x128xf32> to vector<32x128xf32>
    %49 = arith.addf %47, %48 : vector<32x128xf32>
    %cst_36 = arith.constant 0.000000e+00 : f32
    %50 = vector.broadcast %cst_36 : f32 to vector<32x128xf32>
    %51 = arith.maximumf %49, %50 : vector<32x128xf32>
    %52 = arith.addf %8, %51 : vector<32x128xf32>
    %cst_37 = arith.constant dense<0.000000e+00> : vector<32x128xf32>
    %53 = tpu.matmul %0, %52, %cst_37 {dimension_numbers = #tpu.dot_dimension_numbers<[1], [0], [0], [1], [0, 0, 1, 1], [], []>} : vector<32x32xf32>, vector<32x128xf32>, vector<32x128xf32> -> vector<32x128xf32>
    %cst_38 = arith.constant dense<0.000000e+00> : vector<32x128xf32>
    %54 = tpu.matmul %1, %52, %cst_38 {dimension_numbers = #tpu.dot_dimension_numbers<[1], [0], [0], [1], [0, 0, 1, 1], [], []>} : vector<32x32xf32>, vector<32x128xf32>, vector<32x128xf32> -> vector<32x128xf32>
    %c0_39 = arith.constant 0 : index
    %c0_40 = arith.constant 0 : index
    %c0_41 = arith.constant 0 : index
    %55 = vector.load %arg7[%c0_39, %c0_40, %c0_41] : memref<3x128x128xf32, #tpu.memory_space<vmem>>, vector<1x128x128xf32>
    %56 = vector.shape_cast %55 : vector<1x128x128xf32> to vector<128x128xf32>
    %cst_42 = arith.constant dense<0.000000e+00> : vector<32x128xf32>
    %57 = tpu.matmul %53, %56, %cst_42 {dimension_numbers = #tpu.dot_dimension_numbers<[1], [0], [0], [1], [0, 0, 1, 1], [], []>} : vector<32x128xf32>, vector<128x128xf32>, vector<32x128xf32> -> vector<32x128xf32>
    %c1_43 = arith.constant 1 : index
    %c0_44 = arith.constant 0 : index
    %c0_45 = arith.constant 0 : index
    %58 = vector.load %arg7[%c1_43, %c0_44, %c0_45] : memref<3x128x128xf32, #tpu.memory_space<vmem>>, vector<1x128x128xf32>
    %59 = vector.shape_cast %58 : vector<1x128x128xf32> to vector<128x128xf32>
    %cst_46 = arith.constant dense<0.000000e+00> : vector<32x128xf32>
    %60 = tpu.matmul %52, %59, %cst_46 {dimension_numbers = #tpu.dot_dimension_numbers<[1], [0], [0], [1], [0, 0, 1, 1], [], []>} : vector<32x128xf32>, vector<128x128xf32>, vector<32x128xf32> -> vector<32x128xf32>
    %61 = arith.addf %57, %60 : vector<32x128xf32>
    %c2_47 = arith.constant 2 : index
    %c0_48 = arith.constant 0 : index
    %c0_49 = arith.constant 0 : index
    %62 = vector.load %arg7[%c2_47, %c0_48, %c0_49] : memref<3x128x128xf32, #tpu.memory_space<vmem>>, vector<1x128x128xf32>
    %63 = vector.shape_cast %62 : vector<1x128x128xf32> to vector<128x128xf32>
    %cst_50 = arith.constant dense<0.000000e+00> : vector<32x128xf32>
    %64 = tpu.matmul %54, %63, %cst_50 {dimension_numbers = #tpu.dot_dimension_numbers<[1], [0], [0], [1], [0, 0, 1, 1], [], []>} : vector<32x128xf32>, vector<128x128xf32>, vector<32x128xf32> -> vector<32x128xf32>
    %65 = arith.addf %61, %64 : vector<32x128xf32>
    %66 = vector.broadcast %9 : vector<1x128xf32> to vector<32x128xf32>
    %67 = arith.addf %65, %66 : vector<32x128xf32>
    %cst_51 = arith.constant dense<0.000000e+00> : vector<32x128xf32>
    %68 = tpu.matmul %67, %2, %cst_51 {dimension_numbers = #tpu.dot_dimension_numbers<[1], [0], [0], [1], [0, 0, 1, 1], [], []>} : vector<32x128xf32>, vector<128x128xf32>, vector<32x128xf32> -> vector<32x128xf32>
    %cst_52 = arith.constant dense<0.000000e+00> : vector<128xf32>
    %69 = vector.multi_reduction <add>, %68, %cst_52 [0] : vector<32x128xf32> to vector<128xf32>
    %70 = vector.shape_cast %69 : vector<128xf32> to vector<1x128xf32>
    %71 = arith.mulf %67, %67 : vector<32x128xf32>
    %cst_53 = arith.constant dense<0.000000e+00> : vector<32x128xf32>
    %72 = tpu.matmul %71, %2, %cst_53 {dimension_numbers = #tpu.dot_dimension_numbers<[1], [0], [0], [1], [0, 0, 1, 1], [], []>} : vector<32x128xf32>, vector<128x128xf32>, vector<32x128xf32> -> vector<32x128xf32>
    %cst_54 = arith.constant dense<0.000000e+00> : vector<128xf32>
    %73 = vector.multi_reduction <add>, %72, %cst_54 [0] : vector<32x128xf32> to vector<128xf32>
    %74 = vector.shape_cast %73 : vector<128xf32> to vector<1x128xf32>
    %cst_55 = arith.constant 0.001953125 : f32
    %75 = vector.broadcast %cst_55 : f32 to vector<1x128xf32>
    %76 = arith.mulf %70, %75 : vector<1x128xf32>
    %cst_56 = arith.constant 0.001953125 : f32
    %77 = vector.broadcast %cst_56 : f32 to vector<1x128xf32>
    %78 = arith.mulf %74, %77 : vector<1x128xf32>
    %79 = arith.mulf %76, %76 : vector<1x128xf32>
    %80 = arith.subf %78, %79 : vector<1x128xf32>
    %cst_57 = arith.constant 9.99999974E-6 : f32
    %81 = vector.broadcast %cst_57 : f32 to vector<1x128xf32>
    %82 = arith.addf %80, %81 : vector<1x128xf32>
    %83 = math.rsqrt %82 : vector<1x128xf32>
    %84 = arith.mulf %83, %10 : vector<1x128xf32>
    %85 = arith.mulf %76, %84 : vector<1x128xf32>
    %86 = arith.subf %11, %85 : vector<1x128xf32>
    %87 = vector.broadcast %84 : vector<1x128xf32> to vector<32x128xf32>
    %88 = arith.mulf %67, %87 : vector<32x128xf32>
    %89 = vector.broadcast %86 : vector<1x128xf32> to vector<32x128xf32>
    %90 = arith.addf %88, %89 : vector<32x128xf32>
    %cst_58 = arith.constant 0.000000e+00 : f32
    %91 = vector.broadcast %cst_58 : f32 to vector<32x128xf32>
    %92 = arith.maximumf %90, %91 : vector<32x128xf32>
    %93 = arith.addf %8, %92 : vector<32x128xf32>
    %cst_59 = arith.constant dense<0.000000e+00> : vector<32x128xf32>
    %94 = tpu.matmul %0, %93, %cst_59 {dimension_numbers = #tpu.dot_dimension_numbers<[1], [0], [0], [1], [0, 0, 1, 1], [], []>} : vector<32x32xf32>, vector<32x128xf32>, vector<32x128xf32> -> vector<32x128xf32>
    %cst_60 = arith.constant dense<0.000000e+00> : vector<32x128xf32>
    %95 = tpu.matmul %1, %93, %cst_60 {dimension_numbers = #tpu.dot_dimension_numbers<[1], [0], [0], [1], [0, 0, 1, 1], [], []>} : vector<32x32xf32>, vector<32x128xf32>, vector<32x128xf32> -> vector<32x128xf32>
    %c0_61 = arith.constant 0 : index
    %c0_62 = arith.constant 0 : index
    %c0_63 = arith.constant 0 : index
    %96 = vector.load %arg7[%c0_61, %c0_62, %c0_63] : memref<3x128x128xf32, #tpu.memory_space<vmem>>, vector<1x128x128xf32>
    %97 = vector.shape_cast %96 : vector<1x128x128xf32> to vector<128x128xf32>
    %cst_64 = arith.constant dense<0.000000e+00> : vector<32x128xf32>
    %98 = tpu.matmul %94, %97, %cst_64 {dimension_numbers = #tpu.dot_dimension_numbers<[1], [0], [0], [1], [0, 0, 1, 1], [], []>} : vector<32x128xf32>, vector<128x128xf32>, vector<32x128xf32> -> vector<32x128xf32>
    %c1_65 = arith.constant 1 : index
    %c0_66 = arith.constant 0 : index
    %c0_67 = arith.constant 0 : index
    %99 = vector.load %arg7[%c1_65, %c0_66, %c0_67] : memref<3x128x128xf32, #tpu.memory_space<vmem>>, vector<1x128x128xf32>
    %100 = vector.shape_cast %99 : vector<1x128x128xf32> to vector<128x128xf32>
    %cst_68 = arith.constant dense<0.000000e+00> : vector<32x128xf32>
    %101 = tpu.matmul %93, %100, %cst_68 {dimension_numbers = #tpu.dot_dimension_numbers<[1], [0], [0], [1], [0, 0, 1, 1], [], []>} : vector<32x128xf32>, vector<128x128xf32>, vector<32x128xf32> -> vector<32x128xf32>
    %102 = arith.addf %98, %101 : vector<32x128xf32>
    %c2_69 = arith.constant 2 : index
    %c0_70 = arith.constant 0 : index
    %c0_71 = arith.constant 0 : index
    %103 = vector.load %arg7[%c2_69, %c0_70, %c0_71] : memref<3x128x128xf32, #tpu.memory_space<vmem>>, vector<1x128x128xf32>
    %104 = vector.shape_cast %103 : vector<1x128x128xf32> to vector<128x128xf32>
    %cst_72 = arith.constant dense<0.000000e+00> : vector<32x128xf32>
    %105 = tpu.matmul %95, %104, %cst_72 {dimension_numbers = #tpu.dot_dimension_numbers<[1], [0], [0], [1], [0, 0, 1, 1], [], []>} : vector<32x128xf32>, vector<128x128xf32>, vector<32x128xf32> -> vector<32x128xf32>
    %106 = arith.addf %102, %105 : vector<32x128xf32>
    %107 = vector.broadcast %9 : vector<1x128xf32> to vector<32x128xf32>
    %108 = arith.addf %106, %107 : vector<32x128xf32>
    %cst_73 = arith.constant dense<0.000000e+00> : vector<32x128xf32>
    %109 = tpu.matmul %108, %2, %cst_73 {dimension_numbers = #tpu.dot_dimension_numbers<[1], [0], [0], [1], [0, 0, 1, 1], [], []>} : vector<32x128xf32>, vector<128x128xf32>, vector<32x128xf32> -> vector<32x128xf32>
    %cst_74 = arith.constant dense<0.000000e+00> : vector<128xf32>
    %110 = vector.multi_reduction <add>, %109, %cst_74 [0] : vector<32x128xf32> to vector<128xf32>
    %111 = vector.shape_cast %110 : vector<128xf32> to vector<1x128xf32>
    %112 = arith.mulf %108, %108 : vector<32x128xf32>
    %cst_75 = arith.constant dense<0.000000e+00> : vector<32x128xf32>
    %113 = tpu.matmul %112, %2, %cst_75 {dimension_numbers = #tpu.dot_dimension_numbers<[1], [0], [0], [1], [0, 0, 1, 1], [], []>} : vector<32x128xf32>, vector<128x128xf32>, vector<32x128xf32> -> vector<32x128xf32>
    %cst_76 = arith.constant dense<0.000000e+00> : vector<128xf32>
    %114 = vector.multi_reduction <add>, %113, %cst_76 [0] : vector<32x128xf32> to vector<128xf32>
    %115 = vector.shape_cast %114 : vector<128xf32> to vector<1x128xf32>
    %cst_77 = arith.constant 0.001953125 : f32
    %116 = vector.broadcast %cst_77 : f32 to vector<1x128xf32>
    %117 = arith.mulf %111, %116 : vector<1x128xf32>
    %cst_78 = arith.constant 0.001953125 : f32
    %118 = vector.broadcast %cst_78 : f32 to vector<1x128xf32>
    %119 = arith.mulf %115, %118 : vector<1x128xf32>
    %120 = arith.mulf %117, %117 : vector<1x128xf32>
    %121 = arith.subf %119, %120 : vector<1x128xf32>
    %cst_79 = arith.constant 9.99999974E-6 : f32
    %122 = vector.broadcast %cst_79 : f32 to vector<1x128xf32>
    %123 = arith.addf %121, %122 : vector<1x128xf32>
    %124 = math.rsqrt %123 : vector<1x128xf32>
    %125 = arith.mulf %124, %10 : vector<1x128xf32>
    %126 = arith.mulf %117, %125 : vector<1x128xf32>
    %127 = arith.subf %11, %126 : vector<1x128xf32>
    %128 = vector.broadcast %125 : vector<1x128xf32> to vector<32x128xf32>
    %129 = arith.mulf %108, %128 : vector<32x128xf32>
    %130 = vector.broadcast %127 : vector<1x128xf32> to vector<32x128xf32>
    %131 = arith.addf %129, %130 : vector<32x128xf32>
    %cst_80 = arith.constant 0.000000e+00 : f32
    %132 = vector.broadcast %cst_80 : f32 to vector<32x128xf32>
    %133 = arith.maximumf %131, %132 : vector<32x128xf32>
    %c0_81 = arith.constant 0 : index
    %c0_82 = arith.constant 0 : index
    %134 = vector.load %arg12[%c0_81, %c0_82] : memref<1x128xf32, #tpu.memory_space<vmem>>, vector<1x128xf32>
    %c0_83 = arith.constant 0 : index
    %c0_84 = arith.constant 0 : index
    %135 = vector.load %arg13[%c0_83, %c0_84] : memref<1x128xf32, #tpu.memory_space<vmem>>, vector<1x128xf32>
    %c0_85 = arith.constant 0 : index
    %c0_86 = arith.constant 0 : index
    %136 = vector.load %arg14[%c0_85, %c0_86] : memref<1x128xf32, #tpu.memory_space<vmem>>, vector<1x128xf32>
    %cst_87 = arith.constant dense<0.000000e+00> : vector<32x128xf32>
    %137 = tpu.matmul %0, %133, %cst_87 {dimension_numbers = #tpu.dot_dimension_numbers<[1], [0], [0], [1], [0, 0, 1, 1], [], []>} : vector<32x32xf32>, vector<32x128xf32>, vector<32x128xf32> -> vector<32x128xf32>
    %cst_88 = arith.constant dense<0.000000e+00> : vector<32x128xf32>
    %138 = tpu.matmul %1, %133, %cst_88 {dimension_numbers = #tpu.dot_dimension_numbers<[1], [0], [0], [1], [0, 0, 1, 1], [], []>} : vector<32x32xf32>, vector<32x128xf32>, vector<32x128xf32> -> vector<32x128xf32>
    %c0_89 = arith.constant 0 : index
    %c0_90 = arith.constant 0 : index
    %c0_91 = arith.constant 0 : index
    %139 = vector.load %arg11[%c0_89, %c0_90, %c0_91] : memref<3x128x128xf32, #tpu.memory_space<vmem>>, vector<1x128x128xf32>
    %140 = vector.shape_cast %139 : vector<1x128x128xf32> to vector<128x128xf32>
    %cst_92 = arith.constant dense<0.000000e+00> : vector<32x128xf32>
    %141 = tpu.matmul %137, %140, %cst_92 {dimension_numbers = #tpu.dot_dimension_numbers<[1], [0], [0], [1], [0, 0, 1, 1], [], []>} : vector<32x128xf32>, vector<128x128xf32>, vector<32x128xf32> -> vector<32x128xf32>
    %c1_93 = arith.constant 1 : index
    %c0_94 = arith.constant 0 : index
    %c0_95 = arith.constant 0 : index
    %142 = vector.load %arg11[%c1_93, %c0_94, %c0_95] : memref<3x128x128xf32, #tpu.memory_space<vmem>>, vector<1x128x128xf32>
    %143 = vector.shape_cast %142 : vector<1x128x128xf32> to vector<128x128xf32>
    %cst_96 = arith.constant dense<0.000000e+00> : vector<32x128xf32>
    %144 = tpu.matmul %133, %143, %cst_96 {dimension_numbers = #tpu.dot_dimension_numbers<[1], [0], [0], [1], [0, 0, 1, 1], [], []>} : vector<32x128xf32>, vector<128x128xf32>, vector<32x128xf32> -> vector<32x128xf32>
    %145 = arith.addf %141, %144 : vector<32x128xf32>
    %c2_97 = arith.constant 2 : index
    %c0_98 = arith.constant 0 : index
    %c0_99 = arith.constant 0 : index
    %146 = vector.load %arg11[%c2_97, %c0_98, %c0_99] : memref<3x128x128xf32, #tpu.memory_space<vmem>>, vector<1x128x128xf32>
    %147 = vector.shape_cast %146 : vector<1x128x128xf32> to vector<128x128xf32>
    %cst_100 = arith.constant dense<0.000000e+00> : vector<32x128xf32>
    %148 = tpu.matmul %138, %147, %cst_100 {dimension_numbers = #tpu.dot_dimension_numbers<[1], [0], [0], [1], [0, 0, 1, 1], [], []>} : vector<32x128xf32>, vector<128x128xf32>, vector<32x128xf32> -> vector<32x128xf32>
    %149 = arith.addf %145, %148 : vector<32x128xf32>
    %150 = vector.broadcast %134 : vector<1x128xf32> to vector<32x128xf32>
    %151 = arith.addf %149, %150 : vector<32x128xf32>
    %cst_101 = arith.constant dense<0.000000e+00> : vector<32x128xf32>
    %152 = tpu.matmul %151, %2, %cst_101 {dimension_numbers = #tpu.dot_dimension_numbers<[1], [0], [0], [1], [0, 0, 1, 1], [], []>} : vector<32x128xf32>, vector<128x128xf32>, vector<32x128xf32> -> vector<32x128xf32>
    %cst_102 = arith.constant dense<0.000000e+00> : vector<128xf32>
    %153 = vector.multi_reduction <add>, %152, %cst_102 [0] : vector<32x128xf32> to vector<128xf32>
    %154 = vector.shape_cast %153 : vector<128xf32> to vector<1x128xf32>
    %155 = arith.mulf %151, %151 : vector<32x128xf32>
    %cst_103 = arith.constant dense<0.000000e+00> : vector<32x128xf32>
    %156 = tpu.matmul %155, %2, %cst_103 {dimension_numbers = #tpu.dot_dimension_numbers<[1], [0], [0], [1], [0, 0, 1, 1], [], []>} : vector<32x128xf32>, vector<128x128xf32>, vector<32x128xf32> -> vector<32x128xf32>
    %cst_104 = arith.constant dense<0.000000e+00> : vector<128xf32>
    %157 = vector.multi_reduction <add>, %156, %cst_104 [0] : vector<32x128xf32> to vector<128xf32>
    %158 = vector.shape_cast %157 : vector<128xf32> to vector<1x128xf32>
    %cst_105 = arith.constant 0.001953125 : f32
    %159 = vector.broadcast %cst_105 : f32 to vector<1x128xf32>
    %160 = arith.mulf %154, %159 : vector<1x128xf32>
    %cst_106 = arith.constant 0.001953125 : f32
    %161 = vector.broadcast %cst_106 : f32 to vector<1x128xf32>
    %162 = arith.mulf %158, %161 : vector<1x128xf32>
    %163 = arith.mulf %160, %160 : vector<1x128xf32>
    %164 = arith.subf %162, %163 : vector<1x128xf32>
    %cst_107 = arith.constant 9.99999974E-6 : f32
    %165 = vector.broadcast %cst_107 : f32 to vector<1x128xf32>
    %166 = arith.addf %164, %165 : vector<1x128xf32>
    %167 = math.rsqrt %166 : vector<1x128xf32>
    %168 = arith.mulf %167, %135 : vector<1x128xf32>
    %169 = arith.mulf %160, %168 : vector<1x128xf32>
    %170 = arith.subf %136, %169 : vector<1x128xf32>
    %171 = vector.broadcast %168 : vector<1x128xf32> to vector<32x128xf32>
    %172 = arith.mulf %151, %171 : vector<32x128xf32>
    %173 = vector.broadcast %170 : vector<1x128xf32> to vector<32x128xf32>
    %174 = arith.addf %172, %173 : vector<32x128xf32>
    %cst_108 = arith.constant 0.000000e+00 : f32
    %175 = vector.broadcast %cst_108 : f32 to vector<32x128xf32>
    %176 = arith.maximumf %174, %175 : vector<32x128xf32>
    %177 = arith.addf %133, %176 : vector<32x128xf32>
    %cst_109 = arith.constant dense<0.000000e+00> : vector<32x128xf32>
    %178 = tpu.matmul %0, %177, %cst_109 {dimension_numbers = #tpu.dot_dimension_numbers<[1], [0], [0], [1], [0, 0, 1, 1], [], []>} : vector<32x32xf32>, vector<32x128xf32>, vector<32x128xf32> -> vector<32x128xf32>
    %cst_110 = arith.constant dense<0.000000e+00> : vector<32x128xf32>
    %179 = tpu.matmul %1, %177, %cst_110 {dimension_numbers = #tpu.dot_dimension_numbers<[1], [0], [0], [1], [0, 0, 1, 1], [], []>} : vector<32x32xf32>, vector<32x128xf32>, vector<32x128xf32> -> vector<32x128xf32>
    %c0_111 = arith.constant 0 : index
    %c0_112 = arith.constant 0 : index
    %c0_113 = arith.constant 0 : index
    %180 = vector.load %arg11[%c0_111, %c0_112, %c0_113] : memref<3x128x128xf32, #tpu.memory_space<vmem>>, vector<1x128x128xf32>
    %181 = vector.shape_cast %180 : vector<1x128x128xf32> to vector<128x128xf32>
    %cst_114 = arith.constant dense<0.000000e+00> : vector<32x128xf32>
    %182 = tpu.matmul %178, %181, %cst_114 {dimension_numbers = #tpu.dot_dimension_numbers<[1], [0], [0], [1], [0, 0, 1, 1], [], []>} : vector<32x128xf32>, vector<128x128xf32>, vector<32x128xf32> -> vector<32x128xf32>
    %c1_115 = arith.constant 1 : index
    %c0_116 = arith.constant 0 : index
    %c0_117 = arith.constant 0 : index
    %183 = vector.load %arg11[%c1_115, %c0_116, %c0_117] : memref<3x128x128xf32, #tpu.memory_space<vmem>>, vector<1x128x128xf32>
    %184 = vector.shape_cast %183 : vector<1x128x128xf32> to vector<128x128xf32>
    %cst_118 = arith.constant dense<0.000000e+00> : vector<32x128xf32>
    %185 = tpu.matmul %177, %184, %cst_118 {dimension_numbers = #tpu.dot_dimension_numbers<[1], [0], [0], [1], [0, 0, 1, 1], [], []>} : vector<32x128xf32>, vector<128x128xf32>, vector<32x128xf32> -> vector<32x128xf32>
    %186 = arith.addf %182, %185 : vector<32x128xf32>
    %c2_119 = arith.constant 2 : index
    %c0_120 = arith.constant 0 : index
    %c0_121 = arith.constant 0 : index
    %187 = vector.load %arg11[%c2_119, %c0_120, %c0_121] : memref<3x128x128xf32, #tpu.memory_space<vmem>>, vector<1x128x128xf32>
    %188 = vector.shape_cast %187 : vector<1x128x128xf32> to vector<128x128xf32>
    %cst_122 = arith.constant dense<0.000000e+00> : vector<32x128xf32>
    %189 = tpu.matmul %179, %188, %cst_122 {dimension_numbers = #tpu.dot_dimension_numbers<[1], [0], [0], [1], [0, 0, 1, 1], [], []>} : vector<32x128xf32>, vector<128x128xf32>, vector<32x128xf32> -> vector<32x128xf32>
    %190 = arith.addf %186, %189 : vector<32x128xf32>
    %191 = vector.broadcast %134 : vector<1x128xf32> to vector<32x128xf32>
    %192 = arith.addf %190, %191 : vector<32x128xf32>
    %cst_123 = arith.constant dense<0.000000e+00> : vector<32x128xf32>
    %193 = tpu.matmul %192, %2, %cst_123 {dimension_numbers = #tpu.dot_dimension_numbers<[1], [0], [0], [1], [0, 0, 1, 1], [], []>} : vector<32x128xf32>, vector<128x128xf32>, vector<32x128xf32> -> vector<32x128xf32>
    %cst_124 = arith.constant dense<0.000000e+00> : vector<128xf32>
    %194 = vector.multi_reduction <add>, %193, %cst_124 [0] : vector<32x128xf32> to vector<128xf32>
    %195 = vector.shape_cast %194 : vector<128xf32> to vector<1x128xf32>
    %196 = arith.mulf %192, %192 : vector<32x128xf32>
    %cst_125 = arith.constant dense<0.000000e+00> : vector<32x128xf32>
    %197 = tpu.matmul %196, %2, %cst_125 {dimension_numbers = #tpu.dot_dimension_numbers<[1], [0], [0], [1], [0, 0, 1, 1], [], []>} : vector<32x128xf32>, vector<128x128xf32>, vector<32x128xf32> -> vector<32x128xf32>
    %cst_126 = arith.constant dense<0.000000e+00> : vector<128xf32>
    %198 = vector.multi_reduction <add>, %197, %cst_126 [0] : vector<32x128xf32> to vector<128xf32>
    %199 = vector.shape_cast %198 : vector<128xf32> to vector<1x128xf32>
    %cst_127 = arith.constant 0.001953125 : f32
    %200 = vector.broadcast %cst_127 : f32 to vector<1x128xf32>
    %201 = arith.mulf %195, %200 : vector<1x128xf32>
    %cst_128 = arith.constant 0.001953125 : f32
    %202 = vector.broadcast %cst_128 : f32 to vector<1x128xf32>
    %203 = arith.mulf %199, %202 : vector<1x128xf32>
    %204 = arith.mulf %201, %201 : vector<1x128xf32>
    %205 = arith.subf %203, %204 : vector<1x128xf32>
    %cst_129 = arith.constant 9.99999974E-6 : f32
    %206 = vector.broadcast %cst_129 : f32 to vector<1x128xf32>
    %207 = arith.addf %205, %206 : vector<1x128xf32>
    %208 = math.rsqrt %207 : vector<1x128xf32>
    %209 = arith.mulf %208, %135 : vector<1x128xf32>
    %210 = arith.mulf %201, %209 : vector<1x128xf32>
    %211 = arith.subf %136, %210 : vector<1x128xf32>
    %212 = vector.broadcast %209 : vector<1x128xf32> to vector<32x128xf32>
    %213 = arith.mulf %192, %212 : vector<32x128xf32>
    %214 = vector.broadcast %211 : vector<1x128xf32> to vector<32x128xf32>
    %215 = arith.addf %213, %214 : vector<32x128xf32>
    %cst_130 = arith.constant 0.000000e+00 : f32
    %216 = vector.broadcast %cst_130 : f32 to vector<32x128xf32>
    %217 = arith.maximumf %215, %216 : vector<32x128xf32>
    %218 = arith.addf %133, %217 : vector<32x128xf32>
    %cst_131 = arith.constant dense<0.000000e+00> : vector<32x128xf32>
    %219 = tpu.matmul %0, %218, %cst_131 {dimension_numbers = #tpu.dot_dimension_numbers<[1], [0], [0], [1], [0, 0, 1, 1], [], []>} : vector<32x32xf32>, vector<32x128xf32>, vector<32x128xf32> -> vector<32x128xf32>
    %cst_132 = arith.constant dense<0.000000e+00> : vector<32x128xf32>
    %220 = tpu.matmul %1, %218, %cst_132 {dimension_numbers = #tpu.dot_dimension_numbers<[1], [0], [0], [1], [0, 0, 1, 1], [], []>} : vector<32x32xf32>, vector<32x128xf32>, vector<32x128xf32> -> vector<32x128xf32>
    %c0_133 = arith.constant 0 : index
    %c0_134 = arith.constant 0 : index
    %c0_135 = arith.constant 0 : index
    %221 = vector.load %arg11[%c0_133, %c0_134, %c0_135] : memref<3x128x128xf32, #tpu.memory_space<vmem>>, vector<1x128x128xf32>
    %222 = vector.shape_cast %221 : vector<1x128x128xf32> to vector<128x128xf32>
    %cst_136 = arith.constant dense<0.000000e+00> : vector<32x128xf32>
    %223 = tpu.matmul %219, %222, %cst_136 {dimension_numbers = #tpu.dot_dimension_numbers<[1], [0], [0], [1], [0, 0, 1, 1], [], []>} : vector<32x128xf32>, vector<128x128xf32>, vector<32x128xf32> -> vector<32x128xf32>
    %c1_137 = arith.constant 1 : index
    %c0_138 = arith.constant 0 : index
    %c0_139 = arith.constant 0 : index
    %224 = vector.load %arg11[%c1_137, %c0_138, %c0_139] : memref<3x128x128xf32, #tpu.memory_space<vmem>>, vector<1x128x128xf32>
    %225 = vector.shape_cast %224 : vector<1x128x128xf32> to vector<128x128xf32>
    %cst_140 = arith.constant dense<0.000000e+00> : vector<32x128xf32>
    %226 = tpu.matmul %218, %225, %cst_140 {dimension_numbers = #tpu.dot_dimension_numbers<[1], [0], [0], [1], [0, 0, 1, 1], [], []>} : vector<32x128xf32>, vector<128x128xf32>, vector<32x128xf32> -> vector<32x128xf32>
    %227 = arith.addf %223, %226 : vector<32x128xf32>
    %c2_141 = arith.constant 2 : index
    %c0_142 = arith.constant 0 : index
    %c0_143 = arith.constant 0 : index
    %228 = vector.load %arg11[%c2_141, %c0_142, %c0_143] : memref<3x128x128xf32, #tpu.memory_space<vmem>>, vector<1x128x128xf32>
    %229 = vector.shape_cast %228 : vector<1x128x128xf32> to vector<128x128xf32>
    %cst_144 = arith.constant dense<0.000000e+00> : vector<32x128xf32>
    %230 = tpu.matmul %220, %229, %cst_144 {dimension_numbers = #tpu.dot_dimension_numbers<[1], [0], [0], [1], [0, 0, 1, 1], [], []>} : vector<32x128xf32>, vector<128x128xf32>, vector<32x128xf32> -> vector<32x128xf32>
    %231 = arith.addf %227, %230 : vector<32x128xf32>
    %232 = vector.broadcast %134 : vector<1x128xf32> to vector<32x128xf32>
    %233 = arith.addf %231, %232 : vector<32x128xf32>
    %cst_145 = arith.constant dense<0.000000e+00> : vector<32x128xf32>
    %234 = tpu.matmul %233, %2, %cst_145 {dimension_numbers = #tpu.dot_dimension_numbers<[1], [0], [0], [1], [0, 0, 1, 1], [], []>} : vector<32x128xf32>, vector<128x128xf32>, vector<32x128xf32> -> vector<32x128xf32>
    %cst_146 = arith.constant dense<0.000000e+00> : vector<128xf32>
    %235 = vector.multi_reduction <add>, %234, %cst_146 [0] : vector<32x128xf32> to vector<128xf32>
    %236 = vector.shape_cast %235 : vector<128xf32> to vector<1x128xf32>
    %237 = arith.mulf %233, %233 : vector<32x128xf32>
    %cst_147 = arith.constant dense<0.000000e+00> : vector<32x128xf32>
    %238 = tpu.matmul %237, %2, %cst_147 {dimension_numbers = #tpu.dot_dimension_numbers<[1], [0], [0], [1], [0, 0, 1, 1], [], []>} : vector<32x128xf32>, vector<128x128xf32>, vector<32x128xf32> -> vector<32x128xf32>
    %cst_148 = arith.constant dense<0.000000e+00> : vector<128xf32>
    %239 = vector.multi_reduction <add>, %238, %cst_148 [0] : vector<32x128xf32> to vector<128xf32>
    %240 = vector.shape_cast %239 : vector<128xf32> to vector<1x128xf32>
    %cst_149 = arith.constant 0.001953125 : f32
    %241 = vector.broadcast %cst_149 : f32 to vector<1x128xf32>
    %242 = arith.mulf %236, %241 : vector<1x128xf32>
    %cst_150 = arith.constant 0.001953125 : f32
    %243 = vector.broadcast %cst_150 : f32 to vector<1x128xf32>
    %244 = arith.mulf %240, %243 : vector<1x128xf32>
    %245 = arith.mulf %242, %242 : vector<1x128xf32>
    %246 = arith.subf %244, %245 : vector<1x128xf32>
    %cst_151 = arith.constant 9.99999974E-6 : f32
    %247 = vector.broadcast %cst_151 : f32 to vector<1x128xf32>
    %248 = arith.addf %246, %247 : vector<1x128xf32>
    %249 = math.rsqrt %248 : vector<1x128xf32>
    %250 = arith.mulf %249, %135 : vector<1x128xf32>
    %251 = arith.mulf %242, %250 : vector<1x128xf32>
    %252 = arith.subf %136, %251 : vector<1x128xf32>
    %253 = vector.broadcast %250 : vector<1x128xf32> to vector<32x128xf32>
    %254 = arith.mulf %233, %253 : vector<32x128xf32>
    %255 = vector.broadcast %252 : vector<1x128xf32> to vector<32x128xf32>
    %256 = arith.addf %254, %255 : vector<32x128xf32>
    %cst_152 = arith.constant 0.000000e+00 : f32
    %257 = vector.broadcast %cst_152 : f32 to vector<32x128xf32>
    %258 = arith.maximumf %256, %257 : vector<32x128xf32>
    %259 = arith.addf %8, %258 : vector<32x128xf32>
    %c0_153 = arith.constant 0 : index
    %c0_154 = arith.constant 0 : index
    %260 = vector.load %arg15[%c0_153, %c0_154] : memref<32x128xf32, #tpu.memory_space<vmem>>, vector<32x128xf32>
    tpu.vector_store %arg15[%c0_153, %c0_154], %259 {strides = array<i32>} : memref<32x128xf32, #tpu.memory_space<vmem>>, vector<32x128xf32>,
    return
  }
  func.func @transform_0(%arg0: i32) -> (i32, i32) {
    %c0_i32 = arith.constant 0 : i32
    %c0_i32_0 = arith.constant 0 : i32
    %c0_i32_1 = arith.constant 0 : i32
    return %c0_i32, %c0_i32_0 : i32, i32
  }
  func.func @transform_1(%arg0: i32) -> (i32, i32) {
    %c0_i32 = arith.constant 0 : i32
    %c0_i32_0 = arith.constant 0 : i32
    %c0_i32_1 = arith.constant 0 : i32
    return %c0_i32, %c0_i32_0 : i32, i32
  }
  func.func @transform_2(%arg0: i32) -> (i32, i32) {
    %c0_i32 = arith.constant 0 : i32
    %c0_i32_0 = arith.constant 0 : i32
    %c0_i32_1 = arith.constant 0 : i32
    return %c0_i32, %c0_i32_0 : i32, i32
  }
  func.func @transform_3(%arg0: i32) -> (i32, i32) {
    %c0_i32 = arith.constant 0 : i32
    %c0_i32_0 = arith.constant 0 : i32
    %c0_i32_1 = arith.constant 0 : i32
    return %c0_i32, %c0_i32_0 : i32, i32
  }
  func.func @transform_4(%arg0: i32) -> (i32, i32) {
    %c0_i32 = arith.constant 0 : i32
    %c0_i32_0 = arith.constant 0 : i32
    %c0_i32_1 = arith.constant 0 : i32
    return %c0_i32, %c0_i32_0 : i32, i32
  }
  func.func @transform_5(%arg0: i32) -> (i32, i32) {
    %c0_i32 = arith.constant 0 : i32
    %c0_i32_0 = arith.constant 0 : i32
    %c0_i32_1 = arith.constant 0 : i32
    return %c0_i32, %c0_i32_0 : i32, i32
  }
  func.func @transform_6(%arg0: i32) -> (i32, i32, i32) {
    %c0_i32 = arith.constant 0 : i32
    %c0_i32_0 = arith.constant 0 : i32
    %c0_i32_1 = arith.constant 0 : i32
    %c0_i32_2 = arith.constant 0 : i32
    return %c0_i32, %c0_i32_0, %c0_i32_1 : i32, i32, i32
  }
  func.func @transform_7(%arg0: i32) -> (i32, i32) {
    %c0_i32 = arith.constant 0 : i32
    %c0_i32_0 = arith.constant 0 : i32
    %c0_i32_1 = arith.constant 0 : i32
    return %c0_i32, %c0_i32_0 : i32, i32
  }
  func.func @transform_8(%arg0: i32) -> (i32, i32) {
    %c0_i32 = arith.constant 0 : i32
    %c0_i32_0 = arith.constant 0 : i32
    %c0_i32_1 = arith.constant 0 : i32
    return %c0_i32, %c0_i32_0 : i32, i32
  }
  func.func @transform_9(%arg0: i32) -> (i32, i32) {
    %c0_i32 = arith.constant 0 : i32
    %c0_i32_0 = arith.constant 0 : i32
    %c0_i32_1 = arith.constant 0 : i32
    return %c0_i32, %c0_i32_0 : i32, i32
  }
  func.func @transform_10(%arg0: i32) -> (i32, i32, i32) {
    %c0_i32 = arith.constant 0 : i32
    %c0_i32_0 = arith.constant 0 : i32
    %c0_i32_1 = arith.constant 0 : i32
    %c0_i32_2 = arith.constant 0 : i32
    return %c0_i32, %c0_i32_0, %c0_i32_1 : i32, i32, i32
  }
  func.func @transform_11(%arg0: i32) -> (i32, i32) {
    %c0_i32 = arith.constant 0 : i32
    %c0_i32_0 = arith.constant 0 : i32
    %c0_i32_1 = arith.constant 0 : i32
    return %c0_i32, %c0_i32_0 : i32, i32
  }
  func.func @transform_12(%arg0: i32) -> (i32, i32) {
    %c0_i32 = arith.constant 0 : i32
    %c0_i32_0 = arith.constant 0 : i32
    %c0_i32_1 = arith.constant 0 : i32
    return %c0_i32, %c0_i32_0 : i32, i32
  }
  func.func @transform_13(%arg0: i32) -> (i32, i32) {
    %c0_i32 = arith.constant 0 : i32
    %c0_i32_0 = arith.constant 0 : i32
    %c0_i32_1 = arith.constant 0 : i32
    return %c0_i32, %c0_i32_0 : i32, i32
  }
  func.func @transform_14(%arg0: i32) -> (i32, i32) {
    %c0_i32 = arith.constant 0 : i32
    %c0_i32_0 = arith.constant 0 : i32
    %c0_i32_1 = arith.constant 0 : i32
    return %c0_i32, %c0_i32_0 : i32, i32
  }
}

</mosaic_0001>

<llo_original>
// kernel: rrcnn_block.1
$region0: #{rrcnn_block.1}
  #allocation0 [shape = 'u32[]', space=smem, size = 0x4, offset = 0x4, fixed_abs, tag = 'smem constant byte address 0x4 - core index']
  #allocation1 [shape = 'u32[144,128]{1,0:T(1,128)}', space=vmem, size = 0x12000, scoped, tag = 'internal scratch']
  %s0 = inlined_call_operand.vmem [shape: f32[32,64], index: 0, kind: input, shape index: {}]
  %s1 = inlined_call_operand.vmem [shape: f32[64,128], index: 1, kind: input, shape index: {}]
  %s2 = inlined_call_operand.vmem [shape: f32[1,128], index: 2, kind: input, shape index: {}]
  %s3 = inlined_call_operand.vmem [shape: f32[32,32], index: 3, kind: input, shape index: {}]
  %s4 = inlined_call_operand.vmem [shape: f32[32,32], index: 4, kind: input, shape index: {}]
  %s5 = inlined_call_operand.vmem [shape: f32[128,128], index: 5, kind: input, shape index: {}]
  %s6 = inlined_call_operand.vmem [shape: f32[3,128,128], index: 6, kind: input, shape index: {}]
  %s7 = inlined_call_operand.vmem [shape: f32[1,128], index: 7, kind: input, shape index: {}]
  %s8 = inlined_call_operand.vmem [shape: f32[1,128], index: 8, kind: input, shape index: {}]
  %s9 = inlined_call_operand.vmem [shape: f32[1,128], index: 9, kind: input, shape index: {}]
  %s10 = inlined_call_operand.vmem [shape: f32[3,128,128], index: 10, kind: input, shape index: {}]
  %s11 = inlined_call_operand.vmem [shape: f32[1,128], index: 11, kind: input, shape index: {}]
  %s12 = inlined_call_operand.vmem [shape: f32[1,128], index: 12, kind: input, shape index: {}]
  %s13 = inlined_call_operand.vmem [shape: f32[1,128], index: 13, kind: input, shape index: {}]
  %s14 = inlined_call_operand.vmem [shape: f32[32,128], index: 14, kind: output, shape index: {}]
  %s15 = sld [smem:[#allocation0]]
  $region66: #{rrcnn_block.1} parent=0
    _
  %s17 = ssub.s32 1, %s15
  %s18 = scalar_select 0, %s17, %s15
  // Predicated region
  $region2: #{rrcnn_block.1} parent=0 // pred_check
    _
  $region3: #{rrcnn_block.1} parent=0 // pred_check_branch
    %20 = sbr.rel (0) target = $region5
  $region4: #{rrcnn_block.1} parent=0 // pred_region
    _
  $region5: #{rrcnn_block.1} parent=0 // pred_fallthru
    _
  // Predicated region
  $region6: #{rrcnn_block.1} parent=0 // pred_check
    _
  $region7: #{rrcnn_block.1} parent=0 // pred_check_branch
    %22 = sbr.rel (0) target = $region9
  $region8: #{rrcnn_block.1} parent=0 // pred_region
    _
  $region9: #{rrcnn_block.1} parent=0 // pred_fallthru
    _
  // Predicated region
  $region10: #{rrcnn_block.1} parent=0 // pred_check
    _
  $region11: #{rrcnn_block.1} parent=0 // pred_check_branch
    %24 = sbr.rel (0) target = $region13
  $region12: #{rrcnn_block.1} parent=0 // pred_region
    _
  $region13: #{rrcnn_block.1} parent=0 // pred_fallthru
    _
  // Predicated region
  $region14: #{rrcnn_block.1} parent=0 // pred_check
    _
  $region15: #{rrcnn_block.1} parent=0 // pred_check_branch
    %26 = sbr.rel (0) target = $region17
  $region16: #{rrcnn_block.1} parent=0 // pred_region
    _
  $region17: #{rrcnn_block.1} parent=0 // pred_fallthru
    _
  // Predicated region
  $region18: #{rrcnn_block.1} parent=0 // pred_check
    _
  $region19: #{rrcnn_block.1} parent=0 // pred_check_branch
    %28 = sbr.rel (0) target = $region21
  $region20: #{rrcnn_block.1} parent=0 // pred_region
    _
  $region21: #{rrcnn_block.1} parent=0 // pred_fallthru
    _
  // Predicated region
  $region22: #{rrcnn_block.1} parent=0 // pred_check
    _
  $region23: #{rrcnn_block.1} parent=0 // pred_check_branch
    %30 = sbr.rel (0) target = $region25
  $region24: #{rrcnn_block.1} parent=0 // pred_region
    _
  $region25: #{rrcnn_block.1} parent=0 // pred_fallthru
    _
  // Predicated region
  $region26: #{rrcnn_block.1} parent=0 // pred_check
    _
  $region27: #{rrcnn_block.1} parent=0 // pred_check_branch
    %32 = sbr.rel (0) target = $region29
  $region28: #{rrcnn_block.1} parent=0 // pred_region
    _
  $region29: #{rrcnn_block.1} parent=0 // pred_fallthru
    _
  // Predicated region
  $region30: #{rrcnn_block.1} parent=0 // pred_check
    _
  $region31: #{rrcnn_block.1} parent=0 // pred_check_branch
    %34 = sbr.rel (0) target = $region33
  $region32: #{rrcnn_block.1} parent=0 // pred_region
    _
  $region33: #{rrcnn_block.1} parent=0 // pred_fallthru
    _
  // Predicated region
  $region34: #{rrcnn_block.1} parent=0 // pred_check
    _
  $region35: #{rrcnn_block.1} parent=0 // pred_check_branch
    %36 = sbr.rel (0) target = $region37
  $region36: #{rrcnn_block.1} parent=0 // pred_region
    _
  $region37: #{rrcnn_block.1} parent=0 // pred_fallthru
    _
  // Predicated region
  $region38: #{rrcnn_block.1} parent=0 // pred_check
    _
  $region39: #{rrcnn_block.1} parent=0 // pred_check_branch
    %38 = sbr.rel (0) target = $region41
  $region40: #{rrcnn_block.1} parent=0 // pred_region
    _
  $region41: #{rrcnn_block.1} parent=0 // pred_fallthru
    _
  // Predicated region
  $region42: #{rrcnn_block.1} parent=0 // pred_check
    _
  $region43: #{rrcnn_block.1} parent=0 // pred_check_branch
    %40 = sbr.rel (0) target = $region45
  $region44: #{rrcnn_block.1} parent=0 // pred_region
    _
  $region45: #{rrcnn_block.1} parent=0 // pred_fallthru
    _
  // Predicated region
  $region46: #{rrcnn_block.1} parent=0 // pred_check
    _
  $region47: #{rrcnn_block.1} parent=0 // pred_check_branch
    %42 = sbr.rel (0) target = $region49
  $region48: #{rrcnn_block.1} parent=0 // pred_region
    _
  $region49: #{rrcnn_block.1} parent=0 // pred_fallthru
    _
  // Predicated region
  $region50: #{rrcnn_block.1} parent=0 // pred_check
    _
  $region51: #{rrcnn_block.1} parent=0 // pred_check_branch
    %44 = sbr.rel (0) target = $region53
  $region52: #{rrcnn_block.1} parent=0 // pred_region
    _
  $region53: #{rrcnn_block.1} parent=0 // pred_fallthru
    _
  // Predicated region
  $region54: #{rrcnn_block.1} parent=0 // pred_check
    _
  $region55: #{rrcnn_block.1} parent=0 // pred_check_branch
    %46 = sbr.rel (0) target = $region57
  $region56: #{rrcnn_block.1} parent=0 // pred_region
    _
  $region57: #{rrcnn_block.1} parent=0 // pred_fallthru
    _
  %v47 = vld [vmem:[%s3] sm:$0xff]
  %v48 = vld [vmem:[%s3 + $0x8] sm:$0xff]
  %v49 = vld [vmem:[%s3 + $0x10] sm:$0xff]
  %v50 = vld [vmem:[%s3 + $0x18] sm:$0xff]
  %v51 = vld [vmem:[%s4] sm:$0xff]
  %v52 = vld [vmem:[%s4 + $0x8] sm:$0xff]
  %v53 = vld [vmem:[%s4 + $0x10] sm:$0xff]
  %v54 = vld [vmem:[%s4 + $0x18] sm:$0xff]
  %v55 = vld [vmem:[%s5] sm:$0xff]
  %v56 = vld [vmem:[%s5 + $0x8] sm:$0xff]
  %v57 = vld [vmem:[%s5 + $0x10] sm:$0xff]
  %v58 = vld [vmem:[%s5 + $0x18] sm:$0xff]
  %v59 = vld [vmem:[%s5 + $0x20] sm:$0xff]
  %v60 = vld [vmem:[%s5 + $0x28] sm:$0xff]
  %v61 = vld [vmem:[%s5 + $0x30] sm:$0xff]
  %v62 = vld [vmem:[%s5 + $0x38] sm:$0xff]
  %v63 = vld [vmem:[%s5 + $0x40] sm:$0xff]
  %v64 = vld [vmem:[%s5 + $0x48] sm:$0xff]
  %v65 = vld [vmem:[%s5 + $0x50] sm:$0xff]
  %v66 = vld [vmem:[%s5 + $0x58] sm:$0xff]
  %v67 = vld [vmem:[%s5 + $0x60] sm:$0xff]
  %v68 = vld [vmem:[%s5 + $0x68] sm:$0xff]
  %v69 = vld [vmem:[%s5 + $0x70] sm:$0xff]
  %v70 = vld [vmem:[%s5 + $0x78] sm:$0xff]
  %v71 = vld [vmem:[%s0] sm:$0xff]
  %v72 = vld [vmem:[%s0 + $0x8] sm:$0xff]
  %v73 = vld [vmem:[%s0 + $0x10] sm:$0xff]
  %v74 = vld [vmem:[%s0 + $0x18] sm:$0xff]
  %v75 = vld [vmem:[%s1] sm:$0xff]
  %v76 = vld [vmem:[%s1 + $0x8] sm:$0xff]
  %v77 = vld [vmem:[%s1 + $0x10] sm:$0xff]
  %v78 = vld [vmem:[%s1 + $0x18] sm:$0xff]
  %v79 = vld [vmem:[%s1 + $0x20] sm:$0xff]
  %v80 = vld [vmem:[%s1 + $0x28] sm:$0xff]
  %v81 = vld [vmem:[%s1 + $0x30] sm:$0xff]
  %v82 = vld [vmem:[%s1 + $0x38] sm:$0xff]
  %v83 = vld [vmem:[%s2] sm:$0x1]
  %v85 = vlaneseq
  %v86 = vshrl.u32 %v85, 7
  %v87 = vsub.s32 0, %v86
  %v88 = vrot.slane %v83, %v87
  %vm90 = vcmask 523264
  %v92 = vsel %vm90, %v71, 0
  %v95 = vsel %vm90, %v72, 0
  %v98 = vsel %vm90, %v73, 0
  %v101 = vsel %vm90, %v74, 0
  %103 = vmatprep.subr.mxu0 0.0
  %104 = vmatpush1.msra.mxu0 0.0
  %105 = vmatprep.subr.mxu0 0.0
  %106 = vmatpush1.msra.mxu0 0.0
  %107 = vmatprep.subr.mxu0 0.0
  %108 = vmatpush1.msra.mxu0 0.0
  %109 = vmatprep.subr.mxu0 0.0
  %110 = vmatpush1.msra.mxu0 0.0
  %111 = vmatprep.subr.mxu0 0.0
  %112 = vmatpush1.msra.mxu0 0.0
  %113 = vmatprep.subr.mxu0 0.0
  %114 = vmatpush1.msra.mxu0 0.0
  %115 = vmatprep.subr.mxu0 0.0
  %116 = vmatpush1.msra.mxu0 0.0
  %117 = vmatprep.subr.mxu0 0.0
  %118 = vmatpush1.msra.mxu0 0.0
  %119 = vmatprep.subr.mxu0 0.0
  %120 = vmatpush1.msra.mxu0 %v82
  %121 = vmatprep.subr.mxu0 0.0
  %122 = vmatpush1.msra.mxu0 %v81
  %123 = vmatprep.subr.mxu0 0.0
  %124 = vmatpush1.msra.mxu0 %v80
  %125 = vmatprep.subr.mxu0 0.0
  %126 = vmatpush1.msra.mxu0 %v79
  %127 = vmatprep.subr.mxu0 0.0
  %128 = vmatpush1.msra.mxu0 %v78
  %129 = vmatprep.subr.mxu0 0.0
  %130 = vmatpush1.msra.mxu0 %v77
  %131 = vmatprep.subr.mxu0 0.0
  %132 = vmatpush1.msra.mxu0 %v76
  %133 = vmatprep.subr.mxu0 0.0
  %134 = vmatpush1.msra.mxu0 %v75
  %135 = vmatprep.subr.mxu0 0.0
  %136 = vmatpush2.msra.mxu0 0.0
  %137 = vmatprep.subr.mxu0 0.0
  %138 = vmatpush2.msra.mxu0 0.0
  %139 = vmatprep.subr.mxu0 0.0
  %140 = vmatpush2.msra.mxu0 0.0
  %141 = vmatprep.subr.mxu0 0.0
  %142 = vmatpush2.msra.mxu0 0.0
  %143 = vmatprep.subr.mxu0 0.0
  %144 = vmatpush2.msra.mxu0 0.0
  %145 = vmatprep.subr.mxu0 0.0
  %146 = vmatpush2.msra.mxu0 0.0
  %147 = vmatprep.subr.mxu0 0.0
  %148 = vmatpush2.msra.mxu0 0.0
  %149 = vmatprep.subr.mxu0 0.0
  %150 = vmatpush2.msra.mxu0 0.0
  %151 = vmatprep.subr.mxu0 0.0
  %152 = vmatpush2.msra.mxu0 0.0
  %153 = vmatprep.subr.mxu0 0.0
  %154 = vmatpush2.msra.mxu0 0.0
  %155 = vmatprep.subr.mxu0 0.0
  %156 = vmatpush2.msra.mxu0 0.0
  %157 = vmatprep.subr.mxu0 0.0
  %158 = vmatpush2.msra.mxu0 0.0
  %159 = vmatprep.subr.mxu0 0.0
  %160 = vmatpush2.msra.mxu0 0.0
  %161 = vmatprep.subr.mxu0 0.0
  %162 = vmatpush2.msra.mxu0 0.0
  %163 = vmatprep.subr.mxu0 0.0
  %164 = vmatpush2.msra.mxu0 0.0
  %165 = vmatprep.subr.mxu0 0.0
  %166 = vmatpush2.msra.mxu0 0.0
  %167 = vmatprep.mubr.f32.mxu0 0.0
  %168 = vmatmul.mubr.f32.gmra.mxu0 %v92
  %v169 = vpop.f32.mrf.mxu0
  %v170 = vadd.f32 %v88, %v169
  %v171 = vpop.f32.mrf.mxu0
  %172 = vmatprep.mubr.f32.mxu0 0.0
  %173 = vmatmul.mubr.f32.gmra.mxu0 %v95
  %v174 = vpop.f32.mrf.mxu0
  %v175 = vadd.f32 %v88, %v174
  %v176 = vpop.f32.mrf.mxu0
  %177 = vmatprep.mubr.f32.mxu0 0.0
  %178 = vmatmul.mubr.f32.gmra.mxu0 %v98
  %v179 = vpop.f32.mrf.mxu0
  %v180 = vadd.f32 %v88, %v179
  %v181 = vpop.f32.mrf.mxu0
  %182 = vmatprep.mubr.f32.mxu0 0.0
  %183 = vmatmul.mubr.f32.gmra.mxu0 %v101
  %v184 = vpop.f32.mrf.mxu0
  %v185 = vadd.f32 %v88, %v184
  %v186 = vpop.f32.mrf.mxu0
  %187 = vdwg.mxu0
  %v188 = vld [vmem:[%s7] sm:$0x1]
  %v189 = vld [vmem:[%s8] sm:$0x1]
  %v190 = vld [vmem:[%s9] sm:$0x1]
  %vm191 = vcmask 261120
  %v193 = vsel %vm191, %v47, 0
  %v196 = vsel %vm191, %v48, 0
  %v199 = vsel %vm191, %v49, 0
  %v202 = vsel %vm191, %v50, 0
  %204 = vmatprep.subr.mxu0 0.0
  %205 = vmatpush1.msra.mxu0 0.0
  %206 = vmatprep.subr.mxu0 0.0
  %207 = vmatpush1.msra.mxu0 0.0
  %208 = vmatprep.subr.mxu0 0.0
  %209 = vmatpush1.msra.mxu0 0.0
  %210 = vmatprep.subr.mxu0 0.0
  %211 = vmatpush1.msra.mxu0 0.0
  %212 = vmatprep.subr.mxu0 0.0
  %213 = vmatpush1.msra.mxu0 0.0
  %214 = vmatprep.subr.mxu0 0.0
  %215 = vmatpush1.msra.mxu0 0.0
  %216 = vmatprep.subr.mxu0 0.0
  %217 = vmatpush1.msra.mxu0 0.0
  %218 = vmatprep.subr.mxu0 0.0
  %219 = vmatpush1.msra.mxu0 0.0
  %220 = vmatprep.subr.mxu0 0.0
  %221 = vmatpush1.msra.mxu0 0.0
  %222 = vmatprep.subr.mxu0 0.0
  %223 = vmatpush1.msra.mxu0 0.0
  %224 = vmatprep.subr.mxu0 0.0
  %225 = vmatpush1.msra.mxu0 0.0
  %226 = vmatprep.subr.mxu0 0.0
  %227 = vmatpush1.msra.mxu0 0.0
  %228 = vmatprep.subr.mxu0 0.0
  %229 = vmatpush1.msra.mxu0 %v185
  %230 = vmatprep.subr.mxu0 0.0
  %231 = vmatpush1.msra.mxu0 %v180
  %232 = vmatprep.subr.mxu0 0.0
  %233 = vmatpush1.msra.mxu0 %v175
  %234 = vmatprep.subr.mxu0 0.0
  %235 = vmatpush1.msra.mxu0 %v170
  %236 = vmatprep.subr.mxu0 0.0
  %237 = vmatpush2.msra.mxu0 0.0
  %238 = vmatprep.subr.mxu0 0.0
  %239 = vmatpush2.msra.mxu0 0.0
  %240 = vmatprep.subr.mxu0 0.0
  %241 = vmatpush2.msra.mxu0 0.0
  %242 = vmatprep.subr.mxu0 0.0
  %243 = vmatpush2.msra.mxu0 0.0
  %244 = vmatprep.subr.mxu0 0.0
  %245 = vmatpush2.msra.mxu0 0.0
  %246 = vmatprep.subr.mxu0 0.0
  %247 = vmatpush2.msra.mxu0 0.0
  %248 = vmatprep.subr.mxu0 0.0
  %249 = vmatpush2.msra.mxu0 0.0
  %250 = vmatprep.subr.mxu0 0.0
  %251 = vmatpush2.msra.mxu0 0.0
  %252 = vmatprep.subr.mxu0 0.0
  %253 = vmatpush2.msra.mxu0 0.0
  %254 = vmatprep.subr.mxu0 0.0
  %255 = vmatpush2.msra.mxu0 0.0
  %256 = vmatprep.subr.mxu0 0.0
  %257 = vmatpush2.msra.mxu0 0.0
  %258 = vmatprep.subr.mxu0 0.0
  %259 = vmatpush2.msra.mxu0 0.0
  %260 = vmatprep.subr.mxu0 0.0
  %261 = vmatpush2.msra.mxu0 0.0
  %262 = vmatprep.subr.mxu0 0.0
  %263 = vmatpush2.msra.mxu0 0.0
  %264 = vmatprep.subr.mxu0 0.0
  %265 = vmatpush2.msra.mxu0 0.0
  %266 = vmatprep.subr.mxu0 0.0
  %267 = vmatpush2.msra.mxu0 0.0
  %268 = vmatprep.mubr.f32.mxu0 0.0
  %269 = vmatmul.mubr.f32.gmra.mxu0 %v193
  %v270 = vpop.f32.mrf.mxu0
  %v271 = vadd.f32 0.0, %v270
  %v272 = vpop.f32.mrf.mxu0
  %273 = vmatprep.mubr.f32.mxu0 0.0
  %274 = vmatmul.mubr.f32.gmra.mxu0 %v196
  %v275 = vpop.f32.mrf.mxu0
  %v276 = vadd.f32 0.0, %v275
  %v277 = vpop.f32.mrf.mxu0
  %278 = vmatprep.mubr.f32.mxu0 0.0
  %279 = vmatmul.mubr.f32.gmra.mxu0 %v199
  %v280 = vpop.f32.mrf.mxu0
  %v281 = vadd.f32 0.0, %v280
  %v282 = vpop.f32.mrf.mxu0
  %283 = vmatprep.mubr.f32.mxu0 0.0
  %284 = vmatmul.mubr.f32.gmra.mxu0 %v202
  %v285 = vpop.f32.mrf.mxu0
  %v286 = vadd.f32 0.0, %v285
  %v287 = vpop.f32.mrf.mxu0
  %288 = vdwg.mxu0
  %v290 = vsel %vm191, %v51, 0
  %v293 = vsel %vm191, %v52, 0
  %v296 = vsel %vm191, %v53, 0
  %v299 = vsel %vm191, %v54, 0
  %301 = vmatprep.subr.mxu0 0.0
  %302 = vmatpush1.msra.mxu0 0.0
  %303 = vmatprep.subr.mxu0 0.0
  %304 = vmatpush1.msra.mxu0 0.0
  %305 = vmatprep.subr.mxu0 0.0
  %306 = vmatpush1.msra.mxu0 0.0
  %307 = vmatprep.subr.mxu0 0.0
  %308 = vmatpush1.msra.mxu0 0.0
  %309 = vmatprep.subr.mxu0 0.0
  %310 = vmatpush1.msra.mxu0 0.0
  %311 = vmatprep.subr.mxu0 0.0
  %312 = vmatpush1.msra.mxu0 0.0
  %313 = vmatprep.subr.mxu0 0.0
  %314 = vmatpush1.msra.mxu0 0.0
  %315 = vmatprep.subr.mxu0 0.0
  %316 = vmatpush1.msra.mxu0 0.0
  %317 = vmatprep.subr.mxu0 0.0
  %318 = vmatpush1.msra.mxu0 0.0
  %319 = vmatprep.subr.mxu0 0.0
  %320 = vmatpush1.msra.mxu0 0.0
  %321 = vmatprep.subr.mxu0 0.0
  %322 = vmatpush1.msra.mxu0 0.0
  %323 = vmatprep.subr.mxu0 0.0
  %324 = vmatpush1.msra.mxu0 0.0
  %325 = vmatprep.subr.mxu0 0.0
  %326 = vmatpush1.msra.mxu0 %v185
  %327 = vmatprep.subr.mxu0 0.0
  %328 = vmatpush1.msra.mxu0 %v180
  %329 = vmatprep.subr.mxu0 0.0
  %330 = vmatpush1.msra.mxu0 %v175
  %331 = vmatprep.subr.mxu0 0.0
  %332 = vmatpush1.msra.mxu0 %v170
  %333 = vmatprep.subr.mxu0 0.0
  %334 = vmatpush2.msra.mxu0 0.0
  %335 = vmatprep.subr.mxu0 0.0
  %336 = vmatpush2.msra.mxu0 0.0
  %337 = vmatprep.subr.mxu0 0.0
  %338 = vmatpush2.msra.mxu0 0.0
  %339 = vmatprep.subr.mxu0 0.0
  %340 = vmatpush2.msra.mxu0 0.0
  %341 = vmatprep.subr.mxu0 0.0
  %342 = vmatpush2.msra.mxu0 0.0
  %343 = vmatprep.subr.mxu0 0.0
  %344 = vmatpush2.msra.mxu0 0.0
  %345 = vmatprep.subr.mxu0 0.0
  %346 = vmatpush2.msra.mxu0 0.0
  %347 = vmatprep.subr.mxu0 0.0
  %348 = vmatpush2.msra.mxu0 0.0
  %349 = vmatprep.subr.mxu0 0.0
  %350 = vmatpush2.msra.mxu0 0.0
  %351 = vmatprep.subr.mxu0 0.0
  %352 = vmatpush2.msra.mxu0 0.0
  %353 = vmatprep.subr.mxu0 0.0
  %354 = vmatpush2.msra.mxu0 0.0
  %355 = vmatprep.subr.mxu0 0.0
  %356 = vmatpush2.msra.mxu0 0.0
  %357 = vmatprep.subr.mxu0 0.0
  %358 = vmatpush2.msra.mxu0 0.0
  %359 = vmatprep.subr.mxu0 0.0
  %360 = vmatpush2.msra.mxu0 0.0
  %361 = vmatprep.subr.mxu0 0.0
  %362 = vmatpush2.msra.mxu0 0.0
  %363 = vmatprep.subr.mxu0 0.0
  %364 = vmatpush2.msra.mxu0 0.0
  %365 = vmatprep.mubr.f32.mxu0 0.0
  %366 = vmatmul.mubr.f32.gmra.mxu0 %v290
  %v367 = vpop.f32.mrf.mxu0
  %v368 = vadd.f32 0.0, %v367
  %v369 = vpop.f32.mrf.mxu0
  %370 = vmatprep.mubr.f32.mxu0 0.0
  %371 = vmatmul.mubr.f32.gmra.mxu0 %v293
  %v372 = vpop.f32.mrf.mxu0
  %v373 = vadd.f32 0.0, %v372
  %v374 = vpop.f32.mrf.mxu0
  %375 = vmatprep.mubr.f32.mxu0 0.0
  %376 = vmatmul.mubr.f32.gmra.mxu0 %v296
  %v377 = vpop.f32.mrf.mxu0
  %v378 = vadd.f32 0.0, %v377
  %v379 = vpop.f32.mrf.mxu0
  %380 = vmatprep.mubr.f32.mxu0 0.0
  %381 = vmatmul.mubr.f32.gmra.mxu0 %v299
  %v382 = vpop.f32.mrf.mxu0
  %v383 = vadd.f32 0.0, %v382
  %v384 = vpop.f32.mrf.mxu0
  %385 = vdwg.mxu0
  %v386 = vld [vmem:[%s6] sm:$0xff]
  %v387 = vld [vmem:[%s6 + $0x8] sm:$0xff]
  %v388 = vld [vmem:[%s6 + $0x10] sm:$0xff]
  %v389 = vld [vmem:[%s6 + $0x18] sm:$0xff]
  %v390 = vld [vmem:[%s6 + $0x20] sm:$0xff]
  %v391 = vld [vmem:[%s6 + $0x28] sm:$0xff]
  %v392 = vld [vmem:[%s6 + $0x30] sm:$0xff]
  %v393 = vld [vmem:[%s6 + $0x38] sm:$0xff]
  %v394 = vld [vmem:[%s6 + $0x40] sm:$0xff]
  %v395 = vld [vmem:[%s6 + $0x48] sm:$0xff]
  %v396 = vld [vmem:[%s6 + $0x50] sm:$0xff]
  %v397 = vld [vmem:[%s6 + $0x58] sm:$0xff]
  %v398 = vld [vmem:[%s6 + $0x60] sm:$0xff]
  %v399 = vld [vmem:[%s6 + $0x68] sm:$0xff]
  %v400 = vld [vmem:[%s6 + $0x70] sm:$0xff]
  %v401 = vld [vmem:[%s6 + $0x78] sm:$0xff]
  %s402 = scalar_lea.vmem %s6, 128
  %v403 = vld [vmem:[%s402] sm:$0xff]
  %v404 = vld [vmem:[%s402 + $0x8] sm:$0xff]
  %v405 = vld [vmem:[%s402 + $0x10] sm:$0xff]
  %v406 = vld [vmem:[%s402 + $0x18] sm:$0xff]
  %v407 = vld [vmem:[%s402 + $0x20] sm:$0xff]
  %v408 = vld [vmem:[%s402 + $0x28] sm:$0xff]
  %v409 = vld [vmem:[%s402 + $0x30] sm:$0xff]
  %v410 = vld [vmem:[%s402 + $0x38] sm:$0xff]
  %v411 = vld [vmem:[%s402 + $0x40] sm:$0xff]
  %v412 = vld [vmem:[%s402 + $0x48] sm:$0xff]
  %v413 = vld [vmem:[%s402 + $0x50] sm:$0xff]
  %v414 = vld [vmem:[%s402 + $0x58] sm:$0xff]
  %v415 = vld [vmem:[%s402 + $0x60] sm:$0xff]
  %v416 = vld [vmem:[%s402 + $0x68] sm:$0xff]
  %v417 = vld [vmem:[%s402 + $0x70] sm:$0xff]
  %v418 = vld [vmem:[%s402 + $0x78] sm:$0xff]
  %419 = vmatprep.subr.mxu0 0.0
  %420 = vmatpush1.msra.mxu0 %v418
  %421 = vmatprep.subr.mxu0 0.0
  %422 = vmatpush1.msra.mxu0 %v417
  %423 = vmatprep.subr.mxu0 0.0
  %424 = vmatpush1.msra.mxu0 %v416
  %425 = vmatprep.subr.mxu0 0.0
  %426 = vmatpush1.msra.mxu0 %v415
  %427 = vmatprep.subr.mxu0 0.0
  %428 = vmatpush1.msra.mxu0 %v414
  %429 = vmatprep.subr.mxu0 0.0
  %430 = vmatpush1.msra.mxu0 %v413
  %431 = vmatprep.subr.mxu0 0.0
  %432 = vmatpush1.msra.mxu0 %v412
  %433 = vmatprep.subr.mxu0 0.0
  %434 = vmatpush1.msra.mxu0 %v411
  %435 = vmatprep.subr.mxu0 0.0
  %436 = vmatpush1.msra.mxu0 %v410
  %437 = vmatprep.subr.mxu0 0.0
  %438 = vmatpush1.msra.mxu0 %v409
  %439 = vmatprep.subr.mxu0 0.0
  %440 = vmatpush1.msra.mxu0 %v408
  %441 = vmatprep.subr.mxu0 0.0
  %442 = vmatpush1.msra.mxu0 %v407
  %443 = vmatprep.subr.mxu0 0.0
  %444 = vmatpush1.msra.mxu0 %v406
  %445 = vmatprep.subr.mxu0 0.0
  %446 = vmatpush1.msra.mxu0 %v405
  %447 = vmatprep.subr.mxu0 0.0
  %448 = vmatpush1.msra.mxu0 %v404
  %449 = vmatprep.subr.mxu0 0.0
  %450 = vmatpush1.msra.mxu0 %v403
  %451 = vmatprep.subr.mxu0 0.0
  %452 = vmatpush2.msra.mxu0 0.0
  %453 = vmatprep.subr.mxu0 0.0
  %454 = vmatpush2.msra.mxu0 0.0
  %455 = vmatprep.subr.mxu0 0.0
  %456 = vmatpush2.msra.mxu0 0.0
  %457 = vmatprep.subr.mxu0 0.0
  %458 = vmatpush2.msra.mxu0 0.0
  %459 = vmatprep.subr.mxu0 0.0
  %460 = vmatpush2.msra.mxu0 0.0
  %461 = vmatprep.subr.mxu0 0.0
  %462 = vmatpush2.msra.mxu0 0.0
  %463 = vmatprep.subr.mxu0 0.0
  %464 = vmatpush2.msra.mxu0 0.0
  %465 = vmatprep.subr.mxu0 0.0
  %466 = vmatpush2.msra.mxu0 0.0
  %467 = vmatprep.subr.mxu0 0.0
  %468 = vmatpush2.msra.mxu0 0.0
  %469 = vmatprep.subr.mxu0 0.0
  %470 = vmatpush2.msra.mxu0 0.0
  %471 = vmatprep.subr.mxu0 0.0
  %472 = vmatpush2.msra.mxu0 0.0
  %473 = vmatprep.subr.mxu0 0.0
  %474 = vmatpush2.msra.mxu0 0.0
  %475 = vmatprep.subr.mxu0 0.0
  %476 = vmatpush2.msra.mxu0 0.0
  %477 = vmatprep.subr.mxu0 0.0
  %478 = vmatpush2.msra.mxu0 0.0
  %479 = vmatprep.subr.mxu0 0.0
  %480 = vmatpush2.msra.mxu0 0.0
  %481 = vmatprep.subr.mxu0 0.0
  %482 = vmatpush2.msra.mxu0 0.0
  %483 = vmatprep.mubr.f32.mxu0 0.0
  %484 = vmatmul.mubr.f32.gmra.mxu0 %v170
  %v485 = vpop.f32.mrf.mxu0
  %v486 = vadd.f32 0.0, %v485
  %v487 = vpop.f32.mrf.mxu0
  %488 = vmatprep.mubr.f32.mxu0 0.0
  %489 = vmatmul.mubr.f32.gmra.mxu0 %v175
  %v490 = vpop.f32.mrf.mxu0
  %v491 = vadd.f32 0.0, %v490
  %v492 = vpop.f32.mrf.mxu0
  %493 = vmatprep.mubr.f32.mxu0 0.0
  %494 = vmatmul.mubr.f32.gmra.mxu0 %v180
  %v495 = vpop.f32.mrf.mxu0
  %v496 = vadd.f32 0.0, %v495
  %v497 = vpop.f32.mrf.mxu0
  %498 = vmatprep.mubr.f32.mxu0 0.0
  %499 = vmatmul.mubr.f32.gmra.mxu0 %v185
  %v500 = vpop.f32.mrf.mxu0
  %v501 = vadd.f32 0.0, %v500
  %v502 = vpop.f32.mrf.mxu0
  %503 = vdwg.mxu0
  %504 = vmatprep.subr.mxu0 0.0
  %505 = vmatpush1.msra.mxu0 %v401
  %506 = vmatprep.subr.mxu0 0.0
  %507 = vmatpush1.msra.mxu0 %v400
  %508 = vmatprep.subr.mxu0 0.0
  %509 = vmatpush1.msra.mxu0 %v399
  %510 = vmatprep.subr.mxu0 0.0
  %511 = vmatpush1.msra.mxu0 %v398
  %512 = vmatprep.subr.mxu0 0.0
  %513 = vmatpush1.msra.mxu0 %v397
  %514 = vmatprep.subr.mxu0 0.0
  %515 = vmatpush1.msra.mxu0 %v396
  %516 = vmatprep.subr.mxu0 0.0
  %517 = vmatpush1.msra.mxu0 %v395
  %518 = vmatprep.subr.mxu0 0.0
  %519 = vmatpush1.msra.mxu0 %v394
  %520 = vmatprep.subr.mxu0 0.0
  %521 = vmatpush1.msra.mxu0 %v393
  %522 = vmatprep.subr.mxu0 0.0
  %523 = vmatpush1.msra.mxu0 %v392
  %524 = vmatprep.subr.mxu0 0.0
  %525 = vmatpush1.msra.mxu0 %v391
  %526 = vmatprep.subr.mxu0 0.0
  %527 = vmatpush1.msra.mxu0 %v390
  %528 = vmatprep.subr.mxu0 0.0
  %529 = vmatpush1.msra.mxu0 %v389
  %530 = vmatprep.subr.mxu0 0.0
  %531 = vmatpush1.msra.mxu0 %v388
  %532 = vmatprep.subr.mxu0 0.0
  %533 = vmatpush1.msra.mxu0 %v387
  %534 = vmatprep.subr.mxu0 0.0
  %535 = vmatpush1.msra.mxu0 %v386
  %536 = vmatprep.subr.mxu0 0.0
  %537 = vmatpush2.msra.mxu0 0.0
  %538 = vmatprep.subr.mxu0 0.0
  %539 = vmatpush2.msra.mxu0 0.0
  %540 = vmatprep.subr.mxu0 0.0
  %541 = vmatpush2.msra.mxu0 0.0
  %542 = vmatprep.subr.mxu0 0.0
  %543 = vmatpush2.msra.mxu0 0.0
  %544 = vmatprep.subr.mxu0 0.0
  %545 = vmatpush2.msra.mxu0 0.0
  %546 = vmatprep.subr.mxu0 0.0
  %547 = vmatpush2.msra.mxu0 0.0
  %548 = vmatprep.subr.mxu0 0.0
  %549 = vmatpush2.msra.mxu0 0.0
  %550 = vmatprep.subr.mxu0 0.0
  %551 = vmatpush2.msra.mxu0 0.0
  %552 = vmatprep.subr.mxu0 0.0
  %553 = vmatpush2.msra.mxu0 0.0
  %554 = vmatprep.subr.mxu0 0.0
  %555 = vmatpush2.msra.mxu0 0.0
  %556 = vmatprep.subr.mxu0 0.0
  %557 = vmatpush2.msra.mxu0 0.0
  %558 = vmatprep.subr.mxu0 0.0
  %559 = vmatpush2.msra.mxu0 0.0
  %560 = vmatprep.subr.mxu0 0.0
  %561 = vmatpush2.msra.mxu0 0.0
  %562 = vmatprep.subr.mxu0 0.0
  %563 = vmatpush2.msra.mxu0 0.0
  %564 = vmatprep.subr.mxu0 0.0
  %565 = vmatpush2.msra.mxu0 0.0
  %566 = vmatprep.subr.mxu0 0.0
  %567 = vmatpush2.msra.mxu0 0.0
  %568 = vmatprep.mubr.f32.mxu0 0.0
  %569 = vmatmul.mubr.f32.gmra.mxu0 %v271
  %v570 = vpop.f32.mrf.mxu0
  %v571 = vadd.f32 %v486, %v570
  %v572 = vpop.f32.mrf.mxu0
  %573 = vmatprep.mubr.f32.mxu0 0.0
  %574 = vmatmul.mubr.f32.gmra.mxu0 %v276
  %v575 = vpop.f32.mrf.mxu0
  %v576 = vadd.f32 %v491, %v575
  %v577 = vpop.f32.mrf.mxu0
  %578 = vmatprep.mubr.f32.mxu0 0.0
  %579 = vmatmul.mubr.f32.gmra.mxu0 %v281
  %v580 = vpop.f32.mrf.mxu0
  %v581 = vadd.f32 %v496, %v580
  %v582 = vpop.f32.mrf.mxu0
  %583 = vmatprep.mubr.f32.mxu0 0.0
  %584 = vmatmul.mubr.f32.gmra.mxu0 %v286
  %v585 = vpop.f32.mrf.mxu0
  %v586 = vadd.f32 %v501, %v585
  %v587 = vpop.f32.mrf.mxu0
  %588 = vdwg.mxu0
  %s589 = scalar_lea.vmem %s6, 256
  %v590 = vld [vmem:[%s589] sm:$0xff]
  %v591 = vld [vmem:[%s589 + $0x8] sm:$0xff]
  %v592 = vld [vmem:[%s589 + $0x10] sm:$0xff]
  %v593 = vld [vmem:[%s589 + $0x18] sm:$0xff]
  %v594 = vld [vmem:[%s589 + $0x20] sm:$0xff]
  %v595 = vld [vmem:[%s589 + $0x28] sm:$0xff]
  %v596 = vld [vmem:[%s589 + $0x30] sm:$0xff]
  %v597 = vld [vmem:[%s589 + $0x38] sm:$0xff]
  %v598 = vld [vmem:[%s589 + $0x40] sm:$0xff]
  %v599 = vld [vmem:[%s589 + $0x48] sm:$0xff]
  %v600 = vld [vmem:[%s589 + $0x50] sm:$0xff]
  %v601 = vld [vmem:[%s589 + $0x58] sm:$0xff]
  %v602 = vld [vmem:[%s589 + $0x60] sm:$0xff]
  %v603 = vld [vmem:[%s589 + $0x68] sm:$0xff]
  %v604 = vld [vmem:[%s589 + $0x70] sm:$0xff]
  %v605 = vld [vmem:[%s589 + $0x78] sm:$0xff]
  %606 = vmatprep.subr.mxu0 0.0
  %607 = vmatpush1.msra.mxu0 %v605
  %608 = vmatprep.subr.mxu0 0.0
  %609 = vmatpush1.msra.mxu0 %v604
  %610 = vmatprep.subr.mxu0 0.0
  %611 = vmatpush1.msra.mxu0 %v603
  %612 = vmatprep.subr.mxu0 0.0
  %613 = vmatpush1.msra.mxu0 %v602
  %614 = vmatprep.subr.mxu0 0.0
  %615 = vmatpush1.msra.mxu0 %v601
  %616 = vmatprep.subr.mxu0 0.0
  %617 = vmatpush1.msra.mxu0 %v600
  %618 = vmatprep.subr.mxu0 0.0
  %619 = vmatpush1.msra.mxu0 %v599
  %620 = vmatprep.subr.mxu0 0.0
  %621 = vmatpush1.msra.mxu0 %v598
  %622 = vmatprep.subr.mxu0 0.0
  %623 = vmatpush1.msra.mxu0 %v597
  %624 = vmatprep.subr.mxu0 0.0
  %625 = vmatpush1.msra.mxu0 %v596
  %626 = vmatprep.subr.mxu0 0.0
  %627 = vmatpush1.msra.mxu0 %v595
  %628 = vmatprep.subr.mxu0 0.0
  %629 = vmatpush1.msra.mxu0 %v594
  %630 = vmatprep.subr.mxu0 0.0
  %631 = vmatpush1.msra.mxu0 %v593
  %632 = vmatprep.subr.mxu0 0.0
  %633 = vmatpush1.msra.mxu0 %v592
  %634 = vmatprep.subr.mxu0 0.0
  %635 = vmatpush1.msra.mxu0 %v591
  %636 = vmatprep.subr.mxu0 0.0
  %637 = vmatpush1.msra.mxu0 %v590
  %638 = vmatprep.subr.mxu0 0.0
  %639 = vmatpush2.msra.mxu0 0.0
  %640 = vmatprep.subr.mxu0 0.0
  %641 = vmatpush2.msra.mxu0 0.0
  %642 = vmatprep.subr.mxu0 0.0
  %643 = vmatpush2.msra.mxu0 0.0
  %644 = vmatprep.subr.mxu0 0.0
  %645 = vmatpush2.msra.mxu0 0.0
  %646 = vmatprep.subr.mxu0 0.0
  %647 = vmatpush2.msra.mxu0 0.0
  %648 = vmatprep.subr.mxu0 0.0
  %649 = vmatpush2.msra.mxu0 0.0
  %650 = vmatprep.subr.mxu0 0.0
  %651 = vmatpush2.msra.mxu0 0.0
  %652 = vmatprep.subr.mxu0 0.0
  %653 = vmatpush2.msra.mxu0 0.0
  %654 = vmatprep.subr.mxu0 0.0
  %655 = vmatpush2.msra.mxu0 0.0
  %656 = vmatprep.subr.mxu0 0.0
  %657 = vmatpush2.msra.mxu0 0.0
  %658 = vmatprep.subr.mxu0 0.0
  %659 = vmatpush2.msra.mxu0 0.0
  %660 = vmatprep.subr.mxu0 0.0
  %661 = vmatpush2.msra.mxu0 0.0
  %662 = vmatprep.subr.mxu0 0.0
  %663 = vmatpush2.msra.mxu0 0.0
  %664 = vmatprep.subr.mxu0 0.0
  %665 = vmatpush2.msra.mxu0 0.0
  %666 = vmatprep.subr.mxu0 0.0
  %667 = vmatpush2.msra.mxu0 0.0
  %668 = vmatprep.subr.mxu0 0.0
  %669 = vmatpush2.msra.mxu0 0.0
  %670 = vmatprep.mubr.f32.mxu0 0.0
  %671 = vmatmul.mubr.f32.gmra.mxu0 %v368
  %v672 = vpop.f32.mrf.mxu0
  %v673 = vadd.f32 0.0, %v672
  %v674 = vpop.f32.mrf.mxu0
  %675 = vmatprep.mubr.f32.mxu0 0.0
  %676 = vmatmul.mubr.f32.gmra.mxu0 %v373
  %v677 = vpop.f32.mrf.mxu0
  %v678 = vadd.f32 0.0, %v677
  %v679 = vpop.f32.mrf.mxu0
  %680 = vmatprep.mubr.f32.mxu0 0.0
  %681 = vmatmul.mubr.f32.gmra.mxu0 %v378
  %v682 = vpop.f32.mrf.mxu0
  %v683 = vadd.f32 0.0, %v682
  %v684 = vpop.f32.mrf.mxu0
  %685 = vmatprep.mubr.f32.mxu0 0.0
  %686 = vmatmul.mubr.f32.gmra.mxu0 %v383
  %v687 = vpop.f32.mrf.mxu0
  %v688 = vadd.f32 0.0, %v687
  %v689 = vpop.f32.mrf.mxu0
  %690 = vdwg.mxu0
  %v691 = vadd.f32 %v571, %v673
  %v692 = vadd.f32 %v576, %v678
  %v693 = vadd.f32 %v581, %v683
  %v694 = vadd.f32 %v586, %v688
  %v696 = vlaneseq
  %v697 = vshrl.u32 %v696, 7
  %v698 = vsub.s32 0, %v697
  %v699 = vrot.slane %v188, %v698
  %v701 = vadd.f32 %v691, %v699
  %v702 = vadd.f32 %v692, %v699
  %v703 = vadd.f32 %v693, %v699
  %v704 = vadd.f32 %v694, %v699
  %705 = vmatprep.subr.mxu0 0.0
  %706 = vmatpush1.msra.mxu0 %v70
  %707 = vmatprep.subr.mxu0 0.0
  %708 = vmatpush1.msra.mxu0 %v69
  %709 = vmatprep.subr.mxu0 0.0
  %710 = vmatpush1.msra.mxu0 %v68
  %711 = vmatprep.subr.mxu0 0.0
  %712 = vmatpush1.msra.mxu0 %v67
  %713 = vmatprep.subr.mxu0 0.0
  %714 = vmatpush1.msra.mxu0 %v66
  %715 = vmatprep.subr.mxu0 0.0
  %716 = vmatpush1.msra.mxu0 %v65
  %717 = vmatprep.subr.mxu0 0.0
  %718 = vmatpush1.msra.mxu0 %v64
  %719 = vmatprep.subr.mxu0 0.0
  %720 = vmatpush1.msra.mxu0 %v63
  %721 = vmatprep.subr.mxu0 0.0
  %722 = vmatpush1.msra.mxu0 %v62
  %723 = vmatprep.subr.mxu0 0.0
  %724 = vmatpush1.msra.mxu0 %v61
  %725 = vmatprep.subr.mxu0 0.0
  %726 = vmatpush1.msra.mxu0 %v60
  %727 = vmatprep.subr.mxu0 0.0
  %728 = vmatpush1.msra.mxu0 %v59
  %729 = vmatprep.subr.mxu0 0.0
  %730 = vmatpush1.msra.mxu0 %v58
  %731 = vmatprep.subr.mxu0 0.0
  %732 = vmatpush1.msra.mxu0 %v57
  %733 = vmatprep.subr.mxu0 0.0
  %734 = vmatpush1.msra.mxu0 %v56
  %735 = vmatprep.subr.mxu0 0.0
  %736 = vmatpush1.msra.mxu0 %v55
  %737 = vmatprep.subr.mxu0 0.0
  %738 = vmatpush2.msra.mxu0 0.0
  %739 = vmatprep.subr.mxu0 0.0
  %740 = vmatpush2.msra.mxu0 0.0
  %741 = vmatprep.subr.mxu0 0.0
  %742 = vmatpush2.msra.mxu0 0.0
  %743 = vmatprep.subr.mxu0 0.0
  %744 = vmatpush2.msra.mxu0 0.0
  %745 = vmatprep.subr.mxu0 0.0
  %746 = vmatpush2.msra.mxu0 0.0
  %747 = vmatprep.subr.mxu0 0.0
  %748 = vmatpush2.msra.mxu0 0.0
  %749 = vmatprep.subr.mxu0 0.0
  %750 = vmatpush2.msra.mxu0 0.0
  %751 = vmatprep.subr.mxu0 0.0
  %752 = vmatpush2.msra.mxu0 0.0
  %753 = vmatprep.subr.mxu0 0.0
  %754 = vmatpush2.msra.mxu0 0.0
  %755 = vmatprep.subr.mxu0 0.0
  %756 = vmatpush2.msra.mxu0 0.0
  %757 = vmatprep.subr.mxu0 0.0
  %758 = vmatpush2.msra.mxu0 0.0
  %759 = vmatprep.subr.mxu0 0.0
  %760 = vmatpush2.msra.mxu0 0.0
  %761 = vmatprep.subr.mxu0 0.0
  %762 = vmatpush2.msra.mxu0 0.0
  %763 = vmatprep.subr.mxu0 0.0
  %764 = vmatpush2.msra.mxu0 0.0
  %765 = vmatprep.subr.mxu0 0.0
  %766 = vmatpush2.msra.mxu0 0.0
  %767 = vmatprep.subr.mxu0 0.0
  %768 = vmatpush2.msra.mxu0 0.0
  %769 = vmatprep.mubr.f32.mxu0 0.0
  %770 = vmatmul.mubr.f32.gmra.mxu0 %v701
  %v771 = vpop.f32.mrf.mxu0
  %v772 = vadd.f32 0.0, %v771
  %v773 = vpop.f32.mrf.mxu0
  %774 = vmatprep.mubr.f32.mxu0 0.0
  %775 = vmatmul.mubr.f32.gmra.mxu0 %v702
  %v776 = vpop.f32.mrf.mxu0
  %v777 = vadd.f32 0.0, %v776
  %v778 = vpop.f32.mrf.mxu0
  %779 = vmatprep.mubr.f32.mxu0 0.0
  %780 = vmatmul.mubr.f32.gmra.mxu0 %v703
  %v781 = vpop.f32.mrf.mxu0
  %v782 = vadd.f32 0.0, %v781
  %v783 = vpop.f32.mrf.mxu0
  %784 = vmatprep.mubr.f32.mxu0 0.0
  %785 = vmatmul.mubr.f32.gmra.mxu0 %v704
  %v786 = vpop.f32.mrf.mxu0
  %v787 = vadd.f32 0.0, %v786
  %v788 = vpop.f32.mrf.mxu0
  %789 = vdwg.mxu0
  %v790 = vadd.f32 %v772, %v777
  %v791 = vadd.f32 %v790, %v782
  %v792 = vadd.f32 %v791, %v787
  %v793 = vrot.slane %v792, 4
  %v794 = vadd.f32 %v792, %v793
  %v795 = vrot.slane %v794, 2
  %v796 = vadd.f32 %v794, %v795
  %v797 = vrot.slane %v796, 1
  %v798 = vadd.f32 %v796, %v797
  %v799 = vmul.f32 %v701, %v701
  %v800 = vmul.f32 %v702, %v702
  %v801 = vmul.f32 %v703, %v703
  %v802 = vmul.f32 %v704, %v704
  %803 = vmatprep.subr.mxu0 0.0
  %804 = vmatpush1.msra.mxu0 %v70
  %805 = vmatprep.subr.mxu0 0.0
  %806 = vmatpush1.msra.mxu0 %v69
  %807 = vmatprep.subr.mxu0 0.0
  %808 = vmatpush1.msra.mxu0 %v68
  %809 = vmatprep.subr.mxu0 0.0
  %810 = vmatpush1.msra.mxu0 %v67
  %811 = vmatprep.subr.mxu0 0.0
  %812 = vmatpush1.msra.mxu0 %v66
  %813 = vmatprep.subr.mxu0 0.0
  %814 = vmatpush1.msra.mxu0 %v65
  %815 = vmatprep.subr.mxu0 0.0
  %816 = vmatpush1.msra.mxu0 %v64
  %817 = vmatprep.subr.mxu0 0.0
  %818 = vmatpush1.msra.mxu0 %v63
  %819 = vmatprep.subr.mxu0 0.0
  %820 = vmatpush1.msra.mxu0 %v62
  %821 = vmatprep.subr.mxu0 0.0
  %822 = vmatpush1.msra.mxu0 %v61
  %823 = vmatprep.subr.mxu0 0.0
  %824 = vmatpush1.msra.mxu0 %v60
  %825 = vmatprep.subr.mxu0 0.0
  %826 = vmatpush1.msra.mxu0 %v59
  %827 = vmatprep.subr.mxu0 0.0
  %828 = vmatpush1.msra.mxu0 %v58
  %829 = vmatprep.subr.mxu0 0.0
  %830 = vmatpush1.msra.mxu0 %v57
  %831 = vmatprep.subr.mxu0 0.0
  %832 = vmatpush1.msra.mxu0 %v56
  %833 = vmatprep.subr.mxu0 0.0
  %834 = vmatpush1.msra.mxu0 %v55
  %835 = vmatprep.subr.mxu0 0.0
  %836 = vmatpush2.msra.mxu0 0.0
  %837 = vmatprep.subr.mxu0 0.0
  %838 = vmatpush2.msra.mxu0 0.0
  %839 = vmatprep.subr.mxu0 0.0
  %840 = vmatpush2.msra.mxu0 0.0
  %841 = vmatprep.subr.mxu0 0.0
  %842 = vmatpush2.msra.mxu0 0.0
  %843 = vmatprep.subr.mxu0 0.0
  %844 = vmatpush2.msra.mxu0 0.0
  %845 = vmatprep.subr.mxu0 0.0
  %846 = vmatpush2.msra.mxu0 0.0
  %847 = vmatprep.subr.mxu0 0.0
  %848 = vmatpush2.msra.mxu0 0.0
  %849 = vmatprep.subr.mxu0 0.0
  %850 = vmatpush2.msra.mxu0 0.0
  %851 = vmatprep.subr.mxu0 0.0
  %852 = vmatpush2.msra.mxu0 0.0
  %853 = vmatprep.subr.mxu0 0.0
  %854 = vmatpush2.msra.mxu0 0.0
  %855 = vmatprep.subr.mxu0 0.0
  %856 = vmatpush2.msra.mxu0 0.0
  %857 = vmatprep.subr.mxu0 0.0
  %858 = vmatpush2.msra.mxu0 0.0
  %859 = vmatprep.subr.mxu0 0.0
  %860 = vmatpush2.msra.mxu0 0.0
  %861 = vmatprep.subr.mxu0 0.0
  %862 = vmatpush2.msra.mxu0 0.0
  %863 = vmatprep.subr.mxu0 0.0
  %864 = vmatpush2.msra.mxu0 0.0
  %865 = vmatprep.subr.mxu0 0.0
  %866 = vmatpush2.msra.mxu0 0.0
  %867 = vmatprep.mubr.f32.mxu0 0.0
  %868 = vmatmul.mubr.f32.gmra.mxu0 %v799
  %v869 = vpop.f32.mrf.mxu0
  %v870 = vadd.f32 0.0, %v869
  %v871 = vpop.f32.mrf.mxu0
  %872 = vmatprep.mubr.f32.mxu0 0.0
  %873 = vmatmul.mubr.f32.gmra.mxu0 %v800
  %v874 = vpop.f32.mrf.mxu0
  %v875 = vadd.f32 0.0, %v874
  %v876 = vpop.f32.mrf.mxu0
  %877 = vmatprep.mubr.f32.mxu0 0.0
  %878 = vmatmul.mubr.f32.gmra.mxu0 %v801
  %v879 = vpop.f32.mrf.mxu0
  %v880 = vadd.f32 0.0, %v879
  %v881 = vpop.f32.mrf.mxu0
  %882 = vmatprep.mubr.f32.mxu0 0.0
  %883 = vmatmul.mubr.f32.gmra.mxu0 %v802
  %v884 = vpop.f32.mrf.mxu0
  %v885 = vadd.f32 0.0, %v884
  %v886 = vpop.f32.mrf.mxu0
  %887 = vdwg.mxu0
  %v888 = vadd.f32 %v870, %v875
  %v889 = vadd.f32 %v888, %v880
  %v890 = vadd.f32 %v889, %v885
  %v891 = vrot.slane %v890, 4
  %v892 = vadd.f32 %v890, %v891
  %v893 = vrot.slane %v892, 2
  %v894 = vadd.f32 %v892, %v893
  %v895 = vrot.slane %v894, 1
  %v896 = vadd.f32 %v894, %v895
  %v897 = vmul.f32 %v798, 0.001953125
  %v898 = vmul.f32 %v896, 0.001953125
  %v899 = vmul.f32 %v897, %v897
  %v900 = vsub.f32 %v898, %v899
  %v901 = vadd.f32 %v900, 1e-05
  %v902 = vrsqrt.pop %v901
  %v903 = vmul.f32 %v902, %v189
  %v904 = vmul.f32 %v897, %v903
  %v905 = vsub.f32 %v190, %v904
  %v906 = vlaneseq
  %v907 = vshrl.u32 %v906, 7
  %v908 = vsub.s32 0, %v907
  %v909 = vrot.slane %v903, %v908
  %v910 = vmul.f32 %v701, %v909
  %v911 = vmul.f32 %v702, %v909
  %v912 = vmul.f32 %v703, %v909
  %v913 = vmul.f32 %v704, %v909
  %v915 = vlaneseq
  %v916 = vshrl.u32 %v915, 7
  %v917 = vsub.s32 0, %v916
  %v918 = vrot.slane %v905, %v917
  %v920 = vadd.f32 %v910, %v918
  %v921 = vadd.f32 %v911, %v918
  %v922 = vadd.f32 %v912, %v918
  %v923 = vadd.f32 %v913, %v918
  %v924 = vmax.f32 %v920, 0.0
  %v925 = vmax.f32 %v921, 0.0
  %v926 = vmax.f32 %v922, 0.0
  %v927 = vmax.f32 %v923, 0.0
  %v928 = vadd.f32 %v170, %v924
  %v929 = vadd.f32 %v175, %v925
  %v930 = vadd.f32 %v180, %v926
  %v931 = vadd.f32 %v185, %v927
  %932 = vmatprep.subr.mxu0 0.0
  %933 = vmatpush1.msra.mxu0 0.0
  %934 = vmatprep.subr.mxu0 0.0
  %935 = vmatpush1.msra.mxu0 0.0
  %936 = vmatprep.subr.mxu0 0.0
  %937 = vmatpush1.msra.mxu0 0.0
  %938 = vmatprep.subr.mxu0 0.0
  %939 = vmatpush1.msra.mxu0 0.0
  %940 = vmatprep.subr.mxu0 0.0
  %941 = vmatpush1.msra.mxu0 0.0
  %942 = vmatprep.subr.mxu0 0.0
  %943 = vmatpush1.msra.mxu0 0.0
  %944 = vmatprep.subr.mxu0 0.0
  %945 = vmatpush1.msra.mxu0 0.0
  %946 = vmatprep.subr.mxu0 0.0
  %947 = vmatpush1.msra.mxu0 0.0
  %948 = vmatprep.subr.mxu0 0.0
  %949 = vmatpush1.msra.mxu0 0.0
  %950 = vmatprep.subr.mxu0 0.0
  %951 = vmatpush1.msra.mxu0 0.0
  %952 = vmatprep.subr.mxu0 0.0
  %953 = vmatpush1.msra.mxu0 0.0
  %954 = vmatprep.subr.mxu0 0.0
  %955 = vmatpush1.msra.mxu0 0.0
  %956 = vmatprep.subr.mxu0 0.0
  %957 = vmatpush1.msra.mxu0 %v931
  %958 = vmatprep.subr.mxu0 0.0
  %959 = vmatpush1.msra.mxu0 %v930
  %960 = vmatprep.subr.mxu0 0.0
  %961 = vmatpush1.msra.mxu0 %v929
  %962 = vmatprep.subr.mxu0 0.0
  %963 = vmatpush1.msra.mxu0 %v928
  %964 = vmatprep.subr.mxu0 0.0
  %965 = vmatpush2.msra.mxu0 0.0
  %966 = vmatprep.subr.mxu0 0.0
  %967 = vmatpush2.msra.mxu0 0.0
  %968 = vmatprep.subr.mxu0 0.0
  %969 = vmatpush2.msra.mxu0 0.0
  %970 = vmatprep.subr.mxu0 0.0
  %971 = vmatpush2.msra.mxu0 0.0
  %972 = vmatprep.subr.mxu0 0.0
  %973 = vmatpush2.msra.mxu0 0.0
  %974 = vmatprep.subr.mxu0 0.0
  %975 = vmatpush2.msra.mxu0 0.0
  %976 = vmatprep.subr.mxu0 0.0
  %977 = vmatpush2.msra.mxu0 0.0
  %978 = vmatprep.subr.mxu0 0.0
  %979 = vmatpush2.msra.mxu0 0.0
  %980 = vmatprep.subr.mxu0 0.0
  %981 = vmatpush2.msra.mxu0 0.0
  %982 = vmatprep.subr.mxu0 0.0
  %983 = vmatpush2.msra.mxu0 0.0
  %984 = vmatprep.subr.mxu0 0.0
  %985 = vmatpush2.msra.mxu0 0.0
  %986 = vmatprep.subr.mxu0 0.0
  %987 = vmatpush2.msra.mxu0 0.0
  %988 = vmatprep.subr.mxu0 0.0
  %989 = vmatpush2.msra.mxu0 0.0
  %990 = vmatprep.subr.mxu0 0.0
  %991 = vmatpush2.msra.mxu0 0.0
  %992 = vmatprep.subr.mxu0 0.0
  %993 = vmatpush2.msra.mxu0 0.0
  %994 = vmatprep.subr.mxu0 0.0
  %995 = vmatpush2.msra.mxu0 0.0
  %996 = vmatprep.mubr.f32.mxu0 0.0
  %997 = vmatmul.mubr.f32.gmra.mxu0 %v193
  %v998 = vpop.f32.mrf.mxu0
  %v999 = vadd.f32 0.0, %v998
  %v1000 = vpop.f32.mrf.mxu0
  %1001 = vmatprep.mubr.f32.mxu0 0.0
  %1002 = vmatmul.mubr.f32.gmra.mxu0 %v196
  %v1003 = vpop.f32.mrf.mxu0
  %v1004 = vadd.f32 0.0, %v1003
  %v1005 = vpop.f32.mrf.mxu0
  %1006 = vmatprep.mubr.f32.mxu0 0.0
  %1007 = vmatmul.mubr.f32.gmra.mxu0 %v199
  %v1008 = vpop.f32.mrf.mxu0
  %v1009 = vadd.f32 0.0, %v1008
  %v1010 = vpop.f32.mrf.mxu0
  %1011 = vmatprep.mubr.f32.mxu0 0.0
  %1012 = vmatmul.mubr.f32.gmra.mxu0 %v202
  %v1013 = vpop.f32.mrf.mxu0
  %v1014 = vadd.f32 0.0, %v1013
  %v1015 = vpop.f32.mrf.mxu0
  %1016 = vdwg.mxu0
  %1017 = vmatprep.subr.mxu0 0.0
  %1018 = vmatpush1.msra.mxu0 0.0
  %1019 = vmatprep.subr.mxu0 0.0
  %1020 = vmatpush1.msra.mxu0 0.0
  %1021 = vmatprep.subr.mxu0 0.0
  %1022 = vmatpush1.msra.mxu0 0.0
  %1023 = vmatprep.subr.mxu0 0.0
  %1024 = vmatpush1.msra.mxu0 0.0
  %1025 = vmatprep.subr.mxu0 0.0
  %1026 = vmatpush1.msra.mxu0 0.0
  %1027 = vmatprep.subr.mxu0 0.0
  %1028 = vmatpush1.msra.mxu0 0.0
  %1029 = vmatprep.subr.mxu0 0.0
  %1030 = vmatpush1.msra.mxu0 0.0
  %1031 = vmatprep.subr.mxu0 0.0
  %1032 = vmatpush1.msra.mxu0 0.0
  %1033 = vmatprep.subr.mxu0 0.0
  %1034 = vmatpush1.msra.mxu0 0.0
  %1035 = vmatprep.subr.mxu0 0.0
  %1036 = vmatpush1.msra.mxu0 0.0
  %1037 = vmatprep.subr.mxu0 0.0
  %1038 = vmatpush1.msra.mxu0 0.0
  %1039 = vmatprep.subr.mxu0 0.0
  %1040 = vmatpush1.msra.mxu0 0.0
  %1041 = vmatprep.subr.mxu0 0.0
  %1042 = vmatpush1.msra.mxu0 %v931
  %1043 = vmatprep.subr.mxu0 0.0
  %1044 = vmatpush1.msra.mxu0 %v930
  %1045 = vmatprep.subr.mxu0 0.0
  %1046 = vmatpush1.msra.mxu0 %v929
  %1047 = vmatprep.subr.mxu0 0.0
  %1048 = vmatpush1.msra.mxu0 %v928
  %1049 = vmatprep.subr.mxu0 0.0
  %1050 = vmatpush2.msra.mxu0 0.0
  %1051 = vmatprep.subr.mxu0 0.0
  %1052 = vmatpush2.msra.mxu0 0.0
  %1053 = vmatprep.subr.mxu0 0.0
  %1054 = vmatpush2.msra.mxu0 0.0
  %1055 = vmatprep.subr.mxu0 0.0
  %1056 = vmatpush2.msra.mxu0 0.0
  %1057 = vmatprep.subr.mxu0 0.0
  %1058 = vmatpush2.msra.mxu0 0.0
  %1059 = vmatprep.subr.mxu0 0.0
  %1060 = vmatpush2.msra.mxu0 0.0
  %1061 = vmatprep.subr.mxu0 0.0
  %1062 = vmatpush2.msra.mxu0 0.0
  %1063 = vmatprep.subr.mxu0 0.0
  %1064 = vmatpush2.msra.mxu0 0.0
  %1065 = vmatprep.subr.mxu0 0.0
  %1066 = vmatpush2.msra.mxu0 0.0
  %1067 = vmatprep.subr.mxu0 0.0
  %1068 = vmatpush2.msra.mxu0 0.0
  %1069 = vmatprep.subr.mxu0 0.0
  %1070 = vmatpush2.msra.mxu0 0.0
  %1071 = vmatprep.subr.mxu0 0.0
  %1072 = vmatpush2.msra.mxu0 0.0
  %1073 = vmatprep.subr.mxu0 0.0
  %1074 = vmatpush2.msra.mxu0 0.0
  %1075 = vmatprep.subr.mxu0 0.0
  %1076 = vmatpush2.msra.mxu0 0.0
  %1077 = vmatprep.subr.mxu0 0.0
  %1078 = vmatpush2.msra.mxu0 0.0
  %1079 = vmatprep.subr.mxu0 0.0
  %1080 = vmatpush2.msra.mxu0 0.0
  %1081 = vmatprep.mubr.f32.mxu0 0.0
  %1082 = vmatmul.mubr.f32.gmra.mxu0 %v290
  %v1083 = vpop.f32.mrf.mxu0
  %v1084 = vadd.f32 0.0, %v1083
  %v1085 = vpop.f32.mrf.mxu0
  %1086 = vmatprep.mubr.f32.mxu0 0.0
  %1087 = vmatmul.mubr.f32.gmra.mxu0 %v293
  %v1088 = vpop.f32.mrf.mxu0
  %v1089 = vadd.f32 0.0, %v1088
  %v1090 = vpop.f32.mrf.mxu0
  %1091 = vmatprep.mubr.f32.mxu0 0.0
  %1092 = vmatmul.mubr.f32.gmra.mxu0 %v296
  %v1093 = vpop.f32.mrf.mxu0
  %v1094 = vadd.f32 0.0, %v1093
  %v1095 = vpop.f32.mrf.mxu0
  %1096 = vmatprep.mubr.f32.mxu0 0.0
  %1097 = vmatmul.mubr.f32.gmra.mxu0 %v299
  %v1098 = vpop.f32.mrf.mxu0
  %v1099 = vadd.f32 0.0, %v1098
  %v1100 = vpop.f32.mrf.mxu0
  %1101 = vdwg.mxu0
  %1102 = vmatprep.subr.mxu0 0.0
  %1103 = vmatpush1.msra.mxu0 %v418
  %1104 = vmatprep.subr.mxu0 0.0
  %1105 = vmatpush1.msra.mxu0 %v417
  %1106 = vmatprep.subr.mxu0 0.0
  %1107 = vmatpush1.msra.mxu0 %v416
  %1108 = vmatprep.subr.mxu0 0.0
  %1109 = vmatpush1.msra.mxu0 %v415
  %1110 = vmatprep.subr.mxu0 0.0
  %1111 = vmatpush1.msra.mxu0 %v414
  %1112 = vmatprep.subr.mxu0 0.0
  %1113 = vmatpush1.msra.mxu0 %v413
  %1114 = vmatprep.subr.mxu0 0.0
  %1115 = vmatpush1.msra.mxu0 %v412
  %1116 = vmatprep.subr.mxu0 0.0
  %1117 = vmatpush1.msra.mxu0 %v411
  %1118 = vmatprep.subr.mxu0 0.0
  %1119 = vmatpush1.msra.mxu0 %v410
  %1120 = vmatprep.subr.mxu0 0.0
  %1121 = vmatpush1.msra.mxu0 %v409
  %1122 = vmatprep.subr.mxu0 0.0
  %1123 = vmatpush1.msra.mxu0 %v408
  %1124 = vmatprep.subr.mxu0 0.0
  %1125 = vmatpush1.msra.mxu0 %v407
  %1126 = vmatprep.subr.mxu0 0.0
  %1127 = vmatpush1.msra.mxu0 %v406
  %1128 = vmatprep.subr.mxu0 0.0
  %1129 = vmatpush1.msra.mxu0 %v405
  %1130 = vmatprep.subr.mxu0 0.0
  %1131 = vmatpush1.msra.mxu0 %v404
  %1132 = vmatprep.subr.mxu0 0.0
  %1133 = vmatpush1.msra.mxu0 %v403
  %1134 = vmatprep.subr.mxu0 0.0
  %1135 = vmatpush2.msra.mxu0 0.0
  %1136 = vmatprep.subr.mxu0 0.0
  %1137 = vmatpush2.msra.mxu0 0.0
  %1138 = vmatprep.subr.mxu0 0.0
  %1139 = vmatpush2.msra.mxu0 0.0
  %1140 = vmatprep.subr.mxu0 0.0
  %1141 = vmatpush2.msra.mxu0 0.0
  %1142 = vmatprep.subr.mxu0 0.0
  %1143 = vmatpush2.msra.mxu0 0.0
  %1144 = vmatprep.subr.mxu0 0.0
  %1145 = vmatpush2.msra.mxu0 0.0
  %1146 = vmatprep.subr.mxu0 0.0
  %1147 = vmatpush2.msra.mxu0 0.0
  %1148 = vmatprep.subr.mxu0 0.0
  %1149 = vmatpush2.msra.mxu0 0.0
  %1150 = vmatprep.subr.mxu0 0.0
  %1151 = vmatpush2.msra.mxu0 0.0
  %1152 = vmatprep.subr.mxu0 0.0
  %1153 = vmatpush2.msra.mxu0 0.0
  %1154 = vmatprep.subr.mxu0 0.0
  %1155 = vmatpush2.msra.mxu0 0.0
  %1156 = vmatprep.subr.mxu0 0.0
  %1157 = vmatpush2.msra.mxu0 0.0
  %1158 = vmatprep.subr.mxu0 0.0
  %1159 = vmatpush2.msra.mxu0 0.0
  %1160 = vmatprep.subr.mxu0 0.0
  %1161 = vmatpush2.msra.mxu0 0.0
  %1162 = vmatprep.subr.mxu0 0.0
  %1163 = vmatpush2.msra.mxu0 0.0
  %1164 = vmatprep.subr.mxu0 0.0
  %1165 = vmatpush2.msra.mxu0 0.0
  %1166 = vmatprep.mubr.f32.mxu0 0.0
  %1167 = vmatmul.mubr.f32.gmra.mxu0 %v928
  %v1168 = vpop.f32.mrf.mxu0
  %v1169 = vadd.f32 0.0, %v1168
  %v1170 = vpop.f32.mrf.mxu0
  %1171 = vmatprep.mubr.f32.mxu0 0.0
  %1172 = vmatmul.mubr.f32.gmra.mxu0 %v929
  %v1173 = vpop.f32.mrf.mxu0
  %v1174 = vadd.f32 0.0, %v1173
  %v1175 = vpop.f32.mrf.mxu0
  %1176 = vmatprep.mubr.f32.mxu0 0.0
  %1177 = vmatmul.mubr.f32.gmra.mxu0 %v930
  %v1178 = vpop.f32.mrf.mxu0
  %v1179 = vadd.f32 0.0, %v1178
  %v1180 = vpop.f32.mrf.mxu0
  %1181 = vmatprep.mubr.f32.mxu0 0.0
  %1182 = vmatmul.mubr.f32.gmra.mxu0 %v931
  %v1183 = vpop.f32.mrf.mxu0
  %v1184 = vadd.f32 0.0, %v1183
  %v1185 = vpop.f32.mrf.mxu0
  %1186 = vdwg.mxu0
  %1187 = vmatprep.subr.mxu0 0.0
  %1188 = vmatpush1.msra.mxu0 %v401
  %1189 = vmatprep.subr.mxu0 0.0
  %1190 = vmatpush1.msra.mxu0 %v400
  %1191 = vmatprep.subr.mxu0 0.0
  %1192 = vmatpush1.msra.mxu0 %v399
  %1193 = vmatprep.subr.mxu0 0.0
  %1194 = vmatpush1.msra.mxu0 %v398
  %1195 = vmatprep.subr.mxu0 0.0
  %1196 = vmatpush1.msra.mxu0 %v397
  %1197 = vmatprep.subr.mxu0 0.0
  %1198 = vmatpush1.msra.mxu0 %v396
  %1199 = vmatprep.subr.mxu0 0.0
  %1200 = vmatpush1.msra.mxu0 %v395
  %1201 = vmatprep.subr.mxu0 0.0
  %1202 = vmatpush1.msra.mxu0 %v394
  %1203 = vmatprep.subr.mxu0 0.0
  %1204 = vmatpush1.msra.mxu0 %v393
  %1205 = vmatprep.subr.mxu0 0.0
  %1206 = vmatpush1.msra.mxu0 %v392
  %1207 = vmatprep.subr.mxu0 0.0
  %1208 = vmatpush1.msra.mxu0 %v391
  %1209 = vmatprep.subr.mxu0 0.0
  %1210 = vmatpush1.msra.mxu0 %v390
  %1211 = vmatprep.subr.mxu0 0.0
  %1212 = vmatpush1.msra.mxu0 %v389
  %1213 = vmatprep.subr.mxu0 0.0
  %1214 = vmatpush1.msra.mxu0 %v388
  %1215 = vmatprep.subr.mxu0 0.0
  %1216 = vmatpush1.msra.mxu0 %v387
  %1217 = vmatprep.subr.mxu0 0.0
  %1218 = vmatpush1.msra.mxu0 %v386
  %1219 = vmatprep.subr.mxu0 0.0
  %1220 = vmatpush2.msra.mxu0 0.0
  %1221 = vmatprep.subr.mxu0 0.0
  %1222 = vmatpush2.msra.mxu0 0.0
  %1223 = vmatprep.subr.mxu0 0.0
  %1224 = vmatpush2.msra.mxu0 0.0
  %1225 = vmatprep.subr.mxu0 0.0
  %1226 = vmatpush2.msra.mxu0 0.0
  %1227 = vmatprep.subr.mxu0 0.0
  %1228 = vmatpush2.msra.mxu0 0.0
  %1229 = vmatprep.subr.mxu0 0.0
  %1230 = vmatpush2.msra.mxu0 0.0
  %1231 = vmatprep.subr.mxu0 0.0
  %1232 = vmatpush2.msra.mxu0 0.0
  %1233 = vmatprep.subr.mxu0 0.0
  %1234 = vmatpush2.msra.mxu0 0.0
  %1235 = vmatprep.subr.mxu0 0.0
  %1236 = vmatpush2.msra.mxu0 0.0
  %1237 = vmatprep.subr.mxu0 0.0
  %1238 = vmatpush2.msra.mxu0 0.0
  %1239 = vmatprep.subr.mxu0 0.0
  %1240 = vmatpush2.msra.mxu0 0.0
  %1241 = vmatprep.subr.mxu0 0.0
  %1242 = vmatpush2.msra.mxu0 0.0
  %1243 = vmatprep.subr.mxu0 0.0
  %1244 = vmatpush2.msra.mxu0 0.0
  %1245 = vmatprep.subr.mxu0 0.0
  %1246 = vmatpush2.msra.mxu0 0.0
  %1247 = vmatprep.subr.mxu0 0.0
  %1248 = vmatpush2.msra.mxu0 0.0
  %1249 = vmatprep.subr.mxu0 0.0
  %1250 = vmatpush2.msra.mxu0 0.0
  %1251 = vmatprep.mubr.f32.mxu0 0.0
  %1252 = vmatmul.mubr.f32.gmra.mxu0 %v999
  %v1253 = vpop.f32.mrf.mxu0
  %v1254 = vadd.f32 %v1169, %v1253
  %v1255 = vpop.f32.mrf.mxu0
  %1256 = vmatprep.mubr.f32.mxu0 0.0
  %1257 = vmatmul.mubr.f32.gmra.mxu0 %v1004
  %v1258 = vpop.f32.mrf.mxu0
  %v1259 = vadd.f32 %v1174, %v1258
  %v1260 = vpop.f32.mrf.mxu0
  %1261 = vmatprep.mubr.f32.mxu0 0.0
  %1262 = vmatmul.mubr.f32.gmra.mxu0 %v1009
  %v1263 = vpop.f32.mrf.mxu0
  %v1264 = vadd.f32 %v1179, %v1263
  %v1265 = vpop.f32.mrf.mxu0
  %1266 = vmatprep.mubr.f32.mxu0 0.0
  %1267 = vmatmul.mubr.f32.gmra.mxu0 %v1014
  %v1268 = vpop.f32.mrf.mxu0
  %v1269 = vadd.f32 %v1184, %v1268
  %v1270 = vpop.f32.mrf.mxu0
  %1271 = vdwg.mxu0
  %1272 = vmatprep.subr.mxu0 0.0
  %1273 = vmatpush1.msra.mxu0 %v605
  %1274 = vmatprep.subr.mxu0 0.0
  %1275 = vmatpush1.msra.mxu0 %v604
  %1276 = vmatprep.subr.mxu0 0.0
  %1277 = vmatpush1.msra.mxu0 %v603
  %1278 = vmatprep.subr.mxu0 0.0
  %1279 = vmatpush1.msra.mxu0 %v602
  %1280 = vmatprep.subr.mxu0 0.0
  %1281 = vmatpush1.msra.mxu0 %v601
  %1282 = vmatprep.subr.mxu0 0.0
  %1283 = vmatpush1.msra.mxu0 %v600
  %1284 = vmatprep.subr.mxu0 0.0
  %1285 = vmatpush1.msra.mxu0 %v599
  %1286 = vmatprep.subr.mxu0 0.0
  %1287 = vmatpush1.msra.mxu0 %v598
  %1288 = vmatprep.subr.mxu0 0.0
  %1289 = vmatpush1.msra.mxu0 %v597
  %1290 = vmatprep.subr.mxu0 0.0
  %1291 = vmatpush1.msra.mxu0 %v596
  %1292 = vmatprep.subr.mxu0 0.0
  %1293 = vmatpush1.msra.mxu0 %v595
  %1294 = vmatprep.subr.mxu0 0.0
  %1295 = vmatpush1.msra.mxu0 %v594
  %1296 = vmatprep.subr.mxu0 0.0
  %1297 = vmatpush1.msra.mxu0 %v593
  %1298 = vmatprep.subr.mxu0 0.0
  %1299 = vmatpush1.msra.mxu0 %v592
  %1300 = vmatprep.subr.mxu0 0.0
  %1301 = vmatpush1.msra.mxu0 %v591
  %1302 = vmatprep.subr.mxu0 0.0
  %1303 = vmatpush1.msra.mxu0 %v590
  %1304 = vmatprep.subr.mxu0 0.0
  %1305 = vmatpush2.msra.mxu0 0.0
  %1306 = vmatprep.subr.mxu0 0.0
  %1307 = vmatpush2.msra.mxu0 0.0
  %1308 = vmatprep.subr.mxu0 0.0
  %1309 = vmatpush2.msra.mxu0 0.0
  %1310 = vmatprep.subr.mxu0 0.0
  %1311 = vmatpush2.msra.mxu0 0.0
  %1312 = vmatprep.subr.mxu0 0.0
  %1313 = vmatpush2.msra.mxu0 0.0
  %1314 = vmatprep.subr.mxu0 0.0
  %1315 = vmatpush2.msra.mxu0 0.0
  %1316 = vmatprep.subr.mxu0 0.0
  %1317 = vmatpush2.msra.mxu0 0.0
  %1318 = vmatprep.subr.mxu0 0.0
  %1319 = vmatpush2.msra.mxu0 0.0
  %1320 = vmatprep.subr.mxu0 0.0
  %1321 = vmatpush2.msra.mxu0 0.0
  %1322 = vmatprep.subr.mxu0 0.0
  %1323 = vmatpush2.msra.mxu0 0.0
  %1324 = vmatprep.subr.mxu0 0.0
  %1325 = vmatpush2.msra.mxu0 0.0
  %1326 = vmatprep.subr.mxu0 0.0
  %1327 = vmatpush2.msra.mxu0 0.0
  %1328 = vmatprep.subr.mxu0 0.0
  %1329 = vmatpush2.msra.mxu0 0.0
  %1330 = vmatprep.subr.mxu0 0.0
  %1331 = vmatpush2.msra.mxu0 0.0
  %1332 = vmatprep.subr.mxu0 0.0
  %1333 = vmatpush2.msra.mxu0 0.0
  %1334 = vmatprep.subr.mxu0 0.0
  %1335 = vmatpush2.msra.mxu0 0.0
  %1336 = vmatprep.mubr.f32.mxu0 0.0
  %1337 = vmatmul.mubr.f32.gmra.mxu0 %v1084
  %v1338 = vpop.f32.mrf.mxu0
  %v1339 = vadd.f32 0.0, %v1338
  %v1340 = vpop.f32.mrf.mxu0
  %1341 = vmatprep.mubr.f32.mxu0 0.0
  %1342 = vmatmul.mubr.f32.gmra.mxu0 %v1089
  %v1343 = vpop.f32.mrf.mxu0
  %v1344 = vadd.f32 0.0, %v1343
  %v1345 = vpop.f32.mrf.mxu0
  %1346 = vmatprep.mubr.f32.mxu0 0.0
  %1347 = vmatmul.mubr.f32.gmra.mxu0 %v1094
  %v1348 = vpop.f32.mrf.mxu0
  %v1349 = vadd.f32 0.0, %v1348
  %v1350 = vpop.f32.mrf.mxu0
  %1351 = vmatprep.mubr.f32.mxu0 0.0
  %1352 = vmatmul.mubr.f32.gmra.mxu0 %v1099
  %v1353 = vpop.f32.mrf.mxu0
  %v1354 = vadd.f32 0.0, %v1353
  %v1355 = vpop.f32.mrf.mxu0
  %1356 = vdwg.mxu0
  %v1357 = vadd.f32 %v1254, %v1339
  %v1358 = vadd.f32 %v1259, %v1344
  %v1359 = vadd.f32 %v1264, %v1349
  %v1360 = vadd.f32 %v1269, %v1354
  %v1361 = vadd.f32 %v1357, %v699
  %v1362 = vadd.f32 %v1358, %v699
  %v1363 = vadd.f32 %v1359, %v699
  %v1364 = vadd.f32 %v1360, %v699
  %1365 = vmatprep.subr.mxu0 0.0
  %1366 = vmatpush1.msra.mxu0 %v70
  %1367 = vmatprep.subr.mxu0 0.0
  %1368 = vmatpush1.msra.mxu0 %v69
  %1369 = vmatprep.subr.mxu0 0.0
  %1370 = vmatpush1.msra.mxu0 %v68
  %1371 = vmatprep.subr.mxu0 0.0
  %1372 = vmatpush1.msra.mxu0 %v67
  %1373 = vmatprep.subr.mxu0 0.0
  %1374 = vmatpush1.msra.mxu0 %v66
  %1375 = vmatprep.subr.mxu0 0.0
  %1376 = vmatpush1.msra.mxu0 %v65
  %1377 = vmatprep.subr.mxu0 0.0
  %1378 = vmatpush1.msra.mxu0 %v64
  %1379 = vmatprep.subr.mxu0 0.0
  %1380 = vmatpush1.msra.mxu0 %v63
  %1381 = vmatprep.subr.mxu0 0.0
  %1382 = vmatpush1.msra.mxu0 %v62
  %1383 = vmatprep.subr.mxu0 0.0
  %1384 = vmatpush1.msra.mxu0 %v61
  %1385 = vmatprep.subr.mxu0 0.0
  %1386 = vmatpush1.msra.mxu0 %v60
  %1387 = vmatprep.subr.mxu0 0.0
  %1388 = vmatpush1.msra.mxu0 %v59
  %1389 = vmatprep.subr.mxu0 0.0
  %1390 = vmatpush1.msra.mxu0 %v58
  %1391 = vmatprep.subr.mxu0 0.0
  %1392 = vmatpush1.msra.mxu0 %v57
  %1393 = vmatprep.subr.mxu0 0.0
  %1394 = vmatpush1.msra.mxu0 %v56
  %1395 = vmatprep.subr.mxu0 0.0
  %1396 = vmatpush1.msra.mxu0 %v55
  %1397 = vmatprep.subr.mxu0 0.0
  %1398 = vmatpush2.msra.mxu0 0.0
  %1399 = vmatprep.subr.mxu0 0.0
  %1400 = vmatpush2.msra.mxu0 0.0
  %1401 = vmatprep.subr.mxu0 0.0
  %1402 = vmatpush2.msra.mxu0 0.0
  %1403 = vmatprep.subr.mxu0 0.0
  %1404 = vmatpush2.msra.mxu0 0.0
  %1405 = vmatprep.subr.mxu0 0.0
  %1406 = vmatpush2.msra.mxu0 0.0
  %1407 = vmatprep.subr.mxu0 0.0
  %1408 = vmatpush2.msra.mxu0 0.0
  %1409 = vmatprep.subr.mxu0 0.0
  %1410 = vmatpush2.msra.mxu0 0.0
  %1411 = vmatprep.subr.mxu0 0.0
  %1412 = vmatpush2.msra.mxu0 0.0
  %1413 = vmatprep.subr.mxu0 0.0
  %1414 = vmatpush2.msra.mxu0 0.0
  %1415 = vmatprep.subr.mxu0 0.0
  %1416 = vmatpush2.msra.mxu0 0.0
  %1417 = vmatprep.subr.mxu0 0.0
  %1418 = vmatpush2.msra.mxu0 0.0
  %1419 = vmatprep.subr.mxu0 0.0
  %1420 = vmatpush2.msra.mxu0 0.0
  %1421 = vmatprep.subr.mxu0 0.0
  %1422 = vmatpush2.msra.mxu0 0.0
  %1423 = vmatprep.subr.mxu0 0.0
  %1424 = vmatpush2.msra.mxu0 0.0
  %1425 = vmatprep.subr.mxu0 0.0
  %1426 = vmatpush2.msra.mxu0 0.0
  %1427 = vmatprep.subr.mxu0 0.0
  %1428 = vmatpush2.msra.mxu0 0.0
  %1429 = vmatprep.mubr.f32.mxu0 0.0
  %1430 = vmatmul.mubr.f32.gmra.mxu0 %v1361
  %v1431 = vpop.f32.mrf.mxu0
  %v1432 = vadd.f32 0.0, %v1431
  %v1433 = vpop.f32.mrf.mxu0
  %1434 = vmatprep.mubr.f32.mxu0 0.0
  %1435 = vmatmul.mubr.f32.gmra.mxu0 %v1362
  %v1436 = vpop.f32.mrf.mxu0
  %v1437 = vadd.f32 0.0, %v1436
  %v1438 = vpop.f32.mrf.mxu0
  %1439 = vmatprep.mubr.f32.mxu0 0.0
  %1440 = vmatmul.mubr.f32.gmra.mxu0 %v1363
  %v1441 = vpop.f32.mrf.mxu0
  %v1442 = vadd.f32 0.0, %v1441
  %v1443 = vpop.f32.mrf.mxu0
  %1444 = vmatprep.mubr.f32.mxu0 0.0
  %1445 = vmatmul.mubr.f32.gmra.mxu0 %v1364
  %v1446 = vpop.f32.mrf.mxu0
  %v1447 = vadd.f32 0.0, %v1446
  %v1448 = vpop.f32.mrf.mxu0
  %1449 = vdwg.mxu0
  %v1450 = vadd.f32 %v1432, %v1437
  %v1451 = vadd.f32 %v1450, %v1442
  %v1452 = vadd.f32 %v1451, %v1447
  %v1453 = vrot.slane %v1452, 4
  %v1454 = vadd.f32 %v1452, %v1453
  %v1455 = vrot.slane %v1454, 2
  %v1456 = vadd.f32 %v1454, %v1455
  %v1457 = vrot.slane %v1456, 1
  %v1458 = vadd.f32 %v1456, %v1457
  %v1459 = vmul.f32 %v1361, %v1361
  %v1460 = vmul.f32 %v1362, %v1362
  %v1461 = vmul.f32 %v1363, %v1363
  %v1462 = vmul.f32 %v1364, %v1364
  %1463 = vmatprep.subr.mxu0 0.0
  %1464 = vmatpush1.msra.mxu0 %v70
  %1465 = vmatprep.subr.mxu0 0.0
  %1466 = vmatpush1.msra.mxu0 %v69
  %1467 = vmatprep.subr.mxu0 0.0
  %1468 = vmatpush1.msra.mxu0 %v68
  %1469 = vmatprep.subr.mxu0 0.0
  %1470 = vmatpush1.msra.mxu0 %v67
  %1471 = vmatprep.subr.mxu0 0.0
  %1472 = vmatpush1.msra.mxu0 %v66
  %1473 = vmatprep.subr.mxu0 0.0
  %1474 = vmatpush1.msra.mxu0 %v65
  %1475 = vmatprep.subr.mxu0 0.0
  %1476 = vmatpush1.msra.mxu0 %v64
  %1477 = vmatprep.subr.mxu0 0.0
  %1478 = vmatpush1.msra.mxu0 %v63
  %1479 = vmatprep.subr.mxu0 0.0
  %1480 = vmatpush1.msra.mxu0 %v62
  %1481 = vmatprep.subr.mxu0 0.0
  %1482 = vmatpush1.msra.mxu0 %v61
  %1483 = vmatprep.subr.mxu0 0.0
  %1484 = vmatpush1.msra.mxu0 %v60
  %1485 = vmatprep.subr.mxu0 0.0
  %1486 = vmatpush1.msra.mxu0 %v59
  %1487 = vmatprep.subr.mxu0 0.0
  %1488 = vmatpush1.msra.mxu0 %v58
  %1489 = vmatprep.subr.mxu0 0.0
  %1490 = vmatpush1.msra.mxu0 %v57
  %1491 = vmatprep.subr.mxu0 0.0
  %1492 = vmatpush1.msra.mxu0 %v56
  %1493 = vmatprep.subr.mxu0 0.0
  %1494 = vmatpush1.msra.mxu0 %v55
  %1495 = vmatprep.subr.mxu0 0.0
  %1496 = vmatpush2.msra.mxu0 0.0
  %1497 = vmatprep.subr.mxu0 0.0
  %1498 = vmatpush2.msra.mxu0 0.0
  %1499 = vmatprep.subr.mxu0 0.0
  %1500 = vmatpush2.msra.mxu0 0.0
  %1501 = vmatprep.subr.mxu0 0.0
  %1502 = vmatpush2.msra.mxu0 0.0
  %1503 = vmatprep.subr.mxu0 0.0
  %1504 = vmatpush2.msra.mxu0 0.0
  %1505 = vmatprep.subr.mxu0 0.0
  %1506 = vmatpush2.msra.mxu0 0.0
  %1507 = vmatprep.subr.mxu0 0.0
  %1508 = vmatpush2.msra.mxu0 0.0
  %1509 = vmatprep.subr.mxu0 0.0
  %1510 = vmatpush2.msra.mxu0 0.0
  %1511 = vmatprep.subr.mxu0 0.0
  %1512 = vmatpush2.msra.mxu0 0.0
  %1513 = vmatprep.subr.mxu0 0.0
  %1514 = vmatpush2.msra.mxu0 0.0
  %1515 = vmatprep.subr.mxu0 0.0
  %1516 = vmatpush2.msra.mxu0 0.0
  %1517 = vmatprep.subr.mxu0 0.0
  %1518 = vmatpush2.msra.mxu0 0.0
  %1519 = vmatprep.subr.mxu0 0.0
  %1520 = vmatpush2.msra.mxu0 0.0
  %1521 = vmatprep.subr.mxu0 0.0
  %1522 = vmatpush2.msra.mxu0 0.0
  %1523 = vmatprep.subr.mxu0 0.0
  %1524 = vmatpush2.msra.mxu0 0.0
  %1525 = vmatprep.subr.mxu0 0.0
  %1526 = vmatpush2.msra.mxu0 0.0
  %1527 = vmatprep.mubr.f32.mxu0 0.0
  %1528 = vmatmul.mubr.f32.gmra.mxu0 %v1459
  %v1529 = vpop.f32.mrf.mxu0
  %v1530 = vadd.f32 0.0, %v1529
  %v1531 = vpop.f32.mrf.mxu0
  %1532 = vmatprep.mubr.f32.mxu0 0.0
  %1533 = vmatmul.mubr.f32.gmra.mxu0 %v1460
  %v1534 = vpop.f32.mrf.mxu0
  %v1535 = vadd.f32 0.0, %v1534
  %v1536 = vpop.f32.mrf.mxu0
  %1537 = vmatprep.mubr.f32.mxu0 0.0
  %1538 = vmatmul.mubr.f32.gmra.mxu0 %v1461
  %v1539 = vpop.f32.mrf.mxu0
  %v1540 = vadd.f32 0.0, %v1539
  %v1541 = vpop.f32.mrf.mxu0
  %1542 = vmatprep.mubr.f32.mxu0 0.0
  %1543 = vmatmul.mubr.f32.gmra.mxu0 %v1462
  %v1544 = vpop.f32.mrf.mxu0
  %v1545 = vadd.f32 0.0, %v1544
  %v1546 = vpop.f32.mrf.mxu0
  %1547 = vdwg.mxu0
  %v1548 = vadd.f32 %v1530, %v1535
  %v1549 = vadd.f32 %v1548, %v1540
  %v1550 = vadd.f32 %v1549, %v1545
  %v1551 = vrot.slane %v1550, 4
  %v1552 = vadd.f32 %v1550, %v1551
  %v1553 = vrot.slane %v1552, 2
  %v1554 = vadd.f32 %v1552, %v1553
  %v1555 = vrot.slane %v1554, 1
  %v1556 = vadd.f32 %v1554, %v1555
  %v1557 = vmul.f32 %v1458, 0.001953125
  %v1558 = vmul.f32 %v1556, 0.001953125
  %v1559 = vmul.f32 %v1557, %v1557
  %v1560 = vsub.f32 %v1558, %v1559
  %v1561 = vadd.f32 %v1560, 1e-05
  %v1562 = vrsqrt.pop %v1561
  %v1563 = vmul.f32 %v1562, %v189
  %v1564 = vmul.f32 %v1557, %v1563
  %v1565 = vsub.f32 %v190, %v1564
  %v1566 = vlaneseq
  %v1567 = vshrl.u32 %v1566, 7
  %v1568 = vsub.s32 0, %v1567
  %v1569 = vrot.slane %v1563, %v1568
  %v1570 = vmul.f32 %v1361, %v1569
  %v1571 = vmul.f32 %v1362, %v1569
  %v1572 = vmul.f32 %v1363, %v1569
  %v1573 = vmul.f32 %v1364, %v1569
  %v1575 = vlaneseq
  %v1576 = vshrl.u32 %v1575, 7
  %v1577 = vsub.s32 0, %v1576
  %v1578 = vrot.slane %v1565, %v1577
  %v1580 = vadd.f32 %v1570, %v1578
  %v1581 = vadd.f32 %v1571, %v1578
  %v1582 = vadd.f32 %v1572, %v1578
  %v1583 = vadd.f32 %v1573, %v1578
  %v1584 = vmax.f32 %v1580, 0.0
  %v1585 = vmax.f32 %v1581, 0.0
  %v1586 = vmax.f32 %v1582, 0.0
  %v1587 = vmax.f32 %v1583, 0.0
  %v1588 = vadd.f32 %v170, %v1584
  %v1589 = vadd.f32 %v175, %v1585
  %v1590 = vadd.f32 %v180, %v1586
  %v1591 = vadd.f32 %v185, %v1587
  %1592 = vmatprep.subr.mxu0 0.0
  %1593 = vmatpush1.msra.mxu0 0.0
  %1594 = vmatprep.subr.mxu0 0.0
  %1595 = vmatpush1.msra.mxu0 0.0
  %1596 = vmatprep.subr.mxu0 0.0
  %1597 = vmatpush1.msra.mxu0 0.0
  %1598 = vmatprep.subr.mxu0 0.0
  %1599 = vmatpush1.msra.mxu0 0.0
  %1600 = vmatprep.subr.mxu0 0.0
  %1601 = vmatpush1.msra.mxu0 0.0
  %1602 = vmatprep.subr.mxu0 0.0
  %1603 = vmatpush1.msra.mxu0 0.0
  %1604 = vmatprep.subr.mxu0 0.0
  %1605 = vmatpush1.msra.mxu0 0.0
  %1606 = vmatprep.subr.mxu0 0.0
  %1607 = vmatpush1.msra.mxu0 0.0
  %1608 = vmatprep.subr.mxu0 0.0
  %1609 = vmatpush1.msra.mxu0 0.0
  %1610 = vmatprep.subr.mxu0 0.0
  %1611 = vmatpush1.msra.mxu0 0.0
  %1612 = vmatprep.subr.mxu0 0.0
  %1613 = vmatpush1.msra.mxu0 0.0
  %1614 = vmatprep.subr.mxu0 0.0
  %1615 = vmatpush1.msra.mxu0 0.0
  %1616 = vmatprep.subr.mxu0 0.0
  %1617 = vmatpush1.msra.mxu0 %v1591
  %1618 = vmatprep.subr.mxu0 0.0
  %1619 = vmatpush1.msra.mxu0 %v1590
  %1620 = vmatprep.subr.mxu0 0.0
  %1621 = vmatpush1.msra.mxu0 %v1589
  %1622 = vmatprep.subr.mxu0 0.0
  %1623 = vmatpush1.msra.mxu0 %v1588
  %1624 = vmatprep.subr.mxu0 0.0
  %1625 = vmatpush2.msra.mxu0 0.0
  %1626 = vmatprep.subr.mxu0 0.0
  %1627 = vmatpush2.msra.mxu0 0.0
  %1628 = vmatprep.subr.mxu0 0.0
  %1629 = vmatpush2.msra.mxu0 0.0
  %1630 = vmatprep.subr.mxu0 0.0
  %1631 = vmatpush2.msra.mxu0 0.0
  %1632 = vmatprep.subr.mxu0 0.0
  %1633 = vmatpush2.msra.mxu0 0.0
  %1634 = vmatprep.subr.mxu0 0.0
  %1635 = vmatpush2.msra.mxu0 0.0
  %1636 = vmatprep.subr.mxu0 0.0
  %1637 = vmatpush2.msra.mxu0 0.0
  %1638 = vmatprep.subr.mxu0 0.0
  %1639 = vmatpush2.msra.mxu0 0.0
  %1640 = vmatprep.subr.mxu0 0.0
  %1641 = vmatpush2.msra.mxu0 0.0
  %1642 = vmatprep.subr.mxu0 0.0
  %1643 = vmatpush2.msra.mxu0 0.0
  %1644 = vmatprep.subr.mxu0 0.0
  %1645 = vmatpush2.msra.mxu0 0.0
  %1646 = vmatprep.subr.mxu0 0.0
  %1647 = vmatpush2.msra.mxu0 0.0
  %1648 = vmatprep.subr.mxu0 0.0
  %1649 = vmatpush2.msra.mxu0 0.0
  %1650 = vmatprep.subr.mxu0 0.0
  %1651 = vmatpush2.msra.mxu0 0.0
  %1652 = vmatprep.subr.mxu0 0.0
  %1653 = vmatpush2.msra.mxu0 0.0
  %1654 = vmatprep.subr.mxu0 0.0
  %1655 = vmatpush2.msra.mxu0 0.0
  %1656 = vmatprep.mubr.f32.mxu0 0.0
  %1657 = vmatmul.mubr.f32.gmra.mxu0 %v193
  %v1658 = vpop.f32.mrf.mxu0
  %v1659 = vadd.f32 0.0, %v1658
  %v1660 = vpop.f32.mrf.mxu0
  %1661 = vmatprep.mubr.f32.mxu0 0.0
  %1662 = vmatmul.mubr.f32.gmra.mxu0 %v196
  %v1663 = vpop.f32.mrf.mxu0
  %v1664 = vadd.f32 0.0, %v1663
  %v1665 = vpop.f32.mrf.mxu0
  %1666 = vmatprep.mubr.f32.mxu0 0.0
  %1667 = vmatmul.mubr.f32.gmra.mxu0 %v199
  %v1668 = vpop.f32.mrf.mxu0
  %v1669 = vadd.f32 0.0, %v1668
  %v1670 = vpop.f32.mrf.mxu0
  %1671 = vmatprep.mubr.f32.mxu0 0.0
  %1672 = vmatmul.mubr.f32.gmra.mxu0 %v202
  %v1673 = vpop.f32.mrf.mxu0
  %v1674 = vadd.f32 0.0, %v1673
  %v1675 = vpop.f32.mrf.mxu0
  %1676 = vdwg.mxu0
  %1677 = vmatprep.subr.mxu0 0.0
  %1678 = vmatpush1.msra.mxu0 0.0
  %1679 = vmatprep.subr.mxu0 0.0
  %1680 = vmatpush1.msra.mxu0 0.0
  %1681 = vmatprep.subr.mxu0 0.0
  %1682 = vmatpush1.msra.mxu0 0.0
  %1683 = vmatprep.subr.mxu0 0.0
  %1684 = vmatpush1.msra.mxu0 0.0
  %1685 = vmatprep.subr.mxu0 0.0
  %1686 = vmatpush1.msra.mxu0 0.0
  %1687 = vmatprep.subr.mxu0 0.0
  %1688 = vmatpush1.msra.mxu0 0.0
  %1689 = vmatprep.subr.mxu0 0.0
  %1690 = vmatpush1.msra.mxu0 0.0
  %1691 = vmatprep.subr.mxu0 0.0
  %1692 = vmatpush1.msra.mxu0 0.0
  %1693 = vmatprep.subr.mxu0 0.0
  %1694 = vmatpush1.msra.mxu0 0.0
  %1695 = vmatprep.subr.mxu0 0.0
  %1696 = vmatpush1.msra.mxu0 0.0
  %1697 = vmatprep.subr.mxu0 0.0
  %1698 = vmatpush1.msra.mxu0 0.0
  %1699 = vmatprep.subr.mxu0 0.0
  %1700 = vmatpush1.msra.mxu0 0.0
  %1701 = vmatprep.subr.mxu0 0.0
  %1702 = vmatpush1.msra.mxu0 %v1591
  %1703 = vmatprep.subr.mxu0 0.0
  %1704 = vmatpush1.msra.mxu0 %v1590
  %1705 = vmatprep.subr.mxu0 0.0
  %1706 = vmatpush1.msra.mxu0 %v1589
  %1707 = vmatprep.subr.mxu0 0.0
  %1708 = vmatpush1.msra.mxu0 %v1588
  %1709 = vmatprep.subr.mxu0 0.0
  %1710 = vmatpush2.msra.mxu0 0.0
  %1711 = vmatprep.subr.mxu0 0.0
  %1712 = vmatpush2.msra.mxu0 0.0
  %1713 = vmatprep.subr.mxu0 0.0
  %1714 = vmatpush2.msra.mxu0 0.0
  %1715 = vmatprep.subr.mxu0 0.0
  %1716 = vmatpush2.msra.mxu0 0.0
  %1717 = vmatprep.subr.mxu0 0.0
  %1718 = vmatpush2.msra.mxu0 0.0
  %1719 = vmatprep.subr.mxu0 0.0
  %1720 = vmatpush2.msra.mxu0 0.0
  %1721 = vmatprep.subr.mxu0 0.0
  %1722 = vmatpush2.msra.mxu0 0.0
  %1723 = vmatprep.subr.mxu0 0.0
  %1724 = vmatpush2.msra.mxu0 0.0
  %1725 = vmatprep.subr.mxu0 0.0
  %1726 = vmatpush2.msra.mxu0 0.0
  %1727 = vmatprep.subr.mxu0 0.0
  %1728 = vmatpush2.msra.mxu0 0.0
  %1729 = vmatprep.subr.mxu0 0.0
  %1730 = vmatpush2.msra.mxu0 0.0
  %1731 = vmatprep.subr.mxu0 0.0
  %1732 = vmatpush2.msra.mxu0 0.0
  %1733 = vmatprep.subr.mxu0 0.0
  %1734 = vmatpush2.msra.mxu0 0.0
  %1735 = vmatprep.subr.mxu0 0.0
  %1736 = vmatpush2.msra.mxu0 0.0
  %1737 = vmatprep.subr.mxu0 0.0
  %1738 = vmatpush2.msra.mxu0 0.0
  %1739 = vmatprep.subr.mxu0 0.0
  %1740 = vmatpush2.msra.mxu0 0.0
  %1741 = vmatprep.mubr.f32.mxu0 0.0
  %1742 = vmatmul.mubr.f32.gmra.mxu0 %v290
  %v1743 = vpop.f32.mrf.mxu0
  %v1744 = vadd.f32 0.0, %v1743
  %v1745 = vpop.f32.mrf.mxu0
  %1746 = vmatprep.mubr.f32.mxu0 0.0
  %1747 = vmatmul.mubr.f32.gmra.mxu0 %v293
  %v1748 = vpop.f32.mrf.mxu0
  %v1749 = vadd.f32 0.0, %v1748
  %v1750 = vpop.f32.mrf.mxu0
  %1751 = vmatprep.mubr.f32.mxu0 0.0
  %1752 = vmatmul.mubr.f32.gmra.mxu0 %v296
  %v1753 = vpop.f32.mrf.mxu0
  %v1754 = vadd.f32 0.0, %v1753
  %v1755 = vpop.f32.mrf.mxu0
  %1756 = vmatprep.mubr.f32.mxu0 0.0
  %1757 = vmatmul.mubr.f32.gmra.mxu0 %v299
  %v1758 = vpop.f32.mrf.mxu0
  %v1759 = vadd.f32 0.0, %v1758
  %v1760 = vpop.f32.mrf.mxu0
  %1761 = vdwg.mxu0
  %1762 = vmatprep.subr.mxu0 0.0
  %1763 = vmatpush1.msra.mxu0 %v418
  %1764 = vmatprep.subr.mxu0 0.0
  %1765 = vmatpush1.msra.mxu0 %v417
  %1766 = vmatprep.subr.mxu0 0.0
  %1767 = vmatpush1.msra.mxu0 %v416
  %1768 = vmatprep.subr.mxu0 0.0
  %1769 = vmatpush1.msra.mxu0 %v415
  %1770 = vmatprep.subr.mxu0 0.0
  %1771 = vmatpush1.msra.mxu0 %v414
  %1772 = vmatprep.subr.mxu0 0.0
  %1773 = vmatpush1.msra.mxu0 %v413
  %1774 = vmatprep.subr.mxu0 0.0
  %1775 = vmatpush1.msra.mxu0 %v412
  %1776 = vmatprep.subr.mxu0 0.0
  %1777 = vmatpush1.msra.mxu0 %v411
  %1778 = vmatprep.subr.mxu0 0.0
  %1779 = vmatpush1.msra.mxu0 %v410
  %1780 = vmatprep.subr.mxu0 0.0
  %1781 = vmatpush1.msra.mxu0 %v409
  %1782 = vmatprep.subr.mxu0 0.0
  %1783 = vmatpush1.msra.mxu0 %v408
  %1784 = vmatprep.subr.mxu0 0.0
  %1785 = vmatpush1.msra.mxu0 %v407
  %1786 = vmatprep.subr.mxu0 0.0
  %1787 = vmatpush1.msra.mxu0 %v406
  %1788 = vmatprep.subr.mxu0 0.0
  %1789 = vmatpush1.msra.mxu0 %v405
  %1790 = vmatprep.subr.mxu0 0.0
  %1791 = vmatpush1.msra.mxu0 %v404
  %1792 = vmatprep.subr.mxu0 0.0
  %1793 = vmatpush1.msra.mxu0 %v403
  %1794 = vmatprep.subr.mxu0 0.0
  %1795 = vmatpush2.msra.mxu0 0.0
  %1796 = vmatprep.subr.mxu0 0.0
  %1797 = vmatpush2.msra.mxu0 0.0
  %1798 = vmatprep.subr.mxu0 0.0
  %1799 = vmatpush2.msra.mxu0 0.0
  %1800 = vmatprep.subr.mxu0 0.0
  %1801 = vmatpush2.msra.mxu0 0.0
  %1802 = vmatprep.subr.mxu0 0.0
  %1803 = vmatpush2.msra.mxu0 0.0
  %1804 = vmatprep.subr.mxu0 0.0
  %1805 = vmatpush2.msra.mxu0 0.0
  %1806 = vmatprep.subr.mxu0 0.0
  %1807 = vmatpush2.msra.mxu0 0.0
  %1808 = vmatprep.subr.mxu0 0.0
  %1809 = vmatpush2.msra.mxu0 0.0
  %1810 = vmatprep.subr.mxu0 0.0
  %1811 = vmatpush2.msra.mxu0 0.0
  %1812 = vmatprep.subr.mxu0 0.0
  %1813 = vmatpush2.msra.mxu0 0.0
  %1814 = vmatprep.subr.mxu0 0.0
  %1815 = vmatpush2.msra.mxu0 0.0
  %1816 = vmatprep.subr.mxu0 0.0
  %1817 = vmatpush2.msra.mxu0 0.0
  %1818 = vmatprep.subr.mxu0 0.0
  %1819 = vmatpush2.msra.mxu0 0.0
  %1820 = vmatprep.subr.mxu0 0.0
  %1821 = vmatpush2.msra.mxu0 0.0
  %1822 = vmatprep.subr.mxu0 0.0
  %1823 = vmatpush2.msra.mxu0 0.0
  %1824 = vmatprep.subr.mxu0 0.0
  %1825 = vmatpush2.msra.mxu0 0.0
  %1826 = vmatprep.mubr.f32.mxu0 0.0
  %1827 = vmatmul.mubr.f32.gmra.mxu0 %v1588
  %v1828 = vpop.f32.mrf.mxu0
  %v1829 = vadd.f32 0.0, %v1828
  %v1830 = vpop.f32.mrf.mxu0
  %1831 = vmatprep.mubr.f32.mxu0 0.0
  %1832 = vmatmul.mubr.f32.gmra.mxu0 %v1589
  %v1833 = vpop.f32.mrf.mxu0
  %v1834 = vadd.f32 0.0, %v1833
  %v1835 = vpop.f32.mrf.mxu0
  %1836 = vmatprep.mubr.f32.mxu0 0.0
  %1837 = vmatmul.mubr.f32.gmra.mxu0 %v1590
  %v1838 = vpop.f32.mrf.mxu0
  %v1839 = vadd.f32 0.0, %v1838
  %v1840 = vpop.f32.mrf.mxu0
  %1841 = vmatprep.mubr.f32.mxu0 0.0
  %1842 = vmatmul.mubr.f32.gmra.mxu0 %v1591
  %v1843 = vpop.f32.mrf.mxu0
  %v1844 = vadd.f32 0.0, %v1843
  %v1845 = vpop.f32.mrf.mxu0
  %1846 = vdwg.mxu0
  %1847 = vmatprep.subr.mxu0 0.0
  %1848 = vmatpush1.msra.mxu0 %v401
  %1849 = vmatprep.subr.mxu0 0.0
  %1850 = vmatpush1.msra.mxu0 %v400
  %1851 = vmatprep.subr.mxu0 0.0
  %1852 = vmatpush1.msra.mxu0 %v399
  %1853 = vmatprep.subr.mxu0 0.0
  %1854 = vmatpush1.msra.mxu0 %v398
  %1855 = vmatprep.subr.mxu0 0.0
  %1856 = vmatpush1.msra.mxu0 %v397
  %1857 = vmatprep.subr.mxu0 0.0
  %1858 = vmatpush1.msra.mxu0 %v396
  %1859 = vmatprep.subr.mxu0 0.0
  %1860 = vmatpush1.msra.mxu0 %v395
  %1861 = vmatprep.subr.mxu0 0.0
  %1862 = vmatpush1.msra.mxu0 %v394
  %1863 = vmatprep.subr.mxu0 0.0
  %1864 = vmatpush1.msra.mxu0 %v393
  %1865 = vmatprep.subr.mxu0 0.0
  %1866 = vmatpush1.msra.mxu0 %v392
  %1867 = vmatprep.subr.mxu0 0.0
  %1868 = vmatpush1.msra.mxu0 %v391
  %1869 = vmatprep.subr.mxu0 0.0
  %1870 = vmatpush1.msra.mxu0 %v390
  %1871 = vmatprep.subr.mxu0 0.0
  %1872 = vmatpush1.msra.mxu0 %v389
  %1873 = vmatprep.subr.mxu0 0.0
  %1874 = vmatpush1.msra.mxu0 %v388
  %1875 = vmatprep.subr.mxu0 0.0
  %1876 = vmatpush1.msra.mxu0 %v387
  %1877 = vmatprep.subr.mxu0 0.0
  %1878 = vmatpush1.msra.mxu0 %v386
  %1879 = vmatprep.subr.mxu0 0.0
  %1880 = vmatpush2.msra.mxu0 0.0
  %1881 = vmatprep.subr.mxu0 0.0
  %1882 = vmatpush2.msra.mxu0 0.0
  %1883 = vmatprep.subr.mxu0 0.0
  %1884 = vmatpush2.msra.mxu0 0.0
  %1885 = vmatprep.subr.mxu0 0.0
  %1886 = vmatpush2.msra.mxu0 0.0
  %1887 = vmatprep.subr.mxu0 0.0
  %1888 = vmatpush2.msra.mxu0 0.0
  %1889 = vmatprep.subr.mxu0 0.0
  %1890 = vmatpush2.msra.mxu0 0.0
  %1891 = vmatprep.subr.mxu0 0.0
  %1892 = vmatpush2.msra.mxu0 0.0
  %1893 = vmatprep.subr.mxu0 0.0
  %1894 = vmatpush2.msra.mxu0 0.0
  %1895 = vmatprep.subr.mxu0 0.0
  %1896 = vmatpush2.msra.mxu0 0.0
  %1897 = vmatprep.subr.mxu0 0.0
  %1898 = vmatpush2.msra.mxu0 0.0
  %1899 = vmatprep.subr.mxu0 0.0
  %1900 = vmatpush2.msra.mxu0 0.0
  %1901 = vmatprep.subr.mxu0 0.0
  %1902 = vmatpush2.msra.mxu0 0.0
  %1903 = vmatprep.subr.mxu0 0.0
  %1904 = vmatpush2.msra.mxu0 0.0
  %1905 = vmatprep.subr.mxu0 0.0
  %1906 = vmatpush2.msra.mxu0 0.0
  %1907 = vmatprep.subr.mxu0 0.0
  %1908 = vmatpush2.msra.mxu0 0.0
  %1909 = vmatprep.subr.mxu0 0.0
  %1910 = vmatpush2.msra.mxu0 0.0
  %1911 = vmatprep.mubr.f32.mxu0 0.0
  %1912 = vmatmul.mubr.f32.gmra.mxu0 %v1659
  %v1913 = vpop.f32.mrf.mxu0
  %v1914 = vadd.f32 %v1829, %v1913
  %v1915 = vpop.f32.mrf.mxu0
  %1916 = vmatprep.mubr.f32.mxu0 0.0
  %1917 = vmatmul.mubr.f32.gmra.mxu0 %v1664
  %v1918 = vpop.f32.mrf.mxu0
  %v1919 = vadd.f32 %v1834, %v1918
  %v1920 = vpop.f32.mrf.mxu0
  %1921 = vmatprep.mubr.f32.mxu0 0.0
  %1922 = vmatmul.mubr.f32.gmra.mxu0 %v1669
  %v1923 = vpop.f32.mrf.mxu0
  %v1924 = vadd.f32 %v1839, %v1923
  %v1925 = vpop.f32.mrf.mxu0
  %1926 = vmatprep.mubr.f32.mxu0 0.0
  %1927 = vmatmul.mubr.f32.gmra.mxu0 %v1674
  %v1928 = vpop.f32.mrf.mxu0
  %v1929 = vadd.f32 %v1844, %v1928
  %v1930 = vpop.f32.mrf.mxu0
  %1931 = vdwg.mxu0
  %1932 = vmatprep.subr.mxu0 0.0
  %1933 = vmatpush1.msra.mxu0 %v605
  %1934 = vmatprep.subr.mxu0 0.0
  %1935 = vmatpush1.msra.mxu0 %v604
  %1936 = vmatprep.subr.mxu0 0.0
  %1937 = vmatpush1.msra.mxu0 %v603
  %1938 = vmatprep.subr.mxu0 0.0
  %1939 = vmatpush1.msra.mxu0 %v602
  %1940 = vmatprep.subr.mxu0 0.0
  %1941 = vmatpush1.msra.mxu0 %v601
  %1942 = vmatprep.subr.mxu0 0.0
  %1943 = vmatpush1.msra.mxu0 %v600
  %1944 = vmatprep.subr.mxu0 0.0
  %1945 = vmatpush1.msra.mxu0 %v599
  %1946 = vmatprep.subr.mxu0 0.0
  %1947 = vmatpush1.msra.mxu0 %v598
  %1948 = vmatprep.subr.mxu0 0.0
  %1949 = vmatpush1.msra.mxu0 %v597
  %1950 = vmatprep.subr.mxu0 0.0
  %1951 = vmatpush1.msra.mxu0 %v596
  %1952 = vmatprep.subr.mxu0 0.0
  %1953 = vmatpush1.msra.mxu0 %v595
  %1954 = vmatprep.subr.mxu0 0.0
  %1955 = vmatpush1.msra.mxu0 %v594
  %1956 = vmatprep.subr.mxu0 0.0
  %1957 = vmatpush1.msra.mxu0 %v593
  %1958 = vmatprep.subr.mxu0 0.0
  %1959 = vmatpush1.msra.mxu0 %v592
  %1960 = vmatprep.subr.mxu0 0.0
  %1961 = vmatpush1.msra.mxu0 %v591
  %1962 = vmatprep.subr.mxu0 0.0
  %1963 = vmatpush1.msra.mxu0 %v590
  %1964 = vmatprep.subr.mxu0 0.0
  %1965 = vmatpush2.msra.mxu0 0.0
  %1966 = vmatprep.subr.mxu0 0.0
  %1967 = vmatpush2.msra.mxu0 0.0
  %1968 = vmatprep.subr.mxu0 0.0
  %1969 = vmatpush2.msra.mxu0 0.0
  %1970 = vmatprep.subr.mxu0 0.0
  %1971 = vmatpush2.msra.mxu0 0.0
  %1972 = vmatprep.subr.mxu0 0.0
  %1973 = vmatpush2.msra.mxu0 0.0
  %1974 = vmatprep.subr.mxu0 0.0
  %1975 = vmatpush2.msra.mxu0 0.0
  %1976 = vmatprep.subr.mxu0 0.0
  %1977 = vmatpush2.msra.mxu0 0.0
  %1978 = vmatprep.subr.mxu0 0.0
  %1979 = vmatpush2.msra.mxu0 0.0
  %1980 = vmatprep.subr.mxu0 0.0
  %1981 = vmatpush2.msra.mxu0 0.0
  %1982 = vmatprep.subr.mxu0 0.0
  %1983 = vmatpush2.msra.mxu0 0.0
  %1984 = vmatprep.subr.mxu0 0.0
  %1985 = vmatpush2.msra.mxu0 0.0
  %1986 = vmatprep.subr.mxu0 0.0
  %1987 = vmatpush2.msra.mxu0 0.0
  %1988 = vmatprep.subr.mxu0 0.0
  %1989 = vmatpush2.msra.mxu0 0.0
  %1990 = vmatprep.subr.mxu0 0.0
  %1991 = vmatpush2.msra.mxu0 0.0
  %1992 = vmatprep.subr.mxu0 0.0
  %1993 = vmatpush2.msra.mxu0 0.0
  %1994 = vmatprep.subr.mxu0 0.0
  %1995 = vmatpush2.msra.mxu0 0.0
  %1996 = vmatprep.mubr.f32.mxu0 0.0
  %1997 = vmatmul.mubr.f32.gmra.mxu0 %v1744
  %v1998 = vpop.f32.mrf.mxu0
  %v1999 = vadd.f32 0.0, %v1998
  %v2000 = vpop.f32.mrf.mxu0
  %2001 = vmatprep.mubr.f32.mxu0 0.0
  %2002 = vmatmul.mubr.f32.gmra.mxu0 %v1749
  %v2003 = vpop.f32.mrf.mxu0
  %v2004 = vadd.f32 0.0, %v2003
  %v2005 = vpop.f32.mrf.mxu0
  %2006 = vmatprep.mubr.f32.mxu0 0.0
  %2007 = vmatmul.mubr.f32.gmra.mxu0 %v1754
  %v2008 = vpop.f32.mrf.mxu0
  %v2009 = vadd.f32 0.0, %v2008
  %v2010 = vpop.f32.mrf.mxu0
  %2011 = vmatprep.mubr.f32.mxu0 0.0
  %2012 = vmatmul.mubr.f32.gmra.mxu0 %v1759
  %v2013 = vpop.f32.mrf.mxu0
  %v2014 = vadd.f32 0.0, %v2013
  %v2015 = vpop.f32.mrf.mxu0
  %2016 = vdwg.mxu0
  %v2017 = vadd.f32 %v1914, %v1999
  %v2018 = vadd.f32 %v1919, %v2004
  %v2019 = vadd.f32 %v1924, %v2009
  %v2020 = vadd.f32 %v1929, %v2014
  %v2021 = vadd.f32 %v2017, %v699
  %v2022 = vadd.f32 %v2018, %v699
  %v2023 = vadd.f32 %v2019, %v699
  %v2024 = vadd.f32 %v2020, %v699
  %2025 = vmatprep.subr.mxu0 0.0
  %2026 = vmatpush1.msra.mxu0 %v70
  %2027 = vmatprep.subr.mxu0 0.0
  %2028 = vmatpush1.msra.mxu0 %v69
  %2029 = vmatprep.subr.mxu0 0.0
  %2030 = vmatpush1.msra.mxu0 %v68
  %2031 = vmatprep.subr.mxu0 0.0
  %2032 = vmatpush1.msra.mxu0 %v67
  %2033 = vmatprep.subr.mxu0 0.0
  %2034 = vmatpush1.msra.mxu0 %v66
  %2035 = vmatprep.subr.mxu0 0.0
  %2036 = vmatpush1.msra.mxu0 %v65
  %2037 = vmatprep.subr.mxu0 0.0
  %2038 = vmatpush1.msra.mxu0 %v64
  %2039 = vmatprep.subr.mxu0 0.0
  %2040 = vmatpush1.msra.mxu0 %v63
  %2041 = vmatprep.subr.mxu0 0.0
  %2042 = vmatpush1.msra.mxu0 %v62
  %2043 = vmatprep.subr.mxu0 0.0
  %2044 = vmatpush1.msra.mxu0 %v61
  %2045 = vmatprep.subr.mxu0 0.0
  %2046 = vmatpush1.msra.mxu0 %v60
  %2047 = vmatprep.subr.mxu0 0.0
  %2048 = vmatpush1.msra.mxu0 %v59
  %2049 = vmatprep.subr.mxu0 0.0
  %2050 = vmatpush1.msra.mxu0 %v58
  %2051 = vmatprep.subr.mxu0 0.0
  %2052 = vmatpush1.msra.mxu0 %v57
  %2053 = vmatprep.subr.mxu0 0.0
  %2054 = vmatpush1.msra.mxu0 %v56
  %2055 = vmatprep.subr.mxu0 0.0
  %2056 = vmatpush1.msra.mxu0 %v55
  %2057 = vmatprep.subr.mxu0 0.0
  %2058 = vmatpush2.msra.mxu0 0.0
  %2059 = vmatprep.subr.mxu0 0.0
  %2060 = vmatpush2.msra.mxu0 0.0
  %2061 = vmatprep.subr.mxu0 0.0
  %2062 = vmatpush2.msra.mxu0 0.0
  %2063 = vmatprep.subr.mxu0 0.0
  %2064 = vmatpush2.msra.mxu0 0.0
  %2065 = vmatprep.subr.mxu0 0.0
  %2066 = vmatpush2.msra.mxu0 0.0
  %2067 = vmatprep.subr.mxu0 0.0
  %2068 = vmatpush2.msra.mxu0 0.0
  %2069 = vmatprep.subr.mxu0 0.0
  %2070 = vmatpush2.msra.mxu0 0.0
  %2071 = vmatprep.subr.mxu0 0.0
  %2072 = vmatpush2.msra.mxu0 0.0
  %2073 = vmatprep.subr.mxu0 0.0
  %2074 = vmatpush2.msra.mxu0 0.0
  %2075 = vmatprep.subr.mxu0 0.0
  %2076 = vmatpush2.msra.mxu0 0.0
  %2077 = vmatprep.subr.mxu0 0.0
  %2078 = vmatpush2.msra.mxu0 0.0
  %2079 = vmatprep.subr.mxu0 0.0
  %2080 = vmatpush2.msra.mxu0 0.0
  %2081 = vmatprep.subr.mxu0 0.0
  %2082 = vmatpush2.msra.mxu0 0.0
  %2083 = vmatprep.subr.mxu0 0.0
  %2084 = vmatpush2.msra.mxu0 0.0
  %2085 = vmatprep.subr.mxu0 0.0
  %2086 = vmatpush2.msra.mxu0 0.0
  %2087 = vmatprep.subr.mxu0 0.0
  %2088 = vmatpush2.msra.mxu0 0.0
  %2089 = vmatprep.mubr.f32.mxu0 0.0
  %2090 = vmatmul.mubr.f32.gmra.mxu0 %v2021
  %v2091 = vpop.f32.mrf.mxu0
  %v2092 = vadd.f32 0.0, %v2091
  %v2093 = vpop.f32.mrf.mxu0
  %2094 = vmatprep.mubr.f32.mxu0 0.0
  %2095 = vmatmul.mubr.f32.gmra.mxu0 %v2022
  %v2096 = vpop.f32.mrf.mxu0
  %v2097 = vadd.f32 0.0, %v2096
  %v2098 = vpop.f32.mrf.mxu0
  %2099 = vmatprep.mubr.f32.mxu0 0.0
  %2100 = vmatmul.mubr.f32.gmra.mxu0 %v2023
  %v2101 = vpop.f32.mrf.mxu0
  %v2102 = vadd.f32 0.0, %v2101
  %v2103 = vpop.f32.mrf.mxu0
  %2104 = vmatprep.mubr.f32.mxu0 0.0
  %2105 = vmatmul.mubr.f32.gmra.mxu0 %v2024
  %v2106 = vpop.f32.mrf.mxu0
  %v2107 = vadd.f32 0.0, %v2106
  %v2108 = vpop.f32.mrf.mxu0
  %2109 = vdwg.mxu0
  %v2110 = vadd.f32 %v2092, %v2097
  %v2111 = vadd.f32 %v2110, %v2102
  %v2112 = vadd.f32 %v2111, %v2107
  %v2113 = vrot.slane %v2112, 4
  %v2114 = vadd.f32 %v2112, %v2113
  %v2115 = vrot.slane %v2114, 2
  %v2116 = vadd.f32 %v2114, %v2115
  %v2117 = vrot.slane %v2116, 1
  %v2118 = vadd.f32 %v2116, %v2117
  %v2119 = vmul.f32 %v2021, %v2021
  %v2120 = vmul.f32 %v2022, %v2022
  %v2121 = vmul.f32 %v2023, %v2023
  %v2122 = vmul.f32 %v2024, %v2024
  %2123 = vmatprep.subr.mxu0 0.0
  %2124 = vmatpush1.msra.mxu0 %v70
  %2125 = vmatprep.subr.mxu0 0.0
  %2126 = vmatpush1.msra.mxu0 %v69
  %2127 = vmatprep.subr.mxu0 0.0
  %2128 = vmatpush1.msra.mxu0 %v68
  %2129 = vmatprep.subr.mxu0 0.0
  %2130 = vmatpush1.msra.mxu0 %v67
  %2131 = vmatprep.subr.mxu0 0.0
  %2132 = vmatpush1.msra.mxu0 %v66
  %2133 = vmatprep.subr.mxu0 0.0
  %2134 = vmatpush1.msra.mxu0 %v65
  %2135 = vmatprep.subr.mxu0 0.0
  %2136 = vmatpush1.msra.mxu0 %v64
  %2137 = vmatprep.subr.mxu0 0.0
  %2138 = vmatpush1.msra.mxu0 %v63
  %2139 = vmatprep.subr.mxu0 0.0
  %2140 = vmatpush1.msra.mxu0 %v62
  %2141 = vmatprep.subr.mxu0 0.0
  %2142 = vmatpush1.msra.mxu0 %v61
  %2143 = vmatprep.subr.mxu0 0.0
  %2144 = vmatpush1.msra.mxu0 %v60
  %2145 = vmatprep.subr.mxu0 0.0
  %2146 = vmatpush1.msra.mxu0 %v59
  %2147 = vmatprep.subr.mxu0 0.0
  %2148 = vmatpush1.msra.mxu0 %v58
  %2149 = vmatprep.subr.mxu0 0.0
  %2150 = vmatpush1.msra.mxu0 %v57
  %2151 = vmatprep.subr.mxu0 0.0
  %2152 = vmatpush1.msra.mxu0 %v56
  %2153 = vmatprep.subr.mxu0 0.0
  %2154 = vmatpush1.msra.mxu0 %v55
  %2155 = vmatprep.subr.mxu0 0.0
  %2156 = vmatpush2.msra.mxu0 0.0
  %2157 = vmatprep.subr.mxu0 0.0
  %2158 = vmatpush2.msra.mxu0 0.0
  %2159 = vmatprep.subr.mxu0 0.0
  %2160 = vmatpush2.msra.mxu0 0.0
  %2161 = vmatprep.subr.mxu0 0.0
  %2162 = vmatpush2.msra.mxu0 0.0
  %2163 = vmatprep.subr.mxu0 0.0
  %2164 = vmatpush2.msra.mxu0 0.0
  %2165 = vmatprep.subr.mxu0 0.0
  %2166 = vmatpush2.msra.mxu0 0.0
  %2167 = vmatprep.subr.mxu0 0.0
  %2168 = vmatpush2.msra.mxu0 0.0
  %2169 = vmatprep.subr.mxu0 0.0
  %2170 = vmatpush2.msra.mxu0 0.0
  %2171 = vmatprep.subr.mxu0 0.0
  %2172 = vmatpush2.msra.mxu0 0.0
  %2173 = vmatprep.subr.mxu0 0.0
  %2174 = vmatpush2.msra.mxu0 0.0
  %2175 = vmatprep.subr.mxu0 0.0
  %2176 = vmatpush2.msra.mxu0 0.0
  %2177 = vmatprep.subr.mxu0 0.0
  %2178 = vmatpush2.msra.mxu0 0.0
  %2179 = vmatprep.subr.mxu0 0.0
  %2180 = vmatpush2.msra.mxu0 0.0
  %2181 = vmatprep.subr.mxu0 0.0
  %2182 = vmatpush2.msra.mxu0 0.0
  %2183 = vmatprep.subr.mxu0 0.0
  %2184 = vmatpush2.msra.mxu0 0.0
  %2185 = vmatprep.subr.mxu0 0.0
  %2186 = vmatpush2.msra.mxu0 0.0
  %2187 = vmatprep.mubr.f32.mxu0 0.0
  %2188 = vmatmul.mubr.f32.gmra.mxu0 %v2119
  %v2189 = vpop.f32.mrf.mxu0
  %v2190 = vadd.f32 0.0, %v2189
  %v2191 = vpop.f32.mrf.mxu0
  %2192 = vmatprep.mubr.f32.mxu0 0.0
  %2193 = vmatmul.mubr.f32.gmra.mxu0 %v2120
  %v2194 = vpop.f32.mrf.mxu0
  %v2195 = vadd.f32 0.0, %v2194
  %v2196 = vpop.f32.mrf.mxu0
  %2197 = vmatprep.mubr.f32.mxu0 0.0
  %2198 = vmatmul.mubr.f32.gmra.mxu0 %v2121
  %v2199 = vpop.f32.mrf.mxu0
  %v2200 = vadd.f32 0.0, %v2199
  %v2201 = vpop.f32.mrf.mxu0
  %2202 = vmatprep.mubr.f32.mxu0 0.0
  %2203 = vmatmul.mubr.f32.gmra.mxu0 %v2122
  %v2204 = vpop.f32.mrf.mxu0
  %v2205 = vadd.f32 0.0, %v2204
  %v2206 = vpop.f32.mrf.mxu0
  %2207 = vdwg.mxu0
  %v2208 = vadd.f32 %v2190, %v2195
  %v2209 = vadd.f32 %v2208, %v2200
  %v2210 = vadd.f32 %v2209, %v2205
  %v2211 = vrot.slane %v2210, 4
  %v2212 = vadd.f32 %v2210, %v2211
  %v2213 = vrot.slane %v2212, 2
  %v2214 = vadd.f32 %v2212, %v2213
  %v2215 = vrot.slane %v2214, 1
  %v2216 = vadd.f32 %v2214, %v2215
  %v2217 = vmul.f32 %v2118, 0.001953125
  %v2218 = vmul.f32 %v2216, 0.001953125
  %v2219 = vmul.f32 %v2217, %v2217
  %v2220 = vsub.f32 %v2218, %v2219
  %v2221 = vadd.f32 %v2220, 1e-05
  %v2222 = vrsqrt.pop %v2221
  %v2223 = vmul.f32 %v2222, %v189
  %v2224 = vmul.f32 %v2217, %v2223
  %v2225 = vsub.f32 %v190, %v2224
  %v2226 = vlaneseq
  %v2227 = vshrl.u32 %v2226, 7
  %v2228 = vsub.s32 0, %v2227
  %v2229 = vrot.slane %v2223, %v2228
  %v2230 = vmul.f32 %v2021, %v2229
  %v2231 = vmul.f32 %v2022, %v2229
  %v2232 = vmul.f32 %v2023, %v2229
  %v2233 = vmul.f32 %v2024, %v2229
  %v2235 = vlaneseq
  %v2236 = vshrl.u32 %v2235, 7
  %v2237 = vsub.s32 0, %v2236
  %v2238 = vrot.slane %v2225, %v2237
  %v2240 = vadd.f32 %v2230, %v2238
  %v2241 = vadd.f32 %v2231, %v2238
  %v2242 = vadd.f32 %v2232, %v2238
  %v2243 = vadd.f32 %v2233, %v2238
  %v2244 = vmax.f32 %v2240, 0.0
  %v2245 = vmax.f32 %v2241, 0.0
  %v2246 = vmax.f32 %v2242, 0.0
  %v2247 = vmax.f32 %v2243, 0.0
  %v2248 = vld [vmem:[%s11] sm:$0x1]
  %v2249 = vld [vmem:[%s12] sm:$0x1]
  %v2250 = vld [vmem:[%s13] sm:$0x1]
  %2251 = vmatprep.subr.mxu0 0.0
  %2252 = vmatpush1.msra.mxu0 0.0
  %2253 = vmatprep.subr.mxu0 0.0
  %2254 = vmatpush1.msra.mxu0 0.0
  %2255 = vmatprep.subr.mxu0 0.0
  %2256 = vmatpush1.msra.mxu0 0.0
  %2257 = vmatprep.subr.mxu0 0.0
  %2258 = vmatpush1.msra.mxu0 0.0
  %2259 = vmatprep.subr.mxu0 0.0
  %2260 = vmatpush1.msra.mxu0 0.0
  %2261 = vmatprep.subr.mxu0 0.0
  %2262 = vmatpush1.msra.mxu0 0.0
  %2263 = vmatprep.subr.mxu0 0.0
  %2264 = vmatpush1.msra.mxu0 0.0
  %2265 = vmatprep.subr.mxu0 0.0
  %2266 = vmatpush1.msra.mxu0 0.0
  %2267 = vmatprep.subr.mxu0 0.0
  %2268 = vmatpush1.msra.mxu0 0.0
  %2269 = vmatprep.subr.mxu0 0.0
  %2270 = vmatpush1.msra.mxu0 0.0
  %2271 = vmatprep.subr.mxu0 0.0
  %2272 = vmatpush1.msra.mxu0 0.0
  %2273 = vmatprep.subr.mxu0 0.0
  %2274 = vmatpush1.msra.mxu0 0.0
  %2275 = vmatprep.subr.mxu0 0.0
  %2276 = vmatpush1.msra.mxu0 %v2247
  %2277 = vmatprep.subr.mxu0 0.0
  %2278 = vmatpush1.msra.mxu0 %v2246
  %2279 = vmatprep.subr.mxu0 0.0
  %2280 = vmatpush1.msra.mxu0 %v2245
  %2281 = vmatprep.subr.mxu0 0.0
  %2282 = vmatpush1.msra.mxu0 %v2244
  %2283 = vmatprep.subr.mxu0 0.0
  %2284 = vmatpush2.msra.mxu0 0.0
  %2285 = vmatprep.subr.mxu0 0.0
  %2286 = vmatpush2.msra.mxu0 0.0
  %2287 = vmatprep.subr.mxu0 0.0
  %2288 = vmatpush2.msra.mxu0 0.0
  %2289 = vmatprep.subr.mxu0 0.0
  %2290 = vmatpush2.msra.mxu0 0.0
  %2291 = vmatprep.subr.mxu0 0.0
  %2292 = vmatpush2.msra.mxu0 0.0
  %2293 = vmatprep.subr.mxu0 0.0
  %2294 = vmatpush2.msra.mxu0 0.0
  %2295 = vmatprep.subr.mxu0 0.0
  %2296 = vmatpush2.msra.mxu0 0.0
  %2297 = vmatprep.subr.mxu0 0.0
  %2298 = vmatpush2.msra.mxu0 0.0
  %2299 = vmatprep.subr.mxu0 0.0
  %2300 = vmatpush2.msra.mxu0 0.0
  %2301 = vmatprep.subr.mxu0 0.0
  %2302 = vmatpush2.msra.mxu0 0.0
  %2303 = vmatprep.subr.mxu0 0.0
  %2304 = vmatpush2.msra.mxu0 0.0
  %2305 = vmatprep.subr.mxu0 0.0
  %2306 = vmatpush2.msra.mxu0 0.0
  %2307 = vmatprep.subr.mxu0 0.0
  %2308 = vmatpush2.msra.mxu0 0.0
  %2309 = vmatprep.subr.mxu0 0.0
  %2310 = vmatpush2.msra.mxu0 0.0
  %2311 = vmatprep.subr.mxu0 0.0
  %2312 = vmatpush2.msra.mxu0 0.0
  %2313 = vmatprep.subr.mxu0 0.0
  %2314 = vmatpush2.msra.mxu0 0.0
  %2315 = vmatprep.mubr.f32.mxu0 0.0
  %2316 = vmatmul.mubr.f32.gmra.mxu0 %v193
  %v2317 = vpop.f32.mrf.mxu0
  %v2318 = vadd.f32 0.0, %v2317
  %v2319 = vpop.f32.mrf.mxu0
  %2320 = vmatprep.mubr.f32.mxu0 0.0
  %2321 = vmatmul.mubr.f32.gmra.mxu0 %v196
  %v2322 = vpop.f32.mrf.mxu0
  %v2323 = vadd.f32 0.0, %v2322
  %v2324 = vpop.f32.mrf.mxu0
  %2325 = vmatprep.mubr.f32.mxu0 0.0
  %2326 = vmatmul.mubr.f32.gmra.mxu0 %v199
  %v2327 = vpop.f32.mrf.mxu0
  %v2328 = vadd.f32 0.0, %v2327
  %v2329 = vpop.f32.mrf.mxu0
  %2330 = vmatprep.mubr.f32.mxu0 0.0
  %2331 = vmatmul.mubr.f32.gmra.mxu0 %v202
  %v2332 = vpop.f32.mrf.mxu0
  %v2333 = vadd.f32 0.0, %v2332
  %v2334 = vpop.f32.mrf.mxu0
  %2335 = vdwg.mxu0
  %2336 = vmatprep.subr.mxu0 0.0
  %2337 = vmatpush1.msra.mxu0 0.0
  %2338 = vmatprep.subr.mxu0 0.0
  %2339 = vmatpush1.msra.mxu0 0.0
  %2340 = vmatprep.subr.mxu0 0.0
  %2341 = vmatpush1.msra.mxu0 0.0
  %2342 = vmatprep.subr.mxu0 0.0
  %2343 = vmatpush1.msra.mxu0 0.0
  %2344 = vmatprep.subr.mxu0 0.0
  %2345 = vmatpush1.msra.mxu0 0.0
  %2346 = vmatprep.subr.mxu0 0.0
  %2347 = vmatpush1.msra.mxu0 0.0
  %2348 = vmatprep.subr.mxu0 0.0
  %2349 = vmatpush1.msra.mxu0 0.0
  %2350 = vmatprep.subr.mxu0 0.0
  %2351 = vmatpush1.msra.mxu0 0.0
  %2352 = vmatprep.subr.mxu0 0.0
  %2353 = vmatpush1.msra.mxu0 0.0
  %2354 = vmatprep.subr.mxu0 0.0
  %2355 = vmatpush1.msra.mxu0 0.0
  %2356 = vmatprep.subr.mxu0 0.0
  %2357 = vmatpush1.msra.mxu0 0.0
  %2358 = vmatprep.subr.mxu0 0.0
  %2359 = vmatpush1.msra.mxu0 0.0
  %2360 = vmatprep.subr.mxu0 0.0
  %2361 = vmatpush1.msra.mxu0 %v2247
  %2362 = vmatprep.subr.mxu0 0.0
  %2363 = vmatpush1.msra.mxu0 %v2246
  %2364 = vmatprep.subr.mxu0 0.0
  %2365 = vmatpush1.msra.mxu0 %v2245
  %2366 = vmatprep.subr.mxu0 0.0
  %2367 = vmatpush1.msra.mxu0 %v2244
  %2368 = vmatprep.subr.mxu0 0.0
  %2369 = vmatpush2.msra.mxu0 0.0
  %2370 = vmatprep.subr.mxu0 0.0
  %2371 = vmatpush2.msra.mxu0 0.0
  %2372 = vmatprep.subr.mxu0 0.0
  %2373 = vmatpush2.msra.mxu0 0.0
  %2374 = vmatprep.subr.mxu0 0.0
  %2375 = vmatpush2.msra.mxu0 0.0
  %2376 = vmatprep.subr.mxu0 0.0
  %2377 = vmatpush2.msra.mxu0 0.0
  %2378 = vmatprep.subr.mxu0 0.0
  %2379 = vmatpush2.msra.mxu0 0.0
  %2380 = vmatprep.subr.mxu0 0.0
  %2381 = vmatpush2.msra.mxu0 0.0
  %2382 = vmatprep.subr.mxu0 0.0
  %2383 = vmatpush2.msra.mxu0 0.0
  %2384 = vmatprep.subr.mxu0 0.0
  %2385 = vmatpush2.msra.mxu0 0.0
  %2386 = vmatprep.subr.mxu0 0.0
  %2387 = vmatpush2.msra.mxu0 0.0
  %2388 = vmatprep.subr.mxu0 0.0
  %2389 = vmatpush2.msra.mxu0 0.0
  %2390 = vmatprep.subr.mxu0 0.0
  %2391 = vmatpush2.msra.mxu0 0.0
  %2392 = vmatprep.subr.mxu0 0.0
  %2393 = vmatpush2.msra.mxu0 0.0
  %2394 = vmatprep.subr.mxu0 0.0
  %2395 = vmatpush2.msra.mxu0 0.0
  %2396 = vmatprep.subr.mxu0 0.0
  %2397 = vmatpush2.msra.mxu0 0.0
  %2398 = vmatprep.subr.mxu0 0.0
  %2399 = vmatpush2.msra.mxu0 0.0
  %2400 = vmatprep.mubr.f32.mxu0 0.0
  %2401 = vmatmul.mubr.f32.gmra.mxu0 %v290
  %v2402 = vpop.f32.mrf.mxu0
  %v2403 = vadd.f32 0.0, %v2402
  %v2404 = vpop.f32.mrf.mxu0
  %2405 = vmatprep.mubr.f32.mxu0 0.0
  %2406 = vmatmul.mubr.f32.gmra.mxu0 %v293
  %v2407 = vpop.f32.mrf.mxu0
  %v2408 = vadd.f32 0.0, %v2407
  %v2409 = vpop.f32.mrf.mxu0
  %2410 = vmatprep.mubr.f32.mxu0 0.0
  %2411 = vmatmul.mubr.f32.gmra.mxu0 %v296
  %v2412 = vpop.f32.mrf.mxu0
  %v2413 = vadd.f32 0.0, %v2412
  %v2414 = vpop.f32.mrf.mxu0
  %2415 = vmatprep.mubr.f32.mxu0 0.0
  %2416 = vmatmul.mubr.f32.gmra.mxu0 %v299
  %v2417 = vpop.f32.mrf.mxu0
  %v2418 = vadd.f32 0.0, %v2417
  %v2419 = vpop.f32.mrf.mxu0
  %2420 = vdwg.mxu0
  %v2421 = vld [vmem:[%s10] sm:$0xff]
  %v2422 = vld [vmem:[%s10 + $0x8] sm:$0xff]
  %v2423 = vld [vmem:[%s10 + $0x10] sm:$0xff]
  %v2424 = vld [vmem:[%s10 + $0x18] sm:$0xff]
  %v2425 = vld [vmem:[%s10 + $0x20] sm:$0xff]
  %v2426 = vld [vmem:[%s10 + $0x28] sm:$0xff]
  %v2427 = vld [vmem:[%s10 + $0x30] sm:$0xff]
  %v2428 = vld [vmem:[%s10 + $0x38] sm:$0xff]
  %v2429 = vld [vmem:[%s10 + $0x40] sm:$0xff]
  %v2430 = vld [vmem:[%s10 + $0x48] sm:$0xff]
  %v2431 = vld [vmem:[%s10 + $0x50] sm:$0xff]
  %v2432 = vld [vmem:[%s10 + $0x58] sm:$0xff]
  %v2433 = vld [vmem:[%s10 + $0x60] sm:$0xff]
  %v2434 = vld [vmem:[%s10 + $0x68] sm:$0xff]
  %v2435 = vld [vmem:[%s10 + $0x70] sm:$0xff]
  %v2436 = vld [vmem:[%s10 + $0x78] sm:$0xff]
  %s2437 = scalar_lea.vmem %s10, 128
  %v2438 = vld [vmem:[%s2437] sm:$0xff]
  %v2439 = vld [vmem:[%s2437 + $0x8] sm:$0xff]
  %v2440 = vld [vmem:[%s2437 + $0x10] sm:$0xff]
  %v2441 = vld [vmem:[%s2437 + $0x18] sm:$0xff]
  %v2442 = vld [vmem:[%s2437 + $0x20] sm:$0xff]
  %v2443 = vld [vmem:[%s2437 + $0x28] sm:$0xff]
  %v2444 = vld [vmem:[%s2437 + $0x30] sm:$0xff]
  %v2445 = vld [vmem:[%s2437 + $0x38] sm:$0xff]
  %v2446 = vld [vmem:[%s2437 + $0x40] sm:$0xff]
  %v2447 = vld [vmem:[%s2437 + $0x48] sm:$0xff]
  %v2448 = vld [vmem:[%s2437 + $0x50] sm:$0xff]
  %v2449 = vld [vmem:[%s2437 + $0x58] sm:$0xff]
  %v2450 = vld [vmem:[%s2437 + $0x60] sm:$0xff]
  %v2451 = vld [vmem:[%s2437 + $0x68] sm:$0xff]
  %v2452 = vld [vmem:[%s2437 + $0x70] sm:$0xff]
  %v2453 = vld [vmem:[%s2437 + $0x78] sm:$0xff]
  %2454 = vmatprep.subr.mxu0 0.0
  %2455 = vmatpush1.msra.mxu0 %v2453
  %2456 = vmatprep.subr.mxu0 0.0
  %2457 = vmatpush1.msra.mxu0 %v2452
  %2458 = vmatprep.subr.mxu0 0.0
  %2459 = vmatpush1.msra.mxu0 %v2451
  %2460 = vmatprep.subr.mxu0 0.0
  %2461 = vmatpush1.msra.mxu0 %v2450
  %2462 = vmatprep.subr.mxu0 0.0
  %2463 = vmatpush1.msra.mxu0 %v2449
  %2464 = vmatprep.subr.mxu0 0.0
  %2465 = vmatpush1.msra.mxu0 %v2448
  %2466 = vmatprep.subr.mxu0 0.0
  %2467 = vmatpush1.msra.mxu0 %v2447
  %2468 = vmatprep.subr.mxu0 0.0
  %2469 = vmatpush1.msra.mxu0 %v2446
  %2470 = vmatprep.subr.mxu0 0.0
  %2471 = vmatpush1.msra.mxu0 %v2445
  %2472 = vmatprep.subr.mxu0 0.0
  %2473 = vmatpush1.msra.mxu0 %v2444
  %2474 = vmatprep.subr.mxu0 0.0
  %2475 = vmatpush1.msra.mxu0 %v2443
  %2476 = vmatprep.subr.mxu0 0.0
  %2477 = vmatpush1.msra.mxu0 %v2442
  %2478 = vmatprep.subr.mxu0 0.0
  %2479 = vmatpush1.msra.mxu0 %v2441
  %2480 = vmatprep.subr.mxu0 0.0
  %2481 = vmatpush1.msra.mxu0 %v2440
  %2482 = vmatprep.subr.mxu0 0.0
  %2483 = vmatpush1.msra.mxu0 %v2439
  %2484 = vmatprep.subr.mxu0 0.0
  %2485 = vmatpush1.msra.mxu0 %v2438
  %2486 = vmatprep.subr.mxu0 0.0
  %2487 = vmatpush2.msra.mxu0 0.0
  %2488 = vmatprep.subr.mxu0 0.0
  %2489 = vmatpush2.msra.mxu0 0.0
  %2490 = vmatprep.subr.mxu0 0.0
  %2491 = vmatpush2.msra.mxu0 0.0
  %2492 = vmatprep.subr.mxu0 0.0
  %2493 = vmatpush2.msra.mxu0 0.0
  %2494 = vmatprep.subr.mxu0 0.0
  %2495 = vmatpush2.msra.mxu0 0.0
  %2496 = vmatprep.subr.mxu0 0.0
  %2497 = vmatpush2.msra.mxu0 0.0
  %2498 = vmatprep.subr.mxu0 0.0
  %2499 = vmatpush2.msra.mxu0 0.0
  %2500 = vmatprep.subr.mxu0 0.0
  %2501 = vmatpush2.msra.mxu0 0.0
  %2502 = vmatprep.subr.mxu0 0.0
  %2503 = vmatpush2.msra.mxu0 0.0
  %2504 = vmatprep.subr.mxu0 0.0
  %2505 = vmatpush2.msra.mxu0 0.0
  %2506 = vmatprep.subr.mxu0 0.0
  %2507 = vmatpush2.msra.mxu0 0.0
  %2508 = vmatprep.subr.mxu0 0.0
  %2509 = vmatpush2.msra.mxu0 0.0
  %2510 = vmatprep.subr.mxu0 0.0
  %2511 = vmatpush2.msra.mxu0 0.0
  %2512 = vmatprep.subr.mxu0 0.0
  %2513 = vmatpush2.msra.mxu0 0.0
  %2514 = vmatprep.subr.mxu0 0.0
  %2515 = vmatpush2.msra.mxu0 0.0
  %2516 = vmatprep.subr.mxu0 0.0
  %2517 = vmatpush2.msra.mxu0 0.0
  %2518 = vmatprep.mubr.f32.mxu0 0.0
  %2519 = vmatmul.mubr.f32.gmra.mxu0 %v2244
  %v2520 = vpop.f32.mrf.mxu0
  %v2521 = vadd.f32 0.0, %v2520
  %v2522 = vpop.f32.mrf.mxu0
  %2523 = vmatprep.mubr.f32.mxu0 0.0
  %2524 = vmatmul.mubr.f32.gmra.mxu0 %v2245
  %v2525 = vpop.f32.mrf.mxu0
  %v2526 = vadd.f32 0.0, %v2525
  %v2527 = vpop.f32.mrf.mxu0
  %2528 = vmatprep.mubr.f32.mxu0 0.0
  %2529 = vmatmul.mubr.f32.gmra.mxu0 %v2246
  %v2530 = vpop.f32.mrf.mxu0
  %v2531 = vadd.f32 0.0, %v2530
  %v2532 = vpop.f32.mrf.mxu0
  %2533 = vmatprep.mubr.f32.mxu0 0.0
  %2534 = vmatmul.mubr.f32.gmra.mxu0 %v2247
  %v2535 = vpop.f32.mrf.mxu0
  %v2536 = vadd.f32 0.0, %v2535
  %v2537 = vpop.f32.mrf.mxu0
  %2538 = vdwg.mxu0
  %2539 = vmatprep.subr.mxu0 0.0
  %2540 = vmatpush1.msra.mxu0 %v2436
  %2541 = vmatprep.subr.mxu0 0.0
  %2542 = vmatpush1.msra.mxu0 %v2435
  %2543 = vmatprep.subr.mxu0 0.0
  %2544 = vmatpush1.msra.mxu0 %v2434
  %2545 = vmatprep.subr.mxu0 0.0
  %2546 = vmatpush1.msra.mxu0 %v2433
  %2547 = vmatprep.subr.mxu0 0.0
  %2548 = vmatpush1.msra.mxu0 %v2432
  %2549 = vmatprep.subr.mxu0 0.0
  %2550 = vmatpush1.msra.mxu0 %v2431
  %2551 = vmatprep.subr.mxu0 0.0
  %2552 = vmatpush1.msra.mxu0 %v2430
  %2553 = vmatprep.subr.mxu0 0.0
  %2554 = vmatpush1.msra.mxu0 %v2429
  %2555 = vmatprep.subr.mxu0 0.0
  %2556 = vmatpush1.msra.mxu0 %v2428
  %2557 = vmatprep.subr.mxu0 0.0
  %2558 = vmatpush1.msra.mxu0 %v2427
  %2559 = vmatprep.subr.mxu0 0.0
  %2560 = vmatpush1.msra.mxu0 %v2426
  %2561 = vmatprep.subr.mxu0 0.0
  %2562 = vmatpush1.msra.mxu0 %v2425
  %2563 = vmatprep.subr.mxu0 0.0
  %2564 = vmatpush1.msra.mxu0 %v2424
  %2565 = vmatprep.subr.mxu0 0.0
  %2566 = vmatpush1.msra.mxu0 %v2423
  %2567 = vmatprep.subr.mxu0 0.0
  %2568 = vmatpush1.msra.mxu0 %v2422
  %2569 = vmatprep.subr.mxu0 0.0
  %2570 = vmatpush1.msra.mxu0 %v2421
  %2571 = vmatprep.subr.mxu0 0.0
  %2572 = vmatpush2.msra.mxu0 0.0
  %2573 = vmatprep.subr.mxu0 0.0
  %2574 = vmatpush2.msra.mxu0 0.0
  %2575 = vmatprep.subr.mxu0 0.0
  %2576 = vmatpush2.msra.mxu0 0.0
  %2577 = vmatprep.subr.mxu0 0.0
  %2578 = vmatpush2.msra.mxu0 0.0
  %2579 = vmatprep.subr.mxu0 0.0
  %2580 = vmatpush2.msra.mxu0 0.0
  %2581 = vmatprep.subr.mxu0 0.0
  %2582 = vmatpush2.msra.mxu0 0.0
  %2583 = vmatprep.subr.mxu0 0.0
  %2584 = vmatpush2.msra.mxu0 0.0
  %2585 = vmatprep.subr.mxu0 0.0
  %2586 = vmatpush2.msra.mxu0 0.0
  %2587 = vmatprep.subr.mxu0 0.0
  %2588 = vmatpush2.msra.mxu0 0.0
  %2589 = vmatprep.subr.mxu0 0.0
  %2590 = vmatpush2.msra.mxu0 0.0
  %2591 = vmatprep.subr.mxu0 0.0
  %2592 = vmatpush2.msra.mxu0 0.0
  %2593 = vmatprep.subr.mxu0 0.0
  %2594 = vmatpush2.msra.mxu0 0.0
  %2595 = vmatprep.subr.mxu0 0.0
  %2596 = vmatpush2.msra.mxu0 0.0
  %2597 = vmatprep.subr.mxu0 0.0
  %2598 = vmatpush2.msra.mxu0 0.0
  %2599 = vmatprep.subr.mxu0 0.0
  %2600 = vmatpush2.msra.mxu0 0.0
  %2601 = vmatprep.subr.mxu0 0.0
  %2602 = vmatpush2.msra.mxu0 0.0
  %2603 = vmatprep.mubr.f32.mxu0 0.0
  %2604 = vmatmul.mubr.f32.gmra.mxu0 %v2318
  %v2605 = vpop.f32.mrf.mxu0
  %v2606 = vadd.f32 %v2521, %v2605
  %v2607 = vpop.f32.mrf.mxu0
  %2608 = vmatprep.mubr.f32.mxu0 0.0
  %2609 = vmatmul.mubr.f32.gmra.mxu0 %v2323
  %v2610 = vpop.f32.mrf.mxu0
  %v2611 = vadd.f32 %v2526, %v2610
  %v2612 = vpop.f32.mrf.mxu0
  %2613 = vmatprep.mubr.f32.mxu0 0.0
  %2614 = vmatmul.mubr.f32.gmra.mxu0 %v2328
  %v2615 = vpop.f32.mrf.mxu0
  %v2616 = vadd.f32 %v2531, %v2615
  %v2617 = vpop.f32.mrf.mxu0
  %2618 = vmatprep.mubr.f32.mxu0 0.0
  %2619 = vmatmul.mubr.f32.gmra.mxu0 %v2333
  %v2620 = vpop.f32.mrf.mxu0
  %v2621 = vadd.f32 %v2536, %v2620
  %v2622 = vpop.f32.mrf.mxu0
  %2623 = vdwg.mxu0
  %s2624 = scalar_lea.vmem %s10, 256
  %v2625 = vld [vmem:[%s2624] sm:$0xff]
  %v2626 = vld [vmem:[%s2624 + $0x8] sm:$0xff]
  %v2627 = vld [vmem:[%s2624 + $0x10] sm:$0xff]
  %v2628 = vld [vmem:[%s2624 + $0x18] sm:$0xff]
  %v2629 = vld [vmem:[%s2624 + $0x20] sm:$0xff]
  %v2630 = vld [vmem:[%s2624 + $0x28] sm:$0xff]
  %v2631 = vld [vmem:[%s2624 + $0x30] sm:$0xff]
  %v2632 = vld [vmem:[%s2624 + $0x38] sm:$0xff]
  %v2633 = vld [vmem:[%s2624 + $0x40] sm:$0xff]
  %v2634 = vld [vmem:[%s2624 + $0x48] sm:$0xff]
  %v2635 = vld [vmem:[%s2624 + $0x50] sm:$0xff]
  %v2636 = vld [vmem:[%s2624 + $0x58] sm:$0xff]
  %v2637 = vld [vmem:[%s2624 + $0x60] sm:$0xff]
  %v2638 = vld [vmem:[%s2624 + $0x68] sm:$0xff]
  %v2639 = vld [vmem:[%s2624 + $0x70] sm:$0xff]
  %v2640 = vld [vmem:[%s2624 + $0x78] sm:$0xff]
  %2641 = vmatprep.subr.mxu0 0.0
  %2642 = vmatpush1.msra.mxu0 %v2640
  %2643 = vmatprep.subr.mxu0 0.0
  %2644 = vmatpush1.msra.mxu0 %v2639
  %2645 = vmatprep.subr.mxu0 0.0
  %2646 = vmatpush1.msra.mxu0 %v2638
  %2647 = vmatprep.subr.mxu0 0.0
  %2648 = vmatpush1.msra.mxu0 %v2637
  %2649 = vmatprep.subr.mxu0 0.0
  %2650 = vmatpush1.msra.mxu0 %v2636
  %2651 = vmatprep.subr.mxu0 0.0
  %2652 = vmatpush1.msra.mxu0 %v2635
  %2653 = vmatprep.subr.mxu0 0.0
  %2654 = vmatpush1.msra.mxu0 %v2634
  %2655 = vmatprep.subr.mxu0 0.0
  %2656 = vmatpush1.msra.mxu0 %v2633
  %2657 = vmatprep.subr.mxu0 0.0
  %2658 = vmatpush1.msra.mxu0 %v2632
  %2659 = vmatprep.subr.mxu0 0.0
  %2660 = vmatpush1.msra.mxu0 %v2631
  %2661 = vmatprep.subr.mxu0 0.0
  %2662 = vmatpush1.msra.mxu0 %v2630
  %2663 = vmatprep.subr.mxu0 0.0
  %2664 = vmatpush1.msra.mxu0 %v2629
  %2665 = vmatprep.subr.mxu0 0.0
  %2666 = vmatpush1.msra.mxu0 %v2628
  %2667 = vmatprep.subr.mxu0 0.0
  %2668 = vmatpush1.msra.mxu0 %v2627
  %2669 = vmatprep.subr.mxu0 0.0
  %2670 = vmatpush1.msra.mxu0 %v2626
  %2671 = vmatprep.subr.mxu0 0.0
  %2672 = vmatpush1.msra.mxu0 %v2625
  %2673 = vmatprep.subr.mxu0 0.0
  %2674 = vmatpush2.msra.mxu0 0.0
  %2675 = vmatprep.subr.mxu0 0.0
  %2676 = vmatpush2.msra.mxu0 0.0
  %2677 = vmatprep.subr.mxu0 0.0
  %2678 = vmatpush2.msra.mxu0 0.0
  %2679 = vmatprep.subr.mxu0 0.0
  %2680 = vmatpush2.msra.mxu0 0.0
  %2681 = vmatprep.subr.mxu0 0.0
  %2682 = vmatpush2.msra.mxu0 0.0
  %2683 = vmatprep.subr.mxu0 0.0
  %2684 = vmatpush2.msra.mxu0 0.0
  %2685 = vmatprep.subr.mxu0 0.0
  %2686 = vmatpush2.msra.mxu0 0.0
  %2687 = vmatprep.subr.mxu0 0.0
  %2688 = vmatpush2.msra.mxu0 0.0
  %2689 = vmatprep.subr.mxu0 0.0
  %2690 = vmatpush2.msra.mxu0 0.0
  %2691 = vmatprep.subr.mxu0 0.0
  %2692 = vmatpush2.msra.mxu0 0.0
  %2693 = vmatprep.subr.mxu0 0.0
  %2694 = vmatpush2.msra.mxu0 0.0
  %2695 = vmatprep.subr.mxu0 0.0
  %2696 = vmatpush2.msra.mxu0 0.0
  %2697 = vmatprep.subr.mxu0 0.0
  %2698 = vmatpush2.msra.mxu0 0.0
  %2699 = vmatprep.subr.mxu0 0.0
  %2700 = vmatpush2.msra.mxu0 0.0
  %2701 = vmatprep.subr.mxu0 0.0
  %2702 = vmatpush2.msra.mxu0 0.0
  %2703 = vmatprep.subr.mxu0 0.0
  %2704 = vmatpush2.msra.mxu0 0.0
  %2705 = vmatprep.mubr.f32.mxu0 0.0
  %2706 = vmatmul.mubr.f32.gmra.mxu0 %v2403
  %v2707 = vpop.f32.mrf.mxu0
  %v2708 = vadd.f32 0.0, %v2707
  %v2709 = vpop.f32.mrf.mxu0
  %2710 = vmatprep.mubr.f32.mxu0 0.0
  %2711 = vmatmul.mubr.f32.gmra.mxu0 %v2408
  %v2712 = vpop.f32.mrf.mxu0
  %v2713 = vadd.f32 0.0, %v2712
  %v2714 = vpop.f32.mrf.mxu0
  %2715 = vmatprep.mubr.f32.mxu0 0.0
  %2716 = vmatmul.mubr.f32.gmra.mxu0 %v2413
  %v2717 = vpop.f32.mrf.mxu0
  %v2718 = vadd.f32 0.0, %v2717
  %v2719 = vpop.f32.mrf.mxu0
  %2720 = vmatprep.mubr.f32.mxu0 0.0
  %2721 = vmatmul.mubr.f32.gmra.mxu0 %v2418
  %v2722 = vpop.f32.mrf.mxu0
  %v2723 = vadd.f32 0.0, %v2722
  %v2724 = vpop.f32.mrf.mxu0
  %2725 = vdwg.mxu0
  %v2726 = vadd.f32 %v2606, %v2708
  %v2727 = vadd.f32 %v2611, %v2713
  %v2728 = vadd.f32 %v2616, %v2718
  %v2729 = vadd.f32 %v2621, %v2723
  %v2731 = vlaneseq
  %v2732 = vshrl.u32 %v2731, 7
  %v2733 = vsub.s32 0, %v2732
  %v2734 = vrot.slane %v2248, %v2733
  %v2736 = vadd.f32 %v2726, %v2734
  %v2737 = vadd.f32 %v2727, %v2734
  %v2738 = vadd.f32 %v2728, %v2734
  %v2739 = vadd.f32 %v2729, %v2734
  %2740 = vmatprep.subr.mxu0 0.0
  %2741 = vmatpush1.msra.mxu0 %v70
  %2742 = vmatprep.subr.mxu0 0.0
  %2743 = vmatpush1.msra.mxu0 %v69
  %2744 = vmatprep.subr.mxu0 0.0
  %2745 = vmatpush1.msra.mxu0 %v68
  %2746 = vmatprep.subr.mxu0 0.0
  %2747 = vmatpush1.msra.mxu0 %v67
  %2748 = vmatprep.subr.mxu0 0.0
  %2749 = vmatpush1.msra.mxu0 %v66
  %2750 = vmatprep.subr.mxu0 0.0
  %2751 = vmatpush1.msra.mxu0 %v65
  %2752 = vmatprep.subr.mxu0 0.0
  %2753 = vmatpush1.msra.mxu0 %v64
  %2754 = vmatprep.subr.mxu0 0.0
  %2755 = vmatpush1.msra.mxu0 %v63
  %2756 = vmatprep.subr.mxu0 0.0
  %2757 = vmatpush1.msra.mxu0 %v62
  %2758 = vmatprep.subr.mxu0 0.0
  %2759 = vmatpush1.msra.mxu0 %v61
  %2760 = vmatprep.subr.mxu0 0.0
  %2761 = vmatpush1.msra.mxu0 %v60
  %2762 = vmatprep.subr.mxu0 0.0
  %2763 = vmatpush1.msra.mxu0 %v59
  %2764 = vmatprep.subr.mxu0 0.0
  %2765 = vmatpush1.msra.mxu0 %v58
  %2766 = vmatprep.subr.mxu0 0.0
  %2767 = vmatpush1.msra.mxu0 %v57
  %2768 = vmatprep.subr.mxu0 0.0
  %2769 = vmatpush1.msra.mxu0 %v56
  %2770 = vmatprep.subr.mxu0 0.0
  %2771 = vmatpush1.msra.mxu0 %v55
  %2772 = vmatprep.subr.mxu0 0.0
  %2773 = vmatpush2.msra.mxu0 0.0
  %2774 = vmatprep.subr.mxu0 0.0
  %2775 = vmatpush2.msra.mxu0 0.0
  %2776 = vmatprep.subr.mxu0 0.0
  %2777 = vmatpush2.msra.mxu0 0.0
  %2778 = vmatprep.subr.mxu0 0.0
  %2779 = vmatpush2.msra.mxu0 0.0
  %2780 = vmatprep.subr.mxu0 0.0
  %2781 = vmatpush2.msra.mxu0 0.0
  %2782 = vmatprep.subr.mxu0 0.0
  %2783 = vmatpush2.msra.mxu0 0.0
  %2784 = vmatprep.subr.mxu0 0.0
  %2785 = vmatpush2.msra.mxu0 0.0
  %2786 = vmatprep.subr.mxu0 0.0
  %2787 = vmatpush2.msra.mxu0 0.0
  %2788 = vmatprep.subr.mxu0 0.0
  %2789 = vmatpush2.msra.mxu0 0.0
  %2790 = vmatprep.subr.mxu0 0.0
  %2791 = vmatpush2.msra.mxu0 0.0
  %2792 = vmatprep.subr.mxu0 0.0
  %2793 = vmatpush2.msra.mxu0 0.0
  %2794 = vmatprep.subr.mxu0 0.0
  %2795 = vmatpush2.msra.mxu0 0.0
  %2796 = vmatprep.subr.mxu0 0.0
  %2797 = vmatpush2.msra.mxu0 0.0
  %2798 = vmatprep.subr.mxu0 0.0
  %2799 = vmatpush2.msra.mxu0 0.0
  %2800 = vmatprep.subr.mxu0 0.0
  %2801 = vmatpush2.msra.mxu0 0.0
  %2802 = vmatprep.subr.mxu0 0.0
  %2803 = vmatpush2.msra.mxu0 0.0
  %2804 = vmatprep.mubr.f32.mxu0 0.0
  %2805 = vmatmul.mubr.f32.gmra.mxu0 %v2736
  %v2806 = vpop.f32.mrf.mxu0
  %v2807 = vadd.f32 0.0, %v2806
  %v2808 = vpop.f32.mrf.mxu0
  %2809 = vmatprep.mubr.f32.mxu0 0.0
  %2810 = vmatmul.mubr.f32.gmra.mxu0 %v2737
  %v2811 = vpop.f32.mrf.mxu0
  %v2812 = vadd.f32 0.0, %v2811
  %v2813 = vpop.f32.mrf.mxu0
  %2814 = vmatprep.mubr.f32.mxu0 0.0
  %2815 = vmatmul.mubr.f32.gmra.mxu0 %v2738
  %v2816 = vpop.f32.mrf.mxu0
  %v2817 = vadd.f32 0.0, %v2816
  %v2818 = vpop.f32.mrf.mxu0
  %2819 = vmatprep.mubr.f32.mxu0 0.0
  %2820 = vmatmul.mubr.f32.gmra.mxu0 %v2739
  %v2821 = vpop.f32.mrf.mxu0
  %v2822 = vadd.f32 0.0, %v2821
  %v2823 = vpop.f32.mrf.mxu0
  %2824 = vdwg.mxu0
  %v2825 = vadd.f32 %v2807, %v2812
  %v2826 = vadd.f32 %v2825, %v2817
  %v2827 = vadd.f32 %v2826, %v2822
  %v2828 = vrot.slane %v2827, 4
  %v2829 = vadd.f32 %v2827, %v2828
  %v2830 = vrot.slane %v2829, 2
  %v2831 = vadd.f32 %v2829, %v2830
  %v2832 = vrot.slane %v2831, 1
  %v2833 = vadd.f32 %v2831, %v2832
  %v2834 = vmul.f32 %v2736, %v2736
  %v2835 = vmul.f32 %v2737, %v2737
  %v2836 = vmul.f32 %v2738, %v2738
  %v2837 = vmul.f32 %v2739, %v2739
  %2838 = vmatprep.subr.mxu0 0.0
  %2839 = vmatpush1.msra.mxu0 %v70
  %2840 = vmatprep.subr.mxu0 0.0
  %2841 = vmatpush1.msra.mxu0 %v69
  %2842 = vmatprep.subr.mxu0 0.0
  %2843 = vmatpush1.msra.mxu0 %v68
  %2844 = vmatprep.subr.mxu0 0.0
  %2845 = vmatpush1.msra.mxu0 %v67
  %2846 = vmatprep.subr.mxu0 0.0
  %2847 = vmatpush1.msra.mxu0 %v66
  %2848 = vmatprep.subr.mxu0 0.0
  %2849 = vmatpush1.msra.mxu0 %v65
  %2850 = vmatprep.subr.mxu0 0.0
  %2851 = vmatpush1.msra.mxu0 %v64
  %2852 = vmatprep.subr.mxu0 0.0
  %2853 = vmatpush1.msra.mxu0 %v63
  %2854 = vmatprep.subr.mxu0 0.0
  %2855 = vmatpush1.msra.mxu0 %v62
  %2856 = vmatprep.subr.mxu0 0.0
  %2857 = vmatpush1.msra.mxu0 %v61
  %2858 = vmatprep.subr.mxu0 0.0
  %2859 = vmatpush1.msra.mxu0 %v60
  %2860 = vmatprep.subr.mxu0 0.0
  %2861 = vmatpush1.msra.mxu0 %v59
  %2862 = vmatprep.subr.mxu0 0.0
  %2863 = vmatpush1.msra.mxu0 %v58
  %2864 = vmatprep.subr.mxu0 0.0
  %2865 = vmatpush1.msra.mxu0 %v57
  %2866 = vmatprep.subr.mxu0 0.0
  %2867 = vmatpush1.msra.mxu0 %v56
  %2868 = vmatprep.subr.mxu0 0.0
  %2869 = vmatpush1.msra.mxu0 %v55
  %2870 = vmatprep.subr.mxu0 0.0
  %2871 = vmatpush2.msra.mxu0 0.0
  %2872 = vmatprep.subr.mxu0 0.0
  %2873 = vmatpush2.msra.mxu0 0.0
  %2874 = vmatprep.subr.mxu0 0.0
  %2875 = vmatpush2.msra.mxu0 0.0
  %2876 = vmatprep.subr.mxu0 0.0
  %2877 = vmatpush2.msra.mxu0 0.0
  %2878 = vmatprep.subr.mxu0 0.0
  %2879 = vmatpush2.msra.mxu0 0.0
  %2880 = vmatprep.subr.mxu0 0.0
  %2881 = vmatpush2.msra.mxu0 0.0
  %2882 = vmatprep.subr.mxu0 0.0
  %2883 = vmatpush2.msra.mxu0 0.0
  %2884 = vmatprep.subr.mxu0 0.0
  %2885 = vmatpush2.msra.mxu0 0.0
  %2886 = vmatprep.subr.mxu0 0.0
  %2887 = vmatpush2.msra.mxu0 0.0
  %2888 = vmatprep.subr.mxu0 0.0
  %2889 = vmatpush2.msra.mxu0 0.0
  %2890 = vmatprep.subr.mxu0 0.0
  %2891 = vmatpush2.msra.mxu0 0.0
  %2892 = vmatprep.subr.mxu0 0.0
  %2893 = vmatpush2.msra.mxu0 0.0
  %2894 = vmatprep.subr.mxu0 0.0
  %2895 = vmatpush2.msra.mxu0 0.0
  %2896 = vmatprep.subr.mxu0 0.0
  %2897 = vmatpush2.msra.mxu0 0.0
  %2898 = vmatprep.subr.mxu0 0.0
  %2899 = vmatpush2.msra.mxu0 0.0
  %2900 = vmatprep.subr.mxu0 0.0
  %2901 = vmatpush2.msra.mxu0 0.0
  %2902 = vmatprep.mubr.f32.mxu0 0.0
  %2903 = vmatmul.mubr.f32.gmra.mxu0 %v2834
  %v2904 = vpop.f32.mrf.mxu0
  %v2905 = vadd.f32 0.0, %v2904
  %v2906 = vpop.f32.mrf.mxu0
  %2907 = vmatprep.mubr.f32.mxu0 0.0
  %2908 = vmatmul.mubr.f32.gmra.mxu0 %v2835
  %v2909 = vpop.f32.mrf.mxu0
  %v2910 = vadd.f32 0.0, %v2909
  %v2911 = vpop.f32.mrf.mxu0
  %2912 = vmatprep.mubr.f32.mxu0 0.0
  %2913 = vmatmul.mubr.f32.gmra.mxu0 %v2836
  %v2914 = vpop.f32.mrf.mxu0
  %v2915 = vadd.f32 0.0, %v2914
  %v2916 = vpop.f32.mrf.mxu0
  %2917 = vmatprep.mubr.f32.mxu0 0.0
  %2918 = vmatmul.mubr.f32.gmra.mxu0 %v2837
  %v2919 = vpop.f32.mrf.mxu0
  %v2920 = vadd.f32 0.0, %v2919
  %v2921 = vpop.f32.mrf.mxu0
  %2922 = vdwg.mxu0
  %v2923 = vadd.f32 %v2905, %v2910
  %v2924 = vadd.f32 %v2923, %v2915
  %v2925 = vadd.f32 %v2924, %v2920
  %v2926 = vrot.slane %v2925, 4
  %v2927 = vadd.f32 %v2925, %v2926
  %v2928 = vrot.slane %v2927, 2
  %v2929 = vadd.f32 %v2927, %v2928
  %v2930 = vrot.slane %v2929, 1
  %v2931 = vadd.f32 %v2929, %v2930
  %v2932 = vmul.f32 %v2833, 0.001953125
  %v2933 = vmul.f32 %v2931, 0.001953125
  %v2934 = vmul.f32 %v2932, %v2932
  %v2935 = vsub.f32 %v2933, %v2934
  %v2936 = vadd.f32 %v2935, 1e-05
  %v2937 = vrsqrt.pop %v2936
  %v2938 = vmul.f32 %v2937, %v2249
  %v2939 = vmul.f32 %v2932, %v2938
  %v2940 = vsub.f32 %v2250, %v2939
  %v2941 = vlaneseq
  %v2942 = vshrl.u32 %v2941, 7
  %v2943 = vsub.s32 0, %v2942
  %v2944 = vrot.slane %v2938, %v2943
  %v2945 = vmul.f32 %v2736, %v2944
  %v2946 = vmul.f32 %v2737, %v2944
  %v2947 = vmul.f32 %v2738, %v2944
  %v2948 = vmul.f32 %v2739, %v2944
  %v2950 = vlaneseq
  %v2951 = vshrl.u32 %v2950, 7
  %v2952 = vsub.s32 0, %v2951
  %v2953 = vrot.slane %v2940, %v2952
  %v2955 = vadd.f32 %v2945, %v2953
  %v2956 = vadd.f32 %v2946, %v2953
  %v2957 = vadd.f32 %v2947, %v2953
  %v2958 = vadd.f32 %v2948, %v2953
  %v2959 = vmax.f32 %v2955, 0.0
  %v2960 = vmax.f32 %v2956, 0.0
  %v2961 = vmax.f32 %v2957, 0.0
  %v2962 = vmax.f32 %v2958, 0.0
  %v2963 = vadd.f32 %v2244, %v2959
  %v2964 = vadd.f32 %v2245, %v2960
  %v2965 = vadd.f32 %v2246, %v2961
  %v2966 = vadd.f32 %v2247, %v2962
  %2967 = vmatprep.subr.mxu0 0.0
  %2968 = vmatpush1.msra.mxu0 0.0
  %2969 = vmatprep.subr.mxu0 0.0
  %2970 = vmatpush1.msra.mxu0 0.0
  %2971 = vmatprep.subr.mxu0 0.0
  %2972 = vmatpush1.msra.mxu0 0.0
  %2973 = vmatprep.subr.mxu0 0.0
  %2974 = vmatpush1.msra.mxu0 0.0
  %2975 = vmatprep.subr.mxu0 0.0
  %2976 = vmatpush1.msra.mxu0 0.0
  %2977 = vmatprep.subr.mxu0 0.0
  %2978 = vmatpush1.msra.mxu0 0.0
  %2979 = vmatprep.subr.mxu0 0.0
  %2980 = vmatpush1.msra.mxu0 0.0
  %2981 = vmatprep.subr.mxu0 0.0
  %2982 = vmatpush1.msra.mxu0 0.0
  %2983 = vmatprep.subr.mxu0 0.0
  %2984 = vmatpush1.msra.mxu0 0.0
  %2985 = vmatprep.subr.mxu0 0.0
  %2986 = vmatpush1.msra.mxu0 0.0
  %2987 = vmatprep.subr.mxu0 0.0
  %2988 = vmatpush1.msra.mxu0 0.0
  %2989 = vmatprep.subr.mxu0 0.0
  %2990 = vmatpush1.msra.mxu0 0.0
  %2991 = vmatprep.subr.mxu0 0.0
  %2992 = vmatpush1.msra.mxu0 %v2966
  %2993 = vmatprep.subr.mxu0 0.0
  %2994 = vmatpush1.msra.mxu0 %v2965
  %2995 = vmatprep.subr.mxu0 0.0
  %2996 = vmatpush1.msra.mxu0 %v2964
  %2997 = vmatprep.subr.mxu0 0.0
  %2998 = vmatpush1.msra.mxu0 %v2963
  %2999 = vmatprep.subr.mxu0 0.0
  %3000 = vmatpush2.msra.mxu0 0.0
  %3001 = vmatprep.subr.mxu0 0.0
  %3002 = vmatpush2.msra.mxu0 0.0
  %3003 = vmatprep.subr.mxu0 0.0
  %3004 = vmatpush2.msra.mxu0 0.0
  %3005 = vmatprep.subr.mxu0 0.0
  %3006 = vmatpush2.msra.mxu0 0.0
  %3007 = vmatprep.subr.mxu0 0.0
  %3008 = vmatpush2.msra.mxu0 0.0
  %3009 = vmatprep.subr.mxu0 0.0
  %3010 = vmatpush2.msra.mxu0 0.0
  %3011 = vmatprep.subr.mxu0 0.0
  %3012 = vmatpush2.msra.mxu0 0.0
  %3013 = vmatprep.subr.mxu0 0.0
  %3014 = vmatpush2.msra.mxu0 0.0
  %3015 = vmatprep.subr.mxu0 0.0
  %3016 = vmatpush2.msra.mxu0 0.0
  %3017 = vmatprep.subr.mxu0 0.0
  %3018 = vmatpush2.msra.mxu0 0.0
  %3019 = vmatprep.subr.mxu0 0.0
  %3020 = vmatpush2.msra.mxu0 0.0
  %3021 = vmatprep.subr.mxu0 0.0
  %3022 = vmatpush2.msra.mxu0 0.0
  %3023 = vmatprep.subr.mxu0 0.0
  %3024 = vmatpush2.msra.mxu0 0.0
  %3025 = vmatprep.subr.mxu0 0.0
  %3026 = vmatpush2.msra.mxu0 0.0
  %3027 = vmatprep.subr.mxu0 0.0
  %3028 = vmatpush2.msra.mxu0 0.0
  %3029 = vmatprep.subr.mxu0 0.0
  %3030 = vmatpush2.msra.mxu0 0.0
  %3031 = vmatprep.mubr.f32.mxu0 0.0
  %3032 = vmatmul.mubr.f32.gmra.mxu0 %v193
  %v3033 = vpop.f32.mrf.mxu0
  %v3034 = vadd.f32 0.0, %v3033
  %v3035 = vpop.f32.mrf.mxu0
  %3036 = vmatprep.mubr.f32.mxu0 0.0
  %3037 = vmatmul.mubr.f32.gmra.mxu0 %v196
  %v3038 = vpop.f32.mrf.mxu0
  %v3039 = vadd.f32 0.0, %v3038
  %v3040 = vpop.f32.mrf.mxu0
  %3041 = vmatprep.mubr.f32.mxu0 0.0
  %3042 = vmatmul.mubr.f32.gmra.mxu0 %v199
  %v3043 = vpop.f32.mrf.mxu0
  %v3044 = vadd.f32 0.0, %v3043
  %v3045 = vpop.f32.mrf.mxu0
  %3046 = vmatprep.mubr.f32.mxu0 0.0
  %3047 = vmatmul.mubr.f32.gmra.mxu0 %v202
  %v3048 = vpop.f32.mrf.mxu0
  %v3049 = vadd.f32 0.0, %v3048
  %v3050 = vpop.f32.mrf.mxu0
  %3051 = vdwg.mxu0
  %3052 = vmatprep.subr.mxu0 0.0
  %3053 = vmatpush1.msra.mxu0 0.0
  %3054 = vmatprep.subr.mxu0 0.0
  %3055 = vmatpush1.msra.mxu0 0.0
  %3056 = vmatprep.subr.mxu0 0.0
  %3057 = vmatpush1.msra.mxu0 0.0
  %3058 = vmatprep.subr.mxu0 0.0
  %3059 = vmatpush1.msra.mxu0 0.0
  %3060 = vmatprep.subr.mxu0 0.0
  %3061 = vmatpush1.msra.mxu0 0.0
  %3062 = vmatprep.subr.mxu0 0.0
  %3063 = vmatpush1.msra.mxu0 0.0
  %3064 = vmatprep.subr.mxu0 0.0
  %3065 = vmatpush1.msra.mxu0 0.0
  %3066 = vmatprep.subr.mxu0 0.0
  %3067 = vmatpush1.msra.mxu0 0.0
  %3068 = vmatprep.subr.mxu0 0.0
  %3069 = vmatpush1.msra.mxu0 0.0
  %3070 = vmatprep.subr.mxu0 0.0
  %3071 = vmatpush1.msra.mxu0 0.0
  %3072 = vmatprep.subr.mxu0 0.0
  %3073 = vmatpush1.msra.mxu0 0.0
  %3074 = vmatprep.subr.mxu0 0.0
  %3075 = vmatpush1.msra.mxu0 0.0
  %3076 = vmatprep.subr.mxu0 0.0
  %3077 = vmatpush1.msra.mxu0 %v2966
  %3078 = vmatprep.subr.mxu0 0.0
  %3079 = vmatpush1.msra.mxu0 %v2965
  %3080 = vmatprep.subr.mxu0 0.0
  %3081 = vmatpush1.msra.mxu0 %v2964
  %3082 = vmatprep.subr.mxu0 0.0
  %3083 = vmatpush1.msra.mxu0 %v2963
  %3084 = vmatprep.subr.mxu0 0.0
  %3085 = vmatpush2.msra.mxu0 0.0
  %3086 = vmatprep.subr.mxu0 0.0
  %3087 = vmatpush2.msra.mxu0 0.0
  %3088 = vmatprep.subr.mxu0 0.0
  %3089 = vmatpush2.msra.mxu0 0.0
  %3090 = vmatprep.subr.mxu0 0.0
  %3091 = vmatpush2.msra.mxu0 0.0
  %3092 = vmatprep.subr.mxu0 0.0
  %3093 = vmatpush2.msra.mxu0 0.0
  %3094 = vmatprep.subr.mxu0 0.0
  %3095 = vmatpush2.msra.mxu0 0.0
  %3096 = vmatprep.subr.mxu0 0.0
  %3097 = vmatpush2.msra.mxu0 0.0
  %3098 = vmatprep.subr.mxu0 0.0
  %3099 = vmatpush2.msra.mxu0 0.0
  %3100 = vmatprep.subr.mxu0 0.0
  %3101 = vmatpush2.msra.mxu0 0.0
  %3102 = vmatprep.subr.mxu0 0.0
  %3103 = vmatpush2.msra.mxu0 0.0
  %3104 = vmatprep.subr.mxu0 0.0
  %3105 = vmatpush2.msra.mxu0 0.0
  %3106 = vmatprep.subr.mxu0 0.0
  %3107 = vmatpush2.msra.mxu0 0.0
  %3108 = vmatprep.subr.mxu0 0.0
  %3109 = vmatpush2.msra.mxu0 0.0
  %3110 = vmatprep.subr.mxu0 0.0
  %3111 = vmatpush2.msra.mxu0 0.0
  %3112 = vmatprep.subr.mxu0 0.0
  %3113 = vmatpush2.msra.mxu0 0.0
  %3114 = vmatprep.subr.mxu0 0.0
  %3115 = vmatpush2.msra.mxu0 0.0
  %3116 = vmatprep.mubr.f32.mxu0 0.0
  %3117 = vmatmul.mubr.f32.gmra.mxu0 %v290
  %v3118 = vpop.f32.mrf.mxu0
  %v3119 = vadd.f32 0.0, %v3118
  %v3120 = vpop.f32.mrf.mxu0
  %3121 = vmatprep.mubr.f32.mxu0 0.0
  %3122 = vmatmul.mubr.f32.gmra.mxu0 %v293
  %v3123 = vpop.f32.mrf.mxu0
  %v3124 = vadd.f32 0.0, %v3123
  %v3125 = vpop.f32.mrf.mxu0
  %3126 = vmatprep.mubr.f32.mxu0 0.0
  %3127 = vmatmul.mubr.f32.gmra.mxu0 %v296
  %v3128 = vpop.f32.mrf.mxu0
  %v3129 = vadd.f32 0.0, %v3128
  %v3130 = vpop.f32.mrf.mxu0
  %3131 = vmatprep.mubr.f32.mxu0 0.0
  %3132 = vmatmul.mubr.f32.gmra.mxu0 %v299
  %v3133 = vpop.f32.mrf.mxu0
  %v3134 = vadd.f32 0.0, %v3133
  %v3135 = vpop.f32.mrf.mxu0
  %3136 = vdwg.mxu0
  %3137 = vmatprep.subr.mxu0 0.0
  %3138 = vmatpush1.msra.mxu0 %v2453
  %3139 = vmatprep.subr.mxu0 0.0
  %3140 = vmatpush1.msra.mxu0 %v2452
  %3141 = vmatprep.subr.mxu0 0.0
  %3142 = vmatpush1.msra.mxu0 %v2451
  %3143 = vmatprep.subr.mxu0 0.0
  %3144 = vmatpush1.msra.mxu0 %v2450
  %3145 = vmatprep.subr.mxu0 0.0
  %3146 = vmatpush1.msra.mxu0 %v2449
  %3147 = vmatprep.subr.mxu0 0.0
  %3148 = vmatpush1.msra.mxu0 %v2448
  %3149 = vmatprep.subr.mxu0 0.0
  %3150 = vmatpush1.msra.mxu0 %v2447
  %3151 = vmatprep.subr.mxu0 0.0
  %3152 = vmatpush1.msra.mxu0 %v2446
  %3153 = vmatprep.subr.mxu0 0.0
  %3154 = vmatpush1.msra.mxu0 %v2445
  %3155 = vmatprep.subr.mxu0 0.0
  %3156 = vmatpush1.msra.mxu0 %v2444
  %3157 = vmatprep.subr.mxu0 0.0
  %3158 = vmatpush1.msra.mxu0 %v2443
  %3159 = vmatprep.subr.mxu0 0.0
  %3160 = vmatpush1.msra.mxu0 %v2442
  %3161 = vmatprep.subr.mxu0 0.0
  %3162 = vmatpush1.msra.mxu0 %v2441
  %3163 = vmatprep.subr.mxu0 0.0
  %3164 = vmatpush1.msra.mxu0 %v2440
  %3165 = vmatprep.subr.mxu0 0.0
  %3166 = vmatpush1.msra.mxu0 %v2439
  %3167 = vmatprep.subr.mxu0 0.0
  %3168 = vmatpush1.msra.mxu0 %v2438
  %3169 = vmatprep.subr.mxu0 0.0
  %3170 = vmatpush2.msra.mxu0 0.0
  %3171 = vmatprep.subr.mxu0 0.0
  %3172 = vmatpush2.msra.mxu0 0.0
  %3173 = vmatprep.subr.mxu0 0.0
  %3174 = vmatpush2.msra.mxu0 0.0
  %3175 = vmatprep.subr.mxu0 0.0
  %3176 = vmatpush2.msra.mxu0 0.0
  %3177 = vmatprep.subr.mxu0 0.0
  %3178 = vmatpush2.msra.mxu0 0.0
  %3179 = vmatprep.subr.mxu0 0.0
  %3180 = vmatpush2.msra.mxu0 0.0
  %3181 = vmatprep.subr.mxu0 0.0
  %3182 = vmatpush2.msra.mxu0 0.0
  %3183 = vmatprep.subr.mxu0 0.0
  %3184 = vmatpush2.msra.mxu0 0.0
  %3185 = vmatprep.subr.mxu0 0.0
  %3186 = vmatpush2.msra.mxu0 0.0
  %3187 = vmatprep.subr.mxu0 0.0
  %3188 = vmatpush2.msra.mxu0 0.0
  %3189 = vmatprep.subr.mxu0 0.0
  %3190 = vmatpush2.msra.mxu0 0.0
  %3191 = vmatprep.subr.mxu0 0.0
  %3192 = vmatpush2.msra.mxu0 0.0
  %3193 = vmatprep.subr.mxu0 0.0
  %3194 = vmatpush2.msra.mxu0 0.0
  %3195 = vmatprep.subr.mxu0 0.0
  %3196 = vmatpush2.msra.mxu0 0.0
  %3197 = vmatprep.subr.mxu0 0.0
  %3198 = vmatpush2.msra.mxu0 0.0
  %3199 = vmatprep.subr.mxu0 0.0
  %3200 = vmatpush2.msra.mxu0 0.0
  %3201 = vmatprep.mubr.f32.mxu0 0.0
  %3202 = vmatmul.mubr.f32.gmra.mxu0 %v2963
  %v3203 = vpop.f32.mrf.mxu0
  %v3204 = vadd.f32 0.0, %v3203
  %v3205 = vpop.f32.mrf.mxu0
  %3206 = vmatprep.mubr.f32.mxu0 0.0
  %3207 = vmatmul.mubr.f32.gmra.mxu0 %v2964
  %v3208 = vpop.f32.mrf.mxu0
  %v3209 = vadd.f32 0.0, %v3208
  %v3210 = vpop.f32.mrf.mxu0
  %3211 = vmatprep.mubr.f32.mxu0 0.0
  %3212 = vmatmul.mubr.f32.gmra.mxu0 %v2965
  %v3213 = vpop.f32.mrf.mxu0
  %v3214 = vadd.f32 0.0, %v3213
  %v3215 = vpop.f32.mrf.mxu0
  %3216 = vmatprep.mubr.f32.mxu0 0.0
  %3217 = vmatmul.mubr.f32.gmra.mxu0 %v2966
  %v3218 = vpop.f32.mrf.mxu0
  %v3219 = vadd.f32 0.0, %v3218
  %v3220 = vpop.f32.mrf.mxu0
  %3221 = vdwg.mxu0
  %3222 = vmatprep.subr.mxu0 0.0
  %3223 = vmatpush1.msra.mxu0 %v2436
  %3224 = vmatprep.subr.mxu0 0.0
  %3225 = vmatpush1.msra.mxu0 %v2435
  %3226 = vmatprep.subr.mxu0 0.0
  %3227 = vmatpush1.msra.mxu0 %v2434
  %3228 = vmatprep.subr.mxu0 0.0
  %3229 = vmatpush1.msra.mxu0 %v2433
  %3230 = vmatprep.subr.mxu0 0.0
  %3231 = vmatpush1.msra.mxu0 %v2432
  %3232 = vmatprep.subr.mxu0 0.0
  %3233 = vmatpush1.msra.mxu0 %v2431
  %3234 = vmatprep.subr.mxu0 0.0
  %3235 = vmatpush1.msra.mxu0 %v2430
  %3236 = vmatprep.subr.mxu0 0.0
  %3237 = vmatpush1.msra.mxu0 %v2429
  %3238 = vmatprep.subr.mxu0 0.0
  %3239 = vmatpush1.msra.mxu0 %v2428
  %3240 = vmatprep.subr.mxu0 0.0
  %3241 = vmatpush1.msra.mxu0 %v2427
  %3242 = vmatprep.subr.mxu0 0.0
  %3243 = vmatpush1.msra.mxu0 %v2426
  %3244 = vmatprep.subr.mxu0 0.0
  %3245 = vmatpush1.msra.mxu0 %v2425
  %3246 = vmatprep.subr.mxu0 0.0
  %3247 = vmatpush1.msra.mxu0 %v2424
  %3248 = vmatprep.subr.mxu0 0.0
  %3249 = vmatpush1.msra.mxu0 %v2423
  %3250 = vmatprep.subr.mxu0 0.0
  %3251 = vmatpush1.msra.mxu0 %v2422
  %3252 = vmatprep.subr.mxu0 0.0
  %3253 = vmatpush1.msra.mxu0 %v2421
  %3254 = vmatprep.subr.mxu0 0.0
  %3255 = vmatpush2.msra.mxu0 0.0
  %3256 = vmatprep.subr.mxu0 0.0
  %3257 = vmatpush2.msra.mxu0 0.0
  %3258 = vmatprep.subr.mxu0 0.0
  %3259 = vmatpush2.msra.mxu0 0.0
  %3260 = vmatprep.subr.mxu0 0.0
  %3261 = vmatpush2.msra.mxu0 0.0
  %3262 = vmatprep.subr.mxu0 0.0
  %3263 = vmatpush2.msra.mxu0 0.0
  %3264 = vmatprep.subr.mxu0 0.0
  %3265 = vmatpush2.msra.mxu0 0.0
  %3266 = vmatprep.subr.mxu0 0.0
  %3267 = vmatpush2.msra.mxu0 0.0
  %3268 = vmatprep.subr.mxu0 0.0
  %3269 = vmatpush2.msra.mxu0 0.0
  %3270 = vmatprep.subr.mxu0 0.0
  %3271 = vmatpush2.msra.mxu0 0.0
  %3272 = vmatprep.subr.mxu0 0.0
  %3273 = vmatpush2.msra.mxu0 0.0
  %3274 = vmatprep.subr.mxu0 0.0
  %3275 = vmatpush2.msra.mxu0 0.0
  %3276 = vmatprep.subr.mxu0 0.0
  %3277 = vmatpush2.msra.mxu0 0.0
  %3278 = vmatprep.subr.mxu0 0.0
  %3279 = vmatpush2.msra.mxu0 0.0
  %3280 = vmatprep.subr.mxu0 0.0
  %3281 = vmatpush2.msra.mxu0 0.0
  %3282 = vmatprep.subr.mxu0 0.0
  %3283 = vmatpush2.msra.mxu0 0.0
  %3284 = vmatprep.subr.mxu0 0.0
  %3285 = vmatpush2.msra.mxu0 0.0
  %3286 = vmatprep.mubr.f32.mxu0 0.0
  %3287 = vmatmul.mubr.f32.gmra.mxu0 %v3034
  %v3288 = vpop.f32.mrf.mxu0
  %v3289 = vadd.f32 %v3204, %v3288
  %v3290 = vpop.f32.mrf.mxu0
  %3291 = vmatprep.mubr.f32.mxu0 0.0
  %3292 = vmatmul.mubr.f32.gmra.mxu0 %v3039
  %v3293 = vpop.f32.mrf.mxu0
  %v3294 = vadd.f32 %v3209, %v3293
  %v3295 = vpop.f32.mrf.mxu0
  %3296 = vmatprep.mubr.f32.mxu0 0.0
  %3297 = vmatmul.mubr.f32.gmra.mxu0 %v3044
  %v3298 = vpop.f32.mrf.mxu0
  %v3299 = vadd.f32 %v3214, %v3298
  %v3300 = vpop.f32.mrf.mxu0
  %3301 = vmatprep.mubr.f32.mxu0 0.0
  %3302 = vmatmul.mubr.f32.gmra.mxu0 %v3049
  %v3303 = vpop.f32.mrf.mxu0
  %v3304 = vadd.f32 %v3219, %v3303
  %v3305 = vpop.f32.mrf.mxu0
  %3306 = vdwg.mxu0
  %3307 = vmatprep.subr.mxu0 0.0
  %3308 = vmatpush1.msra.mxu0 %v2640
  %3309 = vmatprep.subr.mxu0 0.0
  %3310 = vmatpush1.msra.mxu0 %v2639
  %3311 = vmatprep.subr.mxu0 0.0
  %3312 = vmatpush1.msra.mxu0 %v2638
  %3313 = vmatprep.subr.mxu0 0.0
  %3314 = vmatpush1.msra.mxu0 %v2637
  %3315 = vmatprep.subr.mxu0 0.0
  %3316 = vmatpush1.msra.mxu0 %v2636
  %3317 = vmatprep.subr.mxu0 0.0
  %3318 = vmatpush1.msra.mxu0 %v2635
  %3319 = vmatprep.subr.mxu0 0.0
  %3320 = vmatpush1.msra.mxu0 %v2634
  %3321 = vmatprep.subr.mxu0 0.0
  %3322 = vmatpush1.msra.mxu0 %v2633
  %3323 = vmatprep.subr.mxu0 0.0
  %3324 = vmatpush1.msra.mxu0 %v2632
  %3325 = vmatprep.subr.mxu0 0.0
  %3326 = vmatpush1.msra.mxu0 %v2631
  %3327 = vmatprep.subr.mxu0 0.0
  %3328 = vmatpush1.msra.mxu0 %v2630
  %3329 = vmatprep.subr.mxu0 0.0
  %3330 = vmatpush1.msra.mxu0 %v2629
  %3331 = vmatprep.subr.mxu0 0.0
  %3332 = vmatpush1.msra.mxu0 %v2628
  %3333 = vmatprep.subr.mxu0 0.0
  %3334 = vmatpush1.msra.mxu0 %v2627
  %3335 = vmatprep.subr.mxu0 0.0
  %3336 = vmatpush1.msra.mxu0 %v2626
  %3337 = vmatprep.subr.mxu0 0.0
  %3338 = vmatpush1.msra.mxu0 %v2625
  %3339 = vmatprep.subr.mxu0 0.0
  %3340 = vmatpush2.msra.mxu0 0.0
  %3341 = vmatprep.subr.mxu0 0.0
  %3342 = vmatpush2.msra.mxu0 0.0
  %3343 = vmatprep.subr.mxu0 0.0
  %3344 = vmatpush2.msra.mxu0 0.0
  %3345 = vmatprep.subr.mxu0 0.0
  %3346 = vmatpush2.msra.mxu0 0.0
  %3347 = vmatprep.subr.mxu0 0.0
  %3348 = vmatpush2.msra.mxu0 0.0
  %3349 = vmatprep.subr.mxu0 0.0
  %3350 = vmatpush2.msra.mxu0 0.0
  %3351 = vmatprep.subr.mxu0 0.0
  %3352 = vmatpush2.msra.mxu0 0.0
  %3353 = vmatprep.subr.mxu0 0.0
  %3354 = vmatpush2.msra.mxu0 0.0
  %3355 = vmatprep.subr.mxu0 0.0
  %3356 = vmatpush2.msra.mxu0 0.0
  %3357 = vmatprep.subr.mxu0 0.0
  %3358 = vmatpush2.msra.mxu0 0.0
  %3359 = vmatprep.subr.mxu0 0.0
  %3360 = vmatpush2.msra.mxu0 0.0
  %3361 = vmatprep.subr.mxu0 0.0
  %3362 = vmatpush2.msra.mxu0 0.0
  %3363 = vmatprep.subr.mxu0 0.0
  %3364 = vmatpush2.msra.mxu0 0.0
  %3365 = vmatprep.subr.mxu0 0.0
  %3366 = vmatpush2.msra.mxu0 0.0
  %3367 = vmatprep.subr.mxu0 0.0
  %3368 = vmatpush2.msra.mxu0 0.0
  %3369 = vmatprep.subr.mxu0 0.0
  %3370 = vmatpush2.msra.mxu0 0.0
  %3371 = vmatprep.mubr.f32.mxu0 0.0
  %3372 = vmatmul.mubr.f32.gmra.mxu0 %v3119
  %v3373 = vpop.f32.mrf.mxu0
  %v3374 = vadd.f32 0.0, %v3373
  %v3375 = vpop.f32.mrf.mxu0
  %3376 = vmatprep.mubr.f32.mxu0 0.0
  %3377 = vmatmul.mubr.f32.gmra.mxu0 %v3124
  %v3378 = vpop.f32.mrf.mxu0
  %v3379 = vadd.f32 0.0, %v3378
  %v3380 = vpop.f32.mrf.mxu0
  %3381 = vmatprep.mubr.f32.mxu0 0.0
  %3382 = vmatmul.mubr.f32.gmra.mxu0 %v3129
  %v3383 = vpop.f32.mrf.mxu0
  %v3384 = vadd.f32 0.0, %v3383
  %v3385 = vpop.f32.mrf.mxu0
  %3386 = vmatprep.mubr.f32.mxu0 0.0
  %3387 = vmatmul.mubr.f32.gmra.mxu0 %v3134
  %v3388 = vpop.f32.mrf.mxu0
  %v3389 = vadd.f32 0.0, %v3388
  %v3390 = vpop.f32.mrf.mxu0
  %3391 = vdwg.mxu0
  %v3392 = vadd.f32 %v3289, %v3374
  %v3393 = vadd.f32 %v3294, %v3379
  %v3394 = vadd.f32 %v3299, %v3384
  %v3395 = vadd.f32 %v3304, %v3389
  %v3396 = vadd.f32 %v3392, %v2734
  %v3397 = vadd.f32 %v3393, %v2734
  %v3398 = vadd.f32 %v3394, %v2734
  %v3399 = vadd.f32 %v3395, %v2734
  %3400 = vmatprep.subr.mxu0 0.0
  %3401 = vmatpush1.msra.mxu0 %v70
  %3402 = vmatprep.subr.mxu0 0.0
  %3403 = vmatpush1.msra.mxu0 %v69
  %3404 = vmatprep.subr.mxu0 0.0
  %3405 = vmatpush1.msra.mxu0 %v68
  %3406 = vmatprep.subr.mxu0 0.0
  %3407 = vmatpush1.msra.mxu0 %v67
  %3408 = vmatprep.subr.mxu0 0.0
  %3409 = vmatpush1.msra.mxu0 %v66
  %3410 = vmatprep.subr.mxu0 0.0
  %3411 = vmatpush1.msra.mxu0 %v65
  %3412 = vmatprep.subr.mxu0 0.0
  %3413 = vmatpush1.msra.mxu0 %v64
  %3414 = vmatprep.subr.mxu0 0.0
  %3415 = vmatpush1.msra.mxu0 %v63
  %3416 = vmatprep.subr.mxu0 0.0
  %3417 = vmatpush1.msra.mxu0 %v62
  %3418 = vmatprep.subr.mxu0 0.0
  %3419 = vmatpush1.msra.mxu0 %v61
  %3420 = vmatprep.subr.mxu0 0.0
  %3421 = vmatpush1.msra.mxu0 %v60
  %3422 = vmatprep.subr.mxu0 0.0
  %3423 = vmatpush1.msra.mxu0 %v59
  %3424 = vmatprep.subr.mxu0 0.0
  %3425 = vmatpush1.msra.mxu0 %v58
  %3426 = vmatprep.subr.mxu0 0.0
  %3427 = vmatpush1.msra.mxu0 %v57
  %3428 = vmatprep.subr.mxu0 0.0
  %3429 = vmatpush1.msra.mxu0 %v56
  %3430 = vmatprep.subr.mxu0 0.0
  %3431 = vmatpush1.msra.mxu0 %v55
  %3432 = vmatprep.subr.mxu0 0.0
  %3433 = vmatpush2.msra.mxu0 0.0
  %3434 = vmatprep.subr.mxu0 0.0
  %3435 = vmatpush2.msra.mxu0 0.0
  %3436 = vmatprep.subr.mxu0 0.0
  %3437 = vmatpush2.msra.mxu0 0.0
  %3438 = vmatprep.subr.mxu0 0.0
  %3439 = vmatpush2.msra.mxu0 0.0
  %3440 = vmatprep.subr.mxu0 0.0
  %3441 = vmatpush2.msra.mxu0 0.0
  %3442 = vmatprep.subr.mxu0 0.0
  %3443 = vmatpush2.msra.mxu0 0.0
  %3444 = vmatprep.subr.mxu0 0.0
  %3445 = vmatpush2.msra.mxu0 0.0
  %3446 = vmatprep.subr.mxu0 0.0
  %3447 = vmatpush2.msra.mxu0 0.0
  %3448 = vmatprep.subr.mxu0 0.0
  %3449 = vmatpush2.msra.mxu0 0.0
  %3450 = vmatprep.subr.mxu0 0.0
  %3451 = vmatpush2.msra.mxu0 0.0
  %3452 = vmatprep.subr.mxu0 0.0
  %3453 = vmatpush2.msra.mxu0 0.0
  %3454 = vmatprep.subr.mxu0 0.0
  %3455 = vmatpush2.msra.mxu0 0.0
  %3456 = vmatprep.subr.mxu0 0.0
  %3457 = vmatpush2.msra.mxu0 0.0
  %3458 = vmatprep.subr.mxu0 0.0
  %3459 = vmatpush2.msra.mxu0 0.0
  %3460 = vmatprep.subr.mxu0 0.0
  %3461 = vmatpush2.msra.mxu0 0.0
  %3462 = vmatprep.subr.mxu0 0.0
  %3463 = vmatpush2.msra.mxu0 0.0
  %3464 = vmatprep.mubr.f32.mxu0 0.0
  %3465 = vmatmul.mubr.f32.gmra.mxu0 %v3396
  %v3466 = vpop.f32.mrf.mxu0
  %v3467 = vadd.f32 0.0, %v3466
  %v3468 = vpop.f32.mrf.mxu0
  %3469 = vmatprep.mubr.f32.mxu0 0.0
  %3470 = vmatmul.mubr.f32.gmra.mxu0 %v3397
  %v3471 = vpop.f32.mrf.mxu0
  %v3472 = vadd.f32 0.0, %v3471
  %v3473 = vpop.f32.mrf.mxu0
  %3474 = vmatprep.mubr.f32.mxu0 0.0
  %3475 = vmatmul.mubr.f32.gmra.mxu0 %v3398
  %v3476 = vpop.f32.mrf.mxu0
  %v3477 = vadd.f32 0.0, %v3476
  %v3478 = vpop.f32.mrf.mxu0
  %3479 = vmatprep.mubr.f32.mxu0 0.0
  %3480 = vmatmul.mubr.f32.gmra.mxu0 %v3399
  %v3481 = vpop.f32.mrf.mxu0
  %v3482 = vadd.f32 0.0, %v3481
  %v3483 = vpop.f32.mrf.mxu0
  %3484 = vdwg.mxu0
  %v3485 = vadd.f32 %v3467, %v3472
  %v3486 = vadd.f32 %v3485, %v3477
  %v3487 = vadd.f32 %v3486, %v3482
  %v3488 = vrot.slane %v3487, 4
  %v3489 = vadd.f32 %v3487, %v3488
  %v3490 = vrot.slane %v3489, 2
  %v3491 = vadd.f32 %v3489, %v3490
  %v3492 = vrot.slane %v3491, 1
  %v3493 = vadd.f32 %v3491, %v3492
  %v3494 = vmul.f32 %v3396, %v3396
  %v3495 = vmul.f32 %v3397, %v3397
  %v3496 = vmul.f32 %v3398, %v3398
  %v3497 = vmul.f32 %v3399, %v3399
  %3498 = vmatprep.subr.mxu0 0.0
  %3499 = vmatpush1.msra.mxu0 %v70
  %3500 = vmatprep.subr.mxu0 0.0
  %3501 = vmatpush1.msra.mxu0 %v69
  %3502 = vmatprep.subr.mxu0 0.0
  %3503 = vmatpush1.msra.mxu0 %v68
  %3504 = vmatprep.subr.mxu0 0.0
  %3505 = vmatpush1.msra.mxu0 %v67
  %3506 = vmatprep.subr.mxu0 0.0
  %3507 = vmatpush1.msra.mxu0 %v66
  %3508 = vmatprep.subr.mxu0 0.0
  %3509 = vmatpush1.msra.mxu0 %v65
  %3510 = vmatprep.subr.mxu0 0.0
  %3511 = vmatpush1.msra.mxu0 %v64
  %3512 = vmatprep.subr.mxu0 0.0
  %3513 = vmatpush1.msra.mxu0 %v63
  %3514 = vmatprep.subr.mxu0 0.0
  %3515 = vmatpush1.msra.mxu0 %v62
  %3516 = vmatprep.subr.mxu0 0.0
  %3517 = vmatpush1.msra.mxu0 %v61
  %3518 = vmatprep.subr.mxu0 0.0
  %3519 = vmatpush1.msra.mxu0 %v60
  %3520 = vmatprep.subr.mxu0 0.0
  %3521 = vmatpush1.msra.mxu0 %v59
  %3522 = vmatprep.subr.mxu0 0.0
  %3523 = vmatpush1.msra.mxu0 %v58
  %3524 = vmatprep.subr.mxu0 0.0
  %3525 = vmatpush1.msra.mxu0 %v57
  %3526 = vmatprep.subr.mxu0 0.0
  %3527 = vmatpush1.msra.mxu0 %v56
  %3528 = vmatprep.subr.mxu0 0.0
  %3529 = vmatpush1.msra.mxu0 %v55
  %3530 = vmatprep.subr.mxu0 0.0
  %3531 = vmatpush2.msra.mxu0 0.0
  %3532 = vmatprep.subr.mxu0 0.0
  %3533 = vmatpush2.msra.mxu0 0.0
  %3534 = vmatprep.subr.mxu0 0.0
  %3535 = vmatpush2.msra.mxu0 0.0
  %3536 = vmatprep.subr.mxu0 0.0
  %3537 = vmatpush2.msra.mxu0 0.0
  %3538 = vmatprep.subr.mxu0 0.0
  %3539 = vmatpush2.msra.mxu0 0.0
  %3540 = vmatprep.subr.mxu0 0.0
  %3541 = vmatpush2.msra.mxu0 0.0
  %3542 = vmatprep.subr.mxu0 0.0
  %3543 = vmatpush2.msra.mxu0 0.0
  %3544 = vmatprep.subr.mxu0 0.0
  %3545 = vmatpush2.msra.mxu0 0.0
  %3546 = vmatprep.subr.mxu0 0.0
  %3547 = vmatpush2.msra.mxu0 0.0
  %3548 = vmatprep.subr.mxu0 0.0
  %3549 = vmatpush2.msra.mxu0 0.0
  %3550 = vmatprep.subr.mxu0 0.0
  %3551 = vmatpush2.msra.mxu0 0.0
  %3552 = vmatprep.subr.mxu0 0.0
  %3553 = vmatpush2.msra.mxu0 0.0
  %3554 = vmatprep.subr.mxu0 0.0
  %3555 = vmatpush2.msra.mxu0 0.0
  %3556 = vmatprep.subr.mxu0 0.0
  %3557 = vmatpush2.msra.mxu0 0.0
  %3558 = vmatprep.subr.mxu0 0.0
  %3559 = vmatpush2.msra.mxu0 0.0
  %3560 = vmatprep.subr.mxu0 0.0
  %3561 = vmatpush2.msra.mxu0 0.0
  %3562 = vmatprep.mubr.f32.mxu0 0.0
  %3563 = vmatmul.mubr.f32.gmra.mxu0 %v3494
  %v3564 = vpop.f32.mrf.mxu0
  %v3565 = vadd.f32 0.0, %v3564
  %v3566 = vpop.f32.mrf.mxu0
  %3567 = vmatprep.mubr.f32.mxu0 0.0
  %3568 = vmatmul.mubr.f32.gmra.mxu0 %v3495
  %v3569 = vpop.f32.mrf.mxu0
  %v3570 = vadd.f32 0.0, %v3569
  %v3571 = vpop.f32.mrf.mxu0
  %3572 = vmatprep.mubr.f32.mxu0 0.0
  %3573 = vmatmul.mubr.f32.gmra.mxu0 %v3496
  %v3574 = vpop.f32.mrf.mxu0
  %v3575 = vadd.f32 0.0, %v3574
  %v3576 = vpop.f32.mrf.mxu0
  %3577 = vmatprep.mubr.f32.mxu0 0.0
  %3578 = vmatmul.mubr.f32.gmra.mxu0 %v3497
  %v3579 = vpop.f32.mrf.mxu0
  %v3580 = vadd.f32 0.0, %v3579
  %v3581 = vpop.f32.mrf.mxu0
  %3582 = vdwg.mxu0
  %v3583 = vadd.f32 %v3565, %v3570
  %v3584 = vadd.f32 %v3583, %v3575
  %v3585 = vadd.f32 %v3584, %v3580
  %v3586 = vrot.slane %v3585, 4
  %v3587 = vadd.f32 %v3585, %v3586
  %v3588 = vrot.slane %v3587, 2
  %v3589 = vadd.f32 %v3587, %v3588
  %v3590 = vrot.slane %v3589, 1
  %v3591 = vadd.f32 %v3589, %v3590
  %v3592 = vmul.f32 %v3493, 0.001953125
  %v3593 = vmul.f32 %v3591, 0.001953125
  %v3594 = vmul.f32 %v3592, %v3592
  %v3595 = vsub.f32 %v3593, %v3594
  %v3596 = vadd.f32 %v3595, 1e-05
  %v3597 = vrsqrt.pop %v3596
  %v3598 = vmul.f32 %v3597, %v2249
  %v3599 = vmul.f32 %v3592, %v3598
  %v3600 = vsub.f32 %v2250, %v3599
  %v3601 = vlaneseq
  %v3602 = vshrl.u32 %v3601, 7
  %v3603 = vsub.s32 0, %v3602
  %v3604 = vrot.slane %v3598, %v3603
  %v3605 = vmul.f32 %v3396, %v3604
  %v3606 = vmul.f32 %v3397, %v3604
  %v3607 = vmul.f32 %v3398, %v3604
  %v3608 = vmul.f32 %v3399, %v3604
  %v3610 = vlaneseq
  %v3611 = vshrl.u32 %v3610, 7
  %v3612 = vsub.s32 0, %v3611
  %v3613 = vrot.slane %v3600, %v3612
  %v3615 = vadd.f32 %v3605, %v3613
  %v3616 = vadd.f32 %v3606, %v3613
  %v3617 = vadd.f32 %v3607, %v3613
  %v3618 = vadd.f32 %v3608, %v3613
  %v3619 = vmax.f32 %v3615, 0.0
  %v3620 = vmax.f32 %v3616, 0.0
  %v3621 = vmax.f32 %v3617, 0.0
  %v3622 = vmax.f32 %v3618, 0.0
  %v3623 = vadd.f32 %v2244, %v3619
  %v3624 = vadd.f32 %v2245, %v3620
  %v3625 = vadd.f32 %v2246, %v3621
  %v3626 = vadd.f32 %v2247, %v3622
  %3627 = vmatprep.subr.mxu0 0.0
  %3628 = vmatpush1.msra.mxu0 0.0
  %3629 = vmatprep.subr.mxu0 0.0
  %3630 = vmatpush1.msra.mxu0 0.0
  %3631 = vmatprep.subr.mxu0 0.0
  %3632 = vmatpush1.msra.mxu0 0.0
  %3633 = vmatprep.subr.mxu0 0.0
  %3634 = vmatpush1.msra.mxu0 0.0
  %3635 = vmatprep.subr.mxu0 0.0
  %3636 = vmatpush1.msra.mxu0 0.0
  %3637 = vmatprep.subr.mxu0 0.0
  %3638 = vmatpush1.msra.mxu0 0.0
  %3639 = vmatprep.subr.mxu0 0.0
  %3640 = vmatpush1.msra.mxu0 0.0
  %3641 = vmatprep.subr.mxu0 0.0
  %3642 = vmatpush1.msra.mxu0 0.0
  %3643 = vmatprep.subr.mxu0 0.0
  %3644 = vmatpush1.msra.mxu0 0.0
  %3645 = vmatprep.subr.mxu0 0.0
  %3646 = vmatpush1.msra.mxu0 0.0
  %3647 = vmatprep.subr.mxu0 0.0
  %3648 = vmatpush1.msra.mxu0 0.0
  %3649 = vmatprep.subr.mxu0 0.0
  %3650 = vmatpush1.msra.mxu0 0.0
  %3651 = vmatprep.subr.mxu0 0.0
  %3652 = vmatpush1.msra.mxu0 %v3626
  %3653 = vmatprep.subr.mxu0 0.0
  %3654 = vmatpush1.msra.mxu0 %v3625
  %3655 = vmatprep.subr.mxu0 0.0
  %3656 = vmatpush1.msra.mxu0 %v3624
  %3657 = vmatprep.subr.mxu0 0.0
  %3658 = vmatpush1.msra.mxu0 %v3623
  %3659 = vmatprep.subr.mxu0 0.0
  %3660 = vmatpush2.msra.mxu0 0.0
  %3661 = vmatprep.subr.mxu0 0.0
  %3662 = vmatpush2.msra.mxu0 0.0
  %3663 = vmatprep.subr.mxu0 0.0
  %3664 = vmatpush2.msra.mxu0 0.0
  %3665 = vmatprep.subr.mxu0 0.0
  %3666 = vmatpush2.msra.mxu0 0.0
  %3667 = vmatprep.subr.mxu0 0.0
  %3668 = vmatpush2.msra.mxu0 0.0
  %3669 = vmatprep.subr.mxu0 0.0
  %3670 = vmatpush2.msra.mxu0 0.0
  %3671 = vmatprep.subr.mxu0 0.0
  %3672 = vmatpush2.msra.mxu0 0.0
  %3673 = vmatprep.subr.mxu0 0.0
  %3674 = vmatpush2.msra.mxu0 0.0
  %3675 = vmatprep.subr.mxu0 0.0
  %3676 = vmatpush2.msra.mxu0 0.0
  %3677 = vmatprep.subr.mxu0 0.0
  %3678 = vmatpush2.msra.mxu0 0.0
  %3679 = vmatprep.subr.mxu0 0.0
  %3680 = vmatpush2.msra.mxu0 0.0
  %3681 = vmatprep.subr.mxu0 0.0
  %3682 = vmatpush2.msra.mxu0 0.0
  %3683 = vmatprep.subr.mxu0 0.0
  %3684 = vmatpush2.msra.mxu0 0.0
  %3685 = vmatprep.subr.mxu0 0.0
  %3686 = vmatpush2.msra.mxu0 0.0
  %3687 = vmatprep.subr.mxu0 0.0
  %3688 = vmatpush2.msra.mxu0 0.0
  %3689 = vmatprep.subr.mxu0 0.0
  %3690 = vmatpush2.msra.mxu0 0.0
  %3691 = vmatprep.mubr.f32.mxu0 0.0
  %3692 = vmatmul.mubr.f32.gmra.mxu0 %v193
  %v3693 = vpop.f32.mrf.mxu0
  %v3694 = vadd.f32 0.0, %v3693
  %v3695 = vpop.f32.mrf.mxu0
  %3696 = vmatprep.mubr.f32.mxu0 0.0
  %3697 = vmatmul.mubr.f32.gmra.mxu0 %v196
  %v3698 = vpop.f32.mrf.mxu0
  %v3699 = vadd.f32 0.0, %v3698
  %v3700 = vpop.f32.mrf.mxu0
  %3701 = vmatprep.mubr.f32.mxu0 0.0
  %3702 = vmatmul.mubr.f32.gmra.mxu0 %v199
  %v3703 = vpop.f32.mrf.mxu0
  %v3704 = vadd.f32 0.0, %v3703
  %v3705 = vpop.f32.mrf.mxu0
  %3706 = vmatprep.mubr.f32.mxu0 0.0
  %3707 = vmatmul.mubr.f32.gmra.mxu0 %v202
  %v3708 = vpop.f32.mrf.mxu0
  %v3709 = vadd.f32 0.0, %v3708
  %v3710 = vpop.f32.mrf.mxu0
  %3711 = vdwg.mxu0
  %3712 = vmatprep.subr.mxu0 0.0
  %3713 = vmatpush1.msra.mxu0 0.0
  %3714 = vmatprep.subr.mxu0 0.0
  %3715 = vmatpush1.msra.mxu0 0.0
  %3716 = vmatprep.subr.mxu0 0.0
  %3717 = vmatpush1.msra.mxu0 0.0
  %3718 = vmatprep.subr.mxu0 0.0
  %3719 = vmatpush1.msra.mxu0 0.0
  %3720 = vmatprep.subr.mxu0 0.0
  %3721 = vmatpush1.msra.mxu0 0.0
  %3722 = vmatprep.subr.mxu0 0.0
  %3723 = vmatpush1.msra.mxu0 0.0
  %3724 = vmatprep.subr.mxu0 0.0
  %3725 = vmatpush1.msra.mxu0 0.0
  %3726 = vmatprep.subr.mxu0 0.0
  %3727 = vmatpush1.msra.mxu0 0.0
  %3728 = vmatprep.subr.mxu0 0.0
  %3729 = vmatpush1.msra.mxu0 0.0
  %3730 = vmatprep.subr.mxu0 0.0
  %3731 = vmatpush1.msra.mxu0 0.0
  %3732 = vmatprep.subr.mxu0 0.0
  %3733 = vmatpush1.msra.mxu0 0.0
  %3734 = vmatprep.subr.mxu0 0.0
  %3735 = vmatpush1.msra.mxu0 0.0
  %3736 = vmatprep.subr.mxu0 0.0
  %3737 = vmatpush1.msra.mxu0 %v3626
  %3738 = vmatprep.subr.mxu0 0.0
  %3739 = vmatpush1.msra.mxu0 %v3625
  %3740 = vmatprep.subr.mxu0 0.0
  %3741 = vmatpush1.msra.mxu0 %v3624
  %3742 = vmatprep.subr.mxu0 0.0
  %3743 = vmatpush1.msra.mxu0 %v3623
  %3744 = vmatprep.subr.mxu0 0.0
  %3745 = vmatpush2.msra.mxu0 0.0
  %3746 = vmatprep.subr.mxu0 0.0
  %3747 = vmatpush2.msra.mxu0 0.0
  %3748 = vmatprep.subr.mxu0 0.0
  %3749 = vmatpush2.msra.mxu0 0.0
  %3750 = vmatprep.subr.mxu0 0.0
  %3751 = vmatpush2.msra.mxu0 0.0
  %3752 = vmatprep.subr.mxu0 0.0
  %3753 = vmatpush2.msra.mxu0 0.0
  %3754 = vmatprep.subr.mxu0 0.0
  %3755 = vmatpush2.msra.mxu0 0.0
  %3756 = vmatprep.subr.mxu0 0.0
  %3757 = vmatpush2.msra.mxu0 0.0
  %3758 = vmatprep.subr.mxu0 0.0
  %3759 = vmatpush2.msra.mxu0 0.0
  %3760 = vmatprep.subr.mxu0 0.0
  %3761 = vmatpush2.msra.mxu0 0.0
  %3762 = vmatprep.subr.mxu0 0.0
  %3763 = vmatpush2.msra.mxu0 0.0
  %3764 = vmatprep.subr.mxu0 0.0
  %3765 = vmatpush2.msra.mxu0 0.0
  %3766 = vmatprep.subr.mxu0 0.0
  %3767 = vmatpush2.msra.mxu0 0.0
  %3768 = vmatprep.subr.mxu0 0.0
  %3769 = vmatpush2.msra.mxu0 0.0
  %3770 = vmatprep.subr.mxu0 0.0
  %3771 = vmatpush2.msra.mxu0 0.0
  %3772 = vmatprep.subr.mxu0 0.0
  %3773 = vmatpush2.msra.mxu0 0.0
  %3774 = vmatprep.subr.mxu0 0.0
  %3775 = vmatpush2.msra.mxu0 0.0
  %3776 = vmatprep.mubr.f32.mxu0 0.0
  %3777 = vmatmul.mubr.f32.gmra.mxu0 %v290
  %v3778 = vpop.f32.mrf.mxu0
  %v3779 = vadd.f32 0.0, %v3778
  %v3780 = vpop.f32.mrf.mxu0
  %3781 = vmatprep.mubr.f32.mxu0 0.0
  %3782 = vmatmul.mubr.f32.gmra.mxu0 %v293
  %v3783 = vpop.f32.mrf.mxu0
  %v3784 = vadd.f32 0.0, %v3783
  %v3785 = vpop.f32.mrf.mxu0
  %3786 = vmatprep.mubr.f32.mxu0 0.0
  %3787 = vmatmul.mubr.f32.gmra.mxu0 %v296
  %v3788 = vpop.f32.mrf.mxu0
  %v3789 = vadd.f32 0.0, %v3788
  %v3790 = vpop.f32.mrf.mxu0
  %3791 = vmatprep.mubr.f32.mxu0 0.0
  %3792 = vmatmul.mubr.f32.gmra.mxu0 %v299
  %v3793 = vpop.f32.mrf.mxu0
  %v3794 = vadd.f32 0.0, %v3793
  %v3795 = vpop.f32.mrf.mxu0
  %3796 = vdwg.mxu0
  %3797 = vmatprep.subr.mxu0 0.0
  %3798 = vmatpush1.msra.mxu0 %v2453
  %3799 = vmatprep.subr.mxu0 0.0
  %3800 = vmatpush1.msra.mxu0 %v2452
  %3801 = vmatprep.subr.mxu0 0.0
  %3802 = vmatpush1.msra.mxu0 %v2451
  %3803 = vmatprep.subr.mxu0 0.0
  %3804 = vmatpush1.msra.mxu0 %v2450
  %3805 = vmatprep.subr.mxu0 0.0
  %3806 = vmatpush1.msra.mxu0 %v2449
  %3807 = vmatprep.subr.mxu0 0.0
  %3808 = vmatpush1.msra.mxu0 %v2448
  %3809 = vmatprep.subr.mxu0 0.0
  %3810 = vmatpush1.msra.mxu0 %v2447
  %3811 = vmatprep.subr.mxu0 0.0
  %3812 = vmatpush1.msra.mxu0 %v2446
  %3813 = vmatprep.subr.mxu0 0.0
  %3814 = vmatpush1.msra.mxu0 %v2445
  %3815 = vmatprep.subr.mxu0 0.0
  %3816 = vmatpush1.msra.mxu0 %v2444
  %3817 = vmatprep.subr.mxu0 0.0
  %3818 = vmatpush1.msra.mxu0 %v2443
  %3819 = vmatprep.subr.mxu0 0.0
  %3820 = vmatpush1.msra.mxu0 %v2442
  %3821 = vmatprep.subr.mxu0 0.0
  %3822 = vmatpush1.msra.mxu0 %v2441
  %3823 = vmatprep.subr.mxu0 0.0
  %3824 = vmatpush1.msra.mxu0 %v2440
  %3825 = vmatprep.subr.mxu0 0.0
  %3826 = vmatpush1.msra.mxu0 %v2439
  %3827 = vmatprep.subr.mxu0 0.0
  %3828 = vmatpush1.msra.mxu0 %v2438
  %3829 = vmatprep.subr.mxu0 0.0
  %3830 = vmatpush2.msra.mxu0 0.0
  %3831 = vmatprep.subr.mxu0 0.0
  %3832 = vmatpush2.msra.mxu0 0.0
  %3833 = vmatprep.subr.mxu0 0.0
  %3834 = vmatpush2.msra.mxu0 0.0
  %3835 = vmatprep.subr.mxu0 0.0
  %3836 = vmatpush2.msra.mxu0 0.0
  %3837 = vmatprep.subr.mxu0 0.0
  %3838 = vmatpush2.msra.mxu0 0.0
  %3839 = vmatprep.subr.mxu0 0.0
  %3840 = vmatpush2.msra.mxu0 0.0
  %3841 = vmatprep.subr.mxu0 0.0
  %3842 = vmatpush2.msra.mxu0 0.0
  %3843 = vmatprep.subr.mxu0 0.0
  %3844 = vmatpush2.msra.mxu0 0.0
  %3845 = vmatprep.subr.mxu0 0.0
  %3846 = vmatpush2.msra.mxu0 0.0
  %3847 = vmatprep.subr.mxu0 0.0
  %3848 = vmatpush2.msra.mxu0 0.0
  %3849 = vmatprep.subr.mxu0 0.0
  %3850 = vmatpush2.msra.mxu0 0.0
  %3851 = vmatprep.subr.mxu0 0.0
  %3852 = vmatpush2.msra.mxu0 0.0
  %3853 = vmatprep.subr.mxu0 0.0
  %3854 = vmatpush2.msra.mxu0 0.0
  %3855 = vmatprep.subr.mxu0 0.0
  %3856 = vmatpush2.msra.mxu0 0.0
  %3857 = vmatprep.subr.mxu0 0.0
  %3858 = vmatpush2.msra.mxu0 0.0
  %3859 = vmatprep.subr.mxu0 0.0
  %3860 = vmatpush2.msra.mxu0 0.0
  %3861 = vmatprep.mubr.f32.mxu0 0.0
  %3862 = vmatmul.mubr.f32.gmra.mxu0 %v3623
  %v3863 = vpop.f32.mrf.mxu0
  %v3864 = vadd.f32 0.0, %v3863
  %v3865 = vpop.f32.mrf.mxu0
  %3866 = vmatprep.mubr.f32.mxu0 0.0
  %3867 = vmatmul.mubr.f32.gmra.mxu0 %v3624
  %v3868 = vpop.f32.mrf.mxu0
  %v3869 = vadd.f32 0.0, %v3868
  %v3870 = vpop.f32.mrf.mxu0
  %3871 = vmatprep.mubr.f32.mxu0 0.0
  %3872 = vmatmul.mubr.f32.gmra.mxu0 %v3625
  %v3873 = vpop.f32.mrf.mxu0
  %v3874 = vadd.f32 0.0, %v3873
  %v3875 = vpop.f32.mrf.mxu0
  %3876 = vmatprep.mubr.f32.mxu0 0.0
  %3877 = vmatmul.mubr.f32.gmra.mxu0 %v3626
  %v3878 = vpop.f32.mrf.mxu0
  %v3879 = vadd.f32 0.0, %v3878
  %v3880 = vpop.f32.mrf.mxu0
  %3881 = vdwg.mxu0
  %3882 = vmatprep.subr.mxu0 0.0
  %3883 = vmatpush1.msra.mxu0 %v2436
  %3884 = vmatprep.subr.mxu0 0.0
  %3885 = vmatpush1.msra.mxu0 %v2435
  %3886 = vmatprep.subr.mxu0 0.0
  %3887 = vmatpush1.msra.mxu0 %v2434
  %3888 = vmatprep.subr.mxu0 0.0
  %3889 = vmatpush1.msra.mxu0 %v2433
  %3890 = vmatprep.subr.mxu0 0.0
  %3891 = vmatpush1.msra.mxu0 %v2432
  %3892 = vmatprep.subr.mxu0 0.0
  %3893 = vmatpush1.msra.mxu0 %v2431
  %3894 = vmatprep.subr.mxu0 0.0
  %3895 = vmatpush1.msra.mxu0 %v2430
  %3896 = vmatprep.subr.mxu0 0.0
  %3897 = vmatpush1.msra.mxu0 %v2429
  %3898 = vmatprep.subr.mxu0 0.0
  %3899 = vmatpush1.msra.mxu0 %v2428
  %3900 = vmatprep.subr.mxu0 0.0
  %3901 = vmatpush1.msra.mxu0 %v2427
  %3902 = vmatprep.subr.mxu0 0.0
  %3903 = vmatpush1.msra.mxu0 %v2426
  %3904 = vmatprep.subr.mxu0 0.0
  %3905 = vmatpush1.msra.mxu0 %v2425
  %3906 = vmatprep.subr.mxu0 0.0
  %3907 = vmatpush1.msra.mxu0 %v2424
  %3908 = vmatprep.subr.mxu0 0.0
  %3909 = vmatpush1.msra.mxu0 %v2423
  %3910 = vmatprep.subr.mxu0 0.0
  %3911 = vmatpush1.msra.mxu0 %v2422
  %3912 = vmatprep.subr.mxu0 0.0
  %3913 = vmatpush1.msra.mxu0 %v2421
  %3914 = vmatprep.subr.mxu0 0.0
  %3915 = vmatpush2.msra.mxu0 0.0
  %3916 = vmatprep.subr.mxu0 0.0
  %3917 = vmatpush2.msra.mxu0 0.0
  %3918 = vmatprep.subr.mxu0 0.0
  %3919 = vmatpush2.msra.mxu0 0.0
  %3920 = vmatprep.subr.mxu0 0.0
  %3921 = vmatpush2.msra.mxu0 0.0
  %3922 = vmatprep.subr.mxu0 0.0
  %3923 = vmatpush2.msra.mxu0 0.0
  %3924 = vmatprep.subr.mxu0 0.0
  %3925 = vmatpush2.msra.mxu0 0.0
  %3926 = vmatprep.subr.mxu0 0.0
  %3927 = vmatpush2.msra.mxu0 0.0
  %3928 = vmatprep.subr.mxu0 0.0
  %3929 = vmatpush2.msra.mxu0 0.0
  %3930 = vmatprep.subr.mxu0 0.0
  %3931 = vmatpush2.msra.mxu0 0.0
  %3932 = vmatprep.subr.mxu0 0.0
  %3933 = vmatpush2.msra.mxu0 0.0
  %3934 = vmatprep.subr.mxu0 0.0
  %3935 = vmatpush2.msra.mxu0 0.0
  %3936 = vmatprep.subr.mxu0 0.0
  %3937 = vmatpush2.msra.mxu0 0.0
  %3938 = vmatprep.subr.mxu0 0.0
  %3939 = vmatpush2.msra.mxu0 0.0
  %3940 = vmatprep.subr.mxu0 0.0
  %3941 = vmatpush2.msra.mxu0 0.0
  %3942 = vmatprep.subr.mxu0 0.0
  %3943 = vmatpush2.msra.mxu0 0.0
  %3944 = vmatprep.subr.mxu0 0.0
  %3945 = vmatpush2.msra.mxu0 0.0
  %3946 = vmatprep.mubr.f32.mxu0 0.0
  %3947 = vmatmul.mubr.f32.gmra.mxu0 %v3694
  %v3948 = vpop.f32.mrf.mxu0
  %v3949 = vadd.f32 %v3864, %v3948
  %v3950 = vpop.f32.mrf.mxu0
  %3951 = vmatprep.mubr.f32.mxu0 0.0
  %3952 = vmatmul.mubr.f32.gmra.mxu0 %v3699
  %v3953 = vpop.f32.mrf.mxu0
  %v3954 = vadd.f32 %v3869, %v3953
  %v3955 = vpop.f32.mrf.mxu0
  %3956 = vmatprep.mubr.f32.mxu0 0.0
  %3957 = vmatmul.mubr.f32.gmra.mxu0 %v3704
  %v3958 = vpop.f32.mrf.mxu0
  %v3959 = vadd.f32 %v3874, %v3958
  %v3960 = vpop.f32.mrf.mxu0
  %3961 = vmatprep.mubr.f32.mxu0 0.0
  %3962 = vmatmul.mubr.f32.gmra.mxu0 %v3709
  %v3963 = vpop.f32.mrf.mxu0
  %v3964 = vadd.f32 %v3879, %v3963
  %v3965 = vpop.f32.mrf.mxu0
  %3966 = vdwg.mxu0
  %3967 = vmatprep.subr.mxu0 0.0
  %3968 = vmatpush1.msra.mxu0 %v2640
  %3969 = vmatprep.subr.mxu0 0.0
  %3970 = vmatpush1.msra.mxu0 %v2639
  %3971 = vmatprep.subr.mxu0 0.0
  %3972 = vmatpush1.msra.mxu0 %v2638
  %3973 = vmatprep.subr.mxu0 0.0
  %3974 = vmatpush1.msra.mxu0 %v2637
  %3975 = vmatprep.subr.mxu0 0.0
  %3976 = vmatpush1.msra.mxu0 %v2636
  %3977 = vmatprep.subr.mxu0 0.0
  %3978 = vmatpush1.msra.mxu0 %v2635
  %3979 = vmatprep.subr.mxu0 0.0
  %3980 = vmatpush1.msra.mxu0 %v2634
  %3981 = vmatprep.subr.mxu0 0.0
  %3982 = vmatpush1.msra.mxu0 %v2633
  %3983 = vmatprep.subr.mxu0 0.0
  %3984 = vmatpush1.msra.mxu0 %v2632
  %3985 = vmatprep.subr.mxu0 0.0
  %3986 = vmatpush1.msra.mxu0 %v2631
  %3987 = vmatprep.subr.mxu0 0.0
  %3988 = vmatpush1.msra.mxu0 %v2630
  %3989 = vmatprep.subr.mxu0 0.0
  %3990 = vmatpush1.msra.mxu0 %v2629
  %3991 = vmatprep.subr.mxu0 0.0
  %3992 = vmatpush1.msra.mxu0 %v2628
  %3993 = vmatprep.subr.mxu0 0.0
  %3994 = vmatpush1.msra.mxu0 %v2627
  %3995 = vmatprep.subr.mxu0 0.0
  %3996 = vmatpush1.msra.mxu0 %v2626
  %3997 = vmatprep.subr.mxu0 0.0
  %3998 = vmatpush1.msra.mxu0 %v2625
  %3999 = vmatprep.subr.mxu0 0.0
  %4000 = vmatpush2.msra.mxu0 0.0
  %4001 = vmatprep.subr.mxu0 0.0
  %4002 = vmatpush2.msra.mxu0 0.0
  %4003 = vmatprep.subr.mxu0 0.0
  %4004 = vmatpush2.msra.mxu0 0.0
  %4005 = vmatprep.subr.mxu0 0.0
  %4006 = vmatpush2.msra.mxu0 0.0
  %4007 = vmatprep.subr.mxu0 0.0
  %4008 = vmatpush2.msra.mxu0 0.0
  %4009 = vmatprep.subr.mxu0 0.0
  %4010 = vmatpush2.msra.mxu0 0.0
  %4011 = vmatprep.subr.mxu0 0.0
  %4012 = vmatpush2.msra.mxu0 0.0
  %4013 = vmatprep.subr.mxu0 0.0
  %4014 = vmatpush2.msra.mxu0 0.0
  %4015 = vmatprep.subr.mxu0 0.0
  %4016 = vmatpush2.msra.mxu0 0.0
  %4017 = vmatprep.subr.mxu0 0.0
  %4018 = vmatpush2.msra.mxu0 0.0
  %4019 = vmatprep.subr.mxu0 0.0
  %4020 = vmatpush2.msra.mxu0 0.0
  %4021 = vmatprep.subr.mxu0 0.0
  %4022 = vmatpush2.msra.mxu0 0.0
  %4023 = vmatprep.subr.mxu0 0.0
  %4024 = vmatpush2.msra.mxu0 0.0
  %4025 = vmatprep.subr.mxu0 0.0
  %4026 = vmatpush2.msra.mxu0 0.0
  %4027 = vmatprep.subr.mxu0 0.0
  %4028 = vmatpush2.msra.mxu0 0.0
  %4029 = vmatprep.subr.mxu0 0.0
  %4030 = vmatpush2.msra.mxu0 0.0
  %4031 = vmatprep.mubr.f32.mxu0 0.0
  %4032 = vmatmul.mubr.f32.gmra.mxu0 %v3779
  %v4033 = vpop.f32.mrf.mxu0
  %v4034 = vadd.f32 0.0, %v4033
  %v4035 = vpop.f32.mrf.mxu0
  %4036 = vmatprep.mubr.f32.mxu0 0.0
  %4037 = vmatmul.mubr.f32.gmra.mxu0 %v3784
  %v4038 = vpop.f32.mrf.mxu0
  %v4039 = vadd.f32 0.0, %v4038
  %v4040 = vpop.f32.mrf.mxu0
  %4041 = vmatprep.mubr.f32.mxu0 0.0
  %4042 = vmatmul.mubr.f32.gmra.mxu0 %v3789
  %v4043 = vpop.f32.mrf.mxu0
  %v4044 = vadd.f32 0.0, %v4043
  %v4045 = vpop.f32.mrf.mxu0
  %4046 = vmatprep.mubr.f32.mxu0 0.0
  %4047 = vmatmul.mubr.f32.gmra.mxu0 %v3794
  %v4048 = vpop.f32.mrf.mxu0
  %v4049 = vadd.f32 0.0, %v4048
  %v4050 = vpop.f32.mrf.mxu0
  %4051 = vdwg.mxu0
  %v4052 = vadd.f32 %v3949, %v4034
  %v4053 = vadd.f32 %v3954, %v4039
  %v4054 = vadd.f32 %v3959, %v4044
  %v4055 = vadd.f32 %v3964, %v4049
  %v4056 = vadd.f32 %v4052, %v2734
  %v4057 = vadd.f32 %v4053, %v2734
  %v4058 = vadd.f32 %v4054, %v2734
  %v4059 = vadd.f32 %v4055, %v2734
  %4060 = vmatprep.subr.mxu0 0.0
  %4061 = vmatpush1.msra.mxu0 %v70
  %4062 = vmatprep.subr.mxu0 0.0
  %4063 = vmatpush1.msra.mxu0 %v69
  %4064 = vmatprep.subr.mxu0 0.0
  %4065 = vmatpush1.msra.mxu0 %v68
  %4066 = vmatprep.subr.mxu0 0.0
  %4067 = vmatpush1.msra.mxu0 %v67
  %4068 = vmatprep.subr.mxu0 0.0
  %4069 = vmatpush1.msra.mxu0 %v66
  %4070 = vmatprep.subr.mxu0 0.0
  %4071 = vmatpush1.msra.mxu0 %v65
  %4072 = vmatprep.subr.mxu0 0.0
  %4073 = vmatpush1.msra.mxu0 %v64
  %4074 = vmatprep.subr.mxu0 0.0
  %4075 = vmatpush1.msra.mxu0 %v63
  %4076 = vmatprep.subr.mxu0 0.0
  %4077 = vmatpush1.msra.mxu0 %v62
  %4078 = vmatprep.subr.mxu0 0.0
  %4079 = vmatpush1.msra.mxu0 %v61
  %4080 = vmatprep.subr.mxu0 0.0
  %4081 = vmatpush1.msra.mxu0 %v60
  %4082 = vmatprep.subr.mxu0 0.0
  %4083 = vmatpush1.msra.mxu0 %v59
  %4084 = vmatprep.subr.mxu0 0.0
  %4085 = vmatpush1.msra.mxu0 %v58
  %4086 = vmatprep.subr.mxu0 0.0
  %4087 = vmatpush1.msra.mxu0 %v57
  %4088 = vmatprep.subr.mxu0 0.0
  %4089 = vmatpush1.msra.mxu0 %v56
  %4090 = vmatprep.subr.mxu0 0.0
  %4091 = vmatpush1.msra.mxu0 %v55
  %4092 = vmatprep.subr.mxu0 0.0
  %4093 = vmatpush2.msra.mxu0 0.0
  %4094 = vmatprep.subr.mxu0 0.0
  %4095 = vmatpush2.msra.mxu0 0.0
  %4096 = vmatprep.subr.mxu0 0.0
  %4097 = vmatpush2.msra.mxu0 0.0
  %4098 = vmatprep.subr.mxu0 0.0
  %4099 = vmatpush2.msra.mxu0 0.0
  %4100 = vmatprep.subr.mxu0 0.0
  %4101 = vmatpush2.msra.mxu0 0.0
  %4102 = vmatprep.subr.mxu0 0.0
  %4103 = vmatpush2.msra.mxu0 0.0
  %4104 = vmatprep.subr.mxu0 0.0
  %4105 = vmatpush2.msra.mxu0 0.0
  %4106 = vmatprep.subr.mxu0 0.0
  %4107 = vmatpush2.msra.mxu0 0.0
  %4108 = vmatprep.subr.mxu0 0.0
  %4109 = vmatpush2.msra.mxu0 0.0
  %4110 = vmatprep.subr.mxu0 0.0
  %4111 = vmatpush2.msra.mxu0 0.0
  %4112 = vmatprep.subr.mxu0 0.0
  %4113 = vmatpush2.msra.mxu0 0.0
  %4114 = vmatprep.subr.mxu0 0.0
  %4115 = vmatpush2.msra.mxu0 0.0
  %4116 = vmatprep.subr.mxu0 0.0
  %4117 = vmatpush2.msra.mxu0 0.0
  %4118 = vmatprep.subr.mxu0 0.0
  %4119 = vmatpush2.msra.mxu0 0.0
  %4120 = vmatprep.subr.mxu0 0.0
  %4121 = vmatpush2.msra.mxu0 0.0
  %4122 = vmatprep.subr.mxu0 0.0
  %4123 = vmatpush2.msra.mxu0 0.0
  %4124 = vmatprep.mubr.f32.mxu0 0.0
  %4125 = vmatmul.mubr.f32.gmra.mxu0 %v4056
  %v4126 = vpop.f32.mrf.mxu0
  %v4127 = vadd.f32 0.0, %v4126
  %v4128 = vpop.f32.mrf.mxu0
  %4129 = vmatprep.mubr.f32.mxu0 0.0
  %4130 = vmatmul.mubr.f32.gmra.mxu0 %v4057
  %v4131 = vpop.f32.mrf.mxu0
  %v4132 = vadd.f32 0.0, %v4131
  %v4133 = vpop.f32.mrf.mxu0
  %4134 = vmatprep.mubr.f32.mxu0 0.0
  %4135 = vmatmul.mubr.f32.gmra.mxu0 %v4058
  %v4136 = vpop.f32.mrf.mxu0
  %v4137 = vadd.f32 0.0, %v4136
  %v4138 = vpop.f32.mrf.mxu0
  %4139 = vmatprep.mubr.f32.mxu0 0.0
  %4140 = vmatmul.mubr.f32.gmra.mxu0 %v4059
  %v4141 = vpop.f32.mrf.mxu0
  %v4142 = vadd.f32 0.0, %v4141
  %v4143 = vpop.f32.mrf.mxu0
  %4144 = vdwg.mxu0
  %v4145 = vadd.f32 %v4127, %v4132
  %v4146 = vadd.f32 %v4145, %v4137
  %v4147 = vadd.f32 %v4146, %v4142
  %v4148 = vrot.slane %v4147, 4
  %v4149 = vadd.f32 %v4147, %v4148
  %v4150 = vrot.slane %v4149, 2
  %v4151 = vadd.f32 %v4149, %v4150
  %v4152 = vrot.slane %v4151, 1
  %v4153 = vadd.f32 %v4151, %v4152
  %v4154 = vmul.f32 %v4056, %v4056
  %v4155 = vmul.f32 %v4057, %v4057
  %v4156 = vmul.f32 %v4058, %v4058
  %v4157 = vmul.f32 %v4059, %v4059
  %4158 = vmatprep.subr.mxu0 0.0
  %4159 = vmatpush1.msra.mxu0 %v70
  %4160 = vmatprep.subr.mxu0 0.0
  %4161 = vmatpush1.msra.mxu0 %v69
  %4162 = vmatprep.subr.mxu0 0.0
  %4163 = vmatpush1.msra.mxu0 %v68
  %4164 = vmatprep.subr.mxu0 0.0
  %4165 = vmatpush1.msra.mxu0 %v67
  %4166 = vmatprep.subr.mxu0 0.0
  %4167 = vmatpush1.msra.mxu0 %v66
  %4168 = vmatprep.subr.mxu0 0.0
  %4169 = vmatpush1.msra.mxu0 %v65
  %4170 = vmatprep.subr.mxu0 0.0
  %4171 = vmatpush1.msra.mxu0 %v64
  %4172 = vmatprep.subr.mxu0 0.0
  %4173 = vmatpush1.msra.mxu0 %v63
  %4174 = vmatprep.subr.mxu0 0.0
  %4175 = vmatpush1.msra.mxu0 %v62
  %4176 = vmatprep.subr.mxu0 0.0
  %4177 = vmatpush1.msra.mxu0 %v61
  %4178 = vmatprep.subr.mxu0 0.0
  %4179 = vmatpush1.msra.mxu0 %v60
  %4180 = vmatprep.subr.mxu0 0.0
  %4181 = vmatpush1.msra.mxu0 %v59
  %4182 = vmatprep.subr.mxu0 0.0
  %4183 = vmatpush1.msra.mxu0 %v58
  %4184 = vmatprep.subr.mxu0 0.0
  %4185 = vmatpush1.msra.mxu0 %v57
  %4186 = vmatprep.subr.mxu0 0.0
  %4187 = vmatpush1.msra.mxu0 %v56
  %4188 = vmatprep.subr.mxu0 0.0
  %4189 = vmatpush1.msra.mxu0 %v55
  %4190 = vmatprep.subr.mxu0 0.0
  %4191 = vmatpush2.msra.mxu0 0.0
  %4192 = vmatprep.subr.mxu0 0.0
  %4193 = vmatpush2.msra.mxu0 0.0
  %4194 = vmatprep.subr.mxu0 0.0
  %4195 = vmatpush2.msra.mxu0 0.0
  %4196 = vmatprep.subr.mxu0 0.0
  %4197 = vmatpush2.msra.mxu0 0.0
  %4198 = vmatprep.subr.mxu0 0.0
  %4199 = vmatpush2.msra.mxu0 0.0
  %4200 = vmatprep.subr.mxu0 0.0
  %4201 = vmatpush2.msra.mxu0 0.0
  %4202 = vmatprep.subr.mxu0 0.0
  %4203 = vmatpush2.msra.mxu0 0.0
  %4204 = vmatprep.subr.mxu0 0.0
  %4205 = vmatpush2.msra.mxu0 0.0
  %4206 = vmatprep.subr.mxu0 0.0
  %4207 = vmatpush2.msra.mxu0 0.0
  %4208 = vmatprep.subr.mxu0 0.0
  %4209 = vmatpush2.msra.mxu0 0.0
  %4210 = vmatprep.subr.mxu0 0.0
  %4211 = vmatpush2.msra.mxu0 0.0
  %4212 = vmatprep.subr.mxu0 0.0
  %4213 = vmatpush2.msra.mxu0 0.0
  %4214 = vmatprep.subr.mxu0 0.0
  %4215 = vmatpush2.msra.mxu0 0.0
  %4216 = vmatprep.subr.mxu0 0.0
  %4217 = vmatpush2.msra.mxu0 0.0
  %4218 = vmatprep.subr.mxu0 0.0
  %4219 = vmatpush2.msra.mxu0 0.0
  %4220 = vmatprep.subr.mxu0 0.0
  %4221 = vmatpush2.msra.mxu0 0.0
  %4222 = vmatprep.mubr.f32.mxu0 0.0
  %4223 = vmatmul.mubr.f32.gmra.mxu0 %v4154
  %v4224 = vpop.f32.mrf.mxu0
  %v4225 = vadd.f32 0.0, %v4224
  %v4226 = vpop.f32.mrf.mxu0
  %4227 = vmatprep.mubr.f32.mxu0 0.0
  %4228 = vmatmul.mubr.f32.gmra.mxu0 %v4155
  %v4229 = vpop.f32.mrf.mxu0
  %v4230 = vadd.f32 0.0, %v4229
  %v4231 = vpop.f32.mrf.mxu0
  %4232 = vmatprep.mubr.f32.mxu0 0.0
  %4233 = vmatmul.mubr.f32.gmra.mxu0 %v4156
  %v4234 = vpop.f32.mrf.mxu0
  %v4235 = vadd.f32 0.0, %v4234
  %v4236 = vpop.f32.mrf.mxu0
  %4237 = vmatprep.mubr.f32.mxu0 0.0
  %4238 = vmatmul.mubr.f32.gmra.mxu0 %v4157
  %v4239 = vpop.f32.mrf.mxu0
  %v4240 = vadd.f32 0.0, %v4239
  %v4241 = vpop.f32.mrf.mxu0
  %4242 = vdwg.mxu0
  %v4243 = vadd.f32 %v4225, %v4230
  %v4244 = vadd.f32 %v4243, %v4235
  %v4245 = vadd.f32 %v4244, %v4240
  %v4246 = vrot.slane %v4245, 4
  %v4247 = vadd.f32 %v4245, %v4246
  %v4248 = vrot.slane %v4247, 2
  %v4249 = vadd.f32 %v4247, %v4248
  %v4250 = vrot.slane %v4249, 1
  %v4251 = vadd.f32 %v4249, %v4250
  %v4252 = vmul.f32 %v4153, 0.001953125
  %v4253 = vmul.f32 %v4251, 0.001953125
  %v4254 = vmul.f32 %v4252, %v4252
  %v4255 = vsub.f32 %v4253, %v4254
  %v4256 = vadd.f32 %v4255, 1e-05
  %v4257 = vrsqrt.pop %v4256
  %v4258 = vmul.f32 %v4257, %v2249
  %v4259 = vmul.f32 %v4252, %v4258
  %v4260 = vsub.f32 %v2250, %v4259
  %v4261 = vlaneseq
  %v4262 = vshrl.u32 %v4261, 7
  %v4263 = vsub.s32 0, %v4262
  %v4264 = vrot.slane %v4258, %v4263
  %v4265 = vmul.f32 %v4056, %v4264
  %v4266 = vmul.f32 %v4057, %v4264
  %v4267 = vmul.f32 %v4058, %v4264
  %v4268 = vmul.f32 %v4059, %v4264
  %v4270 = vlaneseq
  %v4271 = vshrl.u32 %v4270, 7
  %v4272 = vsub.s32 0, %v4271
  %v4273 = vrot.slane %v4260, %v4272
  %v4275 = vadd.f32 %v4265, %v4273
  %v4276 = vadd.f32 %v4266, %v4273
  %v4277 = vadd.f32 %v4267, %v4273
  %v4278 = vadd.f32 %v4268, %v4273
  %v4279 = vmax.f32 %v4275, 0.0
  %v4280 = vmax.f32 %v4276, 0.0
  %v4281 = vmax.f32 %v4277, 0.0
  %v4282 = vmax.f32 %v4278, 0.0
  %v4283 = vadd.f32 %v170, %v4279
  %v4284 = vadd.f32 %v175, %v4280
  %v4285 = vadd.f32 %v180, %v4281
  %v4286 = vadd.f32 %v185, %v4282
  %4287 = vst [vmem:[%s14] sm:$0xff] %v4283
  %4288 = vst [vmem:[%s14 + $0x8] sm:$0xff] %v4284
  %4289 = vst [vmem:[%s14 + $0x10] sm:$0xff] %v4285
  %4290 = vst [vmem:[%s14 + $0x18] sm:$0xff] %v4286
  // Predicated region
  $region58: #{rrcnn_block.1} parent=0 // pred_check
    _
  $region59: #{rrcnn_block.1} parent=0 // pred_check_branch
    %4292 = sbr.rel (0) target = $region61
  $region60: #{rrcnn_block.1} parent=0 // pred_region
    _
  $region61: #{rrcnn_block.1} parent=0 // pred_fallthru
    _
  // Predicated region
  $region62: #{rrcnn_block.1} parent=0 // pred_check
    _
  $region63: #{rrcnn_block.1} parent=0 // pred_check_branch
    %4294 = sbr.rel (0) target = $region65
  $region64: #{rrcnn_block.1} parent=0 // pred_region
    _
  $region65: #{rrcnn_block.1} parent=0 // pred_fallthru
    _

</llo_original>
